<compile_context>
chip_gen: v5e
topology: v5e:2x2
jax: 0.10.0
libtpu: 0.0.40
codegen_flags: <defaults>
</compile_context>

<pallas_src>
import functools

import jax
import jax.numpy as jnp
from jax import lax
from jax.experimental import pallas as pl
from jax.experimental.pallas import tpu as pltpu

_EPS = 1e-5
_LEAK = 0.2


def _round_up(x, m):
    return (x + m - 1) // m * m


def _pick_vmem_limit():
    """Generation-specific scoped-VMEM budget (bigger on 128-MiB v5e/v6e parts)."""
    try:
        cap = int(getattr(pltpu.get_tpu_info(), "vmem_capacity_bytes", 0) or 0)
    except Exception:
        cap = 0
    if cap >= 128 * 1024 * 1024:
        return 96 * 1024 * 1024          # v5e / v6e: 128 MiB physical VMEM
    return 40 * 1024 * 1024              # v7x-class: 64 MiB physical -> headroom


_VMEM_LIMIT = _pick_vmem_limit()


# ----------------------------------------------------------------------------
# In-kernel conv row helper + kernels
# ----------------------------------------------------------------------------
def _conv_row(x_ref, w_ref, b_ref, row_taps, wo, oh):
    """f32 conv output row `oh`: sum of per-tap (Wo,K)bf16 @ (K,Coutp)bf16 dots + bias.

    x_ref: (1, Hin, Win, K) resident per-image input (already kw/phase-grouped
    for stride-2 layers).  row_taps = ((row_off, (col_off, ...)), ...) with the
    flat tap order matching the stacked weights w_ref: (T, K, Coutp)."""
    acc = None
    t = 0
    for dh, dws in row_taps:
        row = x_ref[0, oh + dh]                       # (Win, K) bf16, one load per dh
        for dw in dws:
            part = jnp.dot(row[dw:dw + wo, :], w_ref[t],
                           preferred_element_type=jnp.float32)
            acc = part if acc is None else acc + part
            t += 1
    return acc + b_ref[...]                           # (Wo, Coutp) f32


def _conv_act_kernel(x_ref, w_ref, b_ref, o_ref, *, row_taps, ho, wo, activation):
    """Per-image conv + bias + activation (LeakyReLU / sigmoid), row by row."""
    def body(oh, carry):
        acc = _conv_row(x_ref, w_ref, b_ref, row_taps, wo, oh)
        if activation == "leaky":
            acc = jnp.where(acc >= 0.0, acc, _LEAK * acc)
        else:  # "sigmoid"
            acc = jax.nn.sigmoid(acc)
        o_ref[0, oh, :, :] = acc.astype(o_ref.dtype)
        return carry

    lax.fori_loop(0, ho, body, 0)


def _conv_norm_kernel(x_ref, w_ref, b_ref, o_ref, acc_ref, *, row_taps, ho, wo):
    """Per-image conv + bias into f32 VMEM scratch, fused InstanceNorm2d
    (affine=False, eps=1e-5, biased var, centered two-pass) + LeakyReLU(0.2);
    the normalized bf16 activation is written to HBM exactly once."""
    coutp = w_ref.shape[-1]
    inv_n = 1.0 / float(ho * wo)

    # Pass 1: conv rows into resident f32 scratch, accumulate per-channel sum.
    def conv_body(oh, ssum):
        row = _conv_row(x_ref, w_ref, b_ref, row_taps, wo, oh)   # (Wo, Coutp) f32
        acc_ref[oh, :, :] = row
        return ssum + jnp.sum(row, axis=0, keepdims=True)

    ssum = lax.fori_loop(0, ho, conv_body, jnp.zeros((1, coutp), jnp.float32))
    mean = ssum * inv_n                                          # (1, Coutp)

    # Pass 2: centered sum of squares (stats computed from the exact f32 data
    # that gets normalized -- no E[x^2]-mean^2 cancellation, no bf16 mismatch).
    def var_body(oh, ssq):
        d = acc_ref[oh, :, :] - mean
        return ssq + jnp.sum(d * d, axis=0, keepdims=True)

    ssq = lax.fori_loop(0, ho, var_body, jnp.zeros((1, coutp), jnp.float32))
    inv_std = lax.rsqrt(ssq * inv_n + _EPS)                      # (1, Coutp)

    # Pass 3: normalize + LeakyReLU, single bf16 write to HBM.
    def out_body(oh, carry):
        xn = (acc_ref[oh, :, :] - mean) * inv_std
        o_ref[0, oh, :, :] = jnp.where(xn >= 0.0, xn, _LEAK * xn).astype(o_ref.dtype)
        return carry

    lax.fori_loop(0, ho, out_body, 0)


# ----------------------------------------------------------------------------
# pallas_call wrapper (shared by all layers)
# ----------------------------------------------------------------------------
def _run_conv(xin, wstk, bias, *, row_taps, ho, wo, norm, activation, out_dtype):
    """xin: (N, Hin, Win, K) bf16; wstk: (T, K, Coutp) bf16; bias: (1, Coutp) f32."""
    n, hin, win, k = xin.shape
    t, _, coutp = wstk.shape

    if norm:
        kernel = functools.partial(_conv_norm_kernel, row_taps=row_taps, ho=ho, wo=wo)
        scratch = [pltpu.VMEM((ho, wo, coutp), jnp.float32)]
    else:
        kernel = functools.partial(_conv_act_kernel, row_taps=row_taps, ho=ho, wo=wo,
                                   activation=activation)
        scratch = []

    return pl.pallas_call(
        kernel,
        out_shape=jax.ShapeDtypeStruct((n, ho, wo, coutp), out_dtype),
        grid=(n,),
        in_specs=[
            # whole padded per-image input resident; re-fetched only when n changes
            pl.BlockSpec((1, hin, win, k), lambda i: (i, 0, 0, 0)),
            pl.BlockSpec((t, k, coutp), lambda i: (0, 0, 0)),     # resident weights
            pl.BlockSpec((1, coutp), lambda i: (0, 0)),           # resident bias
        ],
        out_specs=pl.BlockSpec((1, ho, wo, coutp), lambda i: (i, 0, 0, 0)),
        scratch_shapes=scratch,
        compiler_params=pltpu.CompilerParams(
            dimension_semantics=("parallel",),    # shards images across v7x's 2 TCs
            vmem_limit_bytes=_VMEM_LIMIT),
    )(xin, wstk, bias)


def _pad_cout(cout):
    # Keep HBM activations dense (min traffic) unless cout is tiny/odd (the
    # 1-channel head), which is lane-padded to 128 for lane-dense stores.
    return cout if cout % 8 == 0 else _round_up(cout, 128)


def conv_s2_pallas(x, w, b, *, norm, activation="leaky", out_dtype=jnp.bfloat16):
    """Conv2d(k=4, stride=2, pad=1) [+ InstanceNorm] + activation, fully fused.

    The stride-2 conv is rewritten as a stride-1 2x2 conv over a space-to-depth
    rearranged padded input (4 taps, K = 4*Cin) so all in-kernel slices are
    unit-stride and the MXU contraction stays deep."""
    n, h, wd, cin = x.shape
    assert h % 2 == 0 and wd % 2 == 0, (h, wd)
    cout = w.shape[-1]
    coutp = _pad_cout(cout)
    ho, wo = h // 2, wd // 2
    hs, ws = h // 2 + 1, wd // 2 + 1

    # pad + space-to-depth (single fused XLA copy, 1x traffic):
    #   xs[n, i, j, (ph*2+pw)*cin + c] = xpad[n, 2i+ph, 2j+pw, c]
    xp = jnp.pad(x.astype(jnp.bfloat16), ((0, 0), (1, 1), (1, 1), (0, 0)))
    xs = (xp.reshape(n, hs, 2, ws, 2, cin)
            .transpose(0, 1, 3, 2, 4, 5)
            .reshape(n, hs, ws, 4 * cin))

    # weights: w[kh,kw,c,o], kh=2*dh+ph, kw=2*dw+pw  ->  W2[dh*2+dw, (ph,pw,c), o]
    w2 = (w.astype(jnp.bfloat16)
            .reshape(2, 2, 2, 2, cin, cout)      # (dh, ph, dw, pw, c, o)
            .transpose(0, 2, 1, 3, 4, 5)         # (dh, dw, ph, pw, c, o)
            .reshape(4, 4 * cin, cout))
    bias = b.astype(jnp.float32).reshape(1, cout)
    if coutp != cout:
        w2 = jnp.pad(w2, ((0, 0), (0, 0), (0, coutp - cout)))
        bias = jnp.pad(bias, ((0, 0), (0, coutp - cout)))

    out = _run_conv(xs, w2, bias, row_taps=((0, (0, 1)), (1, (0, 1))),
                    ho=ho, wo=wo, norm=norm, activation=activation,
                    out_dtype=out_dtype)
    return out[..., :cout]


def conv_s1_pallas(x, w, b, *, norm, activation="leaky", out_dtype=jnp.bfloat16):
    """Conv2d(k=4, stride=1, pad=1) [+ InstanceNorm] + activation, fully fused.

    16 taps of K = Cin (Cin is large at the stride-1 layers), unit-stride
    in-kernel slices of the resident padded image, no im2col duplication."""
    n, h, wd, cin = x.shape
    cout = w.shape[-1]
    coutp = _pad_cout(cout)
    ho, wo = h - 1, wd - 1

    xp = jnp.pad(x.astype(jnp.bfloat16), ((0, 0), (1, 1), (1, 1), (0, 0)))

    wstk = w.astype(jnp.bfloat16).reshape(16, cin, cout)   # flat tap = kh*4 + kw
    bias = b.astype(jnp.float32).reshape(1, cout)
    if coutp != cout:
        wstk = jnp.pad(wstk, ((0, 0), (0, 0), (0, coutp - cout)))
        bias = jnp.pad(bias, ((0, 0), (0, coutp - cout)))

    row_taps = tuple((kh, (0, 1, 2, 3)) for kh in range(4))
    out = _run_conv(xp, wstk, bias, row_taps=row_taps,
                    ho=ho, wo=wo, norm=norm, activation=activation,
                    out_dtype=out_dtype)
    return out[..., :cout]


# ----------------------------------------------------------------------------
# Discriminator
# ----------------------------------------------------------------------------
def init_discriminator_params(key, input_nc, ndf=64, n_layers=3):
    """Deterministic synthetic init; shapes mirror the PyTorch __init__ (HWIO)."""
    chans = [input_nc, ndf]
    for n in range(1, n_layers):
        chans.append(ndf * min(2 ** n, 8))
    chans.append(ndf * min(2 ** n_layers, 8))
    chans.append(1)

    params = []
    for cin, cout in zip(chans[:-1], chans[1:]):
        key, kw, kb = jax.random.split(key, 3)
        fan_in = cin * 4 * 4
        bound = 1.0 / (fan_in ** 0.5)
        w = jax.random.uniform(kw, (4, 4, cin, cout), jnp.float32, -bound, bound)
        b = jax.random.uniform(kb, (cout,), jnp.float32, -bound, bound)
        params.append((w, b))
    return params


def discriminator_forward(x_nchw, params):
    """PatchGAN forward: returns sigmoid(model(x)) in NCHW, matching PyTorch."""
    n_layers = len(params) - 2
    x = jnp.transpose(x_nchw, (0, 2, 3, 1)).astype(jnp.bfloat16)   # NCHW -> NHWC

    # Conv(s=2) + LeakyReLU (no norm on first layer)
    w, b = params[0]
    x = conv_s2_pallas(x, w, b, norm=False, activation="leaky",
                       out_dtype=jnp.bfloat16)
    # Conv(s=2) + InstanceNorm + LeakyReLU, n = 1 .. n_layers-1
    for i in range(1, n_layers):
        w, b = params[i]
        x = conv_s2_pallas(x, w, b, norm=True)
    # Conv(s=1) + InstanceNorm + LeakyReLU (post-loop layer)
    w, b = params[n_layers]
    x = conv_s1_pallas(x, w, b, norm=True)
    # Final Conv(s=1) to 1 channel + sigmoid (lane-padded to 128 in-kernel)
    w, b = params[n_layers + 1]
    x = conv_s1_pallas(x, w, b, norm=False, activation="sigmoid",
                       out_dtype=jnp.float32)

    return jnp.transpose(x, (0, 3, 1, 2))                          # NHWC -> NCHW


if __name__ == "__main__":
    # Spatial must survive 3 stride-2 convs + two k=4,p=1 convs -> use 32.
    batch, input_nc, spatial = 2, 4, 32
    ndf, n_layers = 16, 3

    key = jax.random.PRNGKey(0)
    key, kx = jax.random.split(key)
    x = jax.random.normal(kx, (batch, input_nc, spatial, spatial), jnp.float32)

    params = init_discriminator_params(key, input_nc, ndf=ndf, n_layers=n_layers)

    fwd = jax.jit(discriminator_forward)
    out = jax.block_until_ready(fwd(x, params))

    # Sanity checks: shape (N, 1, 2, 2) for 32x32 input, sigmoid values in (0, 1).
    assert out.shape == (batch, 1, 2, 2), out.shape
    assert bool(jnp.all(jnp.isfinite(out)))
    assert bool(jnp.all((out > 0.0) & (out < 1.0)))

    print("KERNEL_OK")
</pallas_src>

<mosaic_0001>
module attributes {stable_mosaic.version = 11 : i64} {
  func.func @_conv_act_kernel(%arg0: i32, %arg1: memref<1x17x17x16xbf16, #tpu.memory_space<vmem>>, %arg2: memref<4x16x16xbf16, #tpu.memory_space<vmem>>, %arg3: memref<1x16xf32, #tpu.memory_space<vmem>>, %arg4: memref<1x16x16x16xbf16, #tpu.memory_space<vmem>>) attributes {dimension_semantics = [#tpu.dimension_semantics<parallel>], iteration_bounds = array<i64: 2>, scalar_prefetch = 0 : i64, scratch_operands = 0 : i64, tpu.core_type = #tpu.core_type<tc>, window_params = [{transform_indices = @transform_0, window_bounds = array<i64: 1, 17, 17, 16>}, {pipeline_mode = #tpu.pipeline_mode<synchronous>, transform_indices = @transform_1, window_bounds = array<i64: 4, 16, 16>}, {pipeline_mode = #tpu.pipeline_mode<synchronous>, transform_indices = @transform_2, window_bounds = array<i64: 1, 16>}, {transform_indices = @transform_3, window_bounds = array<i64: 1, 16, 16, 16>}]} {
    %c0_i32 = arith.constant 0 : i32
    %c16_i32 = arith.constant 16 : i32
    %0 = arith.addi %c0_i32, %c16_i32 : i32
    %c1_i32 = arith.constant 1 : i32
    scf.for %arg5 = %c0_i32 to %0 step %c1_i32  : i32 {
      %c0_i32_1 = arith.constant 0 : i32
      %1 = arith.addi %arg5, %c0_i32_1 : i32
      %c0 = arith.constant 0 : index
      %2 = arith.index_cast %1 : i32 to index
      %c0_2 = arith.constant 0 : index
      %c0_3 = arith.constant 0 : index
      %3 = vector.load %arg1[%c0, %2, %c0_2, %c0_3] : memref<1x17x17x16xbf16, #tpu.memory_space<vmem>>, vector<1x1x17x16xbf16>
      %4 = vector.shape_cast %3 : vector<1x1x17x16xbf16> to vector<17x16xbf16>
      %5 = vector.extract_strided_slice %4 {offsets = [0, 0], sizes = [16, 16], strides = [1, 1]} : vector<17x16xbf16> to vector<16x16xbf16>
      %c0_4 = arith.constant 0 : index
      %c0_5 = arith.constant 0 : index
      %c0_6 = arith.constant 0 : index
      %6 = vector.load %arg2[%c0_4, %c0_5, %c0_6] : memref<4x16x16xbf16, #tpu.memory_space<vmem>>, vector<1x16x16xbf16>
      %7 = vector.shape_cast %6 : vector<1x16x16xbf16> to vector<16x16xbf16>
      %cst = arith.constant dense<0.000000e+00> : vector<16x16xf32>
      %8 = tpu.matmul %5, %7, %cst {dimension_numbers = #tpu.dot_dimension_numbers<[1], [0], [0], [1], [0, 0, 1, 1], [], []>} : vector<16x16xbf16>, vector<16x16xbf16>, vector<16x16xf32> -> vector<16x16xf32>
      %9 = vector.extract_strided_slice %4 {offsets = [1, 0], sizes = [16, 16], strides = [1, 1]} : vector<17x16xbf16> to vector<16x16xbf16>
      %c1 = arith.constant 1 : index
      %c0_7 = arith.constant 0 : index
      %c0_8 = arith.constant 0 : index
      %10 = vector.load %arg2[%c1, %c0_7, %c0_8] : memref<4x16x16xbf16, #tpu.memory_space<vmem>>, vector<1x16x16xbf16>
      %11 = vector.shape_cast %10 : vector<1x16x16xbf16> to vector<16x16xbf16>
      %cst_9 = arith.constant dense<0.000000e+00> : vector<16x16xf32>
      %12 = tpu.matmul %9, %11, %cst_9 {dimension_numbers = #tpu.dot_dimension_numbers<[1], [0], [0], [1], [0, 0, 1, 1], [], []>} : vector<16x16xbf16>, vector<16x16xbf16>, vector<16x16xf32> -> vector<16x16xf32>
      %13 = arith.addf %8, %12 : vector<16x16xf32>
      %c1_i32_10 = arith.constant 1 : i32
      %14 = arith.addi %arg5, %c1_i32_10 : i32
      %c0_11 = arith.constant 0 : index
      %15 = arith.index_cast %14 : i32 to index
      %c0_12 = arith.constant 0 : index
      %c0_13 = arith.constant 0 : index
      %16 = vector.load %arg1[%c0_11, %15, %c0_12, %c0_13] : memref<1x17x17x16xbf16, #tpu.memory_space<vmem>>, vector<1x1x17x16xbf16>
      %17 = vector.shape_cast %16 : vector<1x1x17x16xbf16> to vector<17x16xbf16>
      %18 = vector.extract_strided_slice %17 {offsets = [0, 0], sizes = [16, 16], strides = [1, 1]} : vector<17x16xbf16> to vector<16x16xbf16>
      %c2 = arith.constant 2 : index
      %c0_14 = arith.constant 0 : index
      %c0_15 = arith.constant 0 : index
      %19 = vector.load %arg2[%c2, %c0_14, %c0_15] : memref<4x16x16xbf16, #tpu.memory_space<vmem>>, vector<1x16x16xbf16>
      %20 = vector.shape_cast %19 : vector<1x16x16xbf16> to vector<16x16xbf16>
      %cst_16 = arith.constant dense<0.000000e+00> : vector<16x16xf32>
      %21 = tpu.matmul %18, %20, %cst_16 {dimension_numbers = #tpu.dot_dimension_numbers<[1], [0], [0], [1], [0, 0, 1, 1], [], []>} : vector<16x16xbf16>, vector<16x16xbf16>, vector<16x16xf32> -> vector<16x16xf32>
      %22 = arith.addf %13, %21 : vector<16x16xf32>
      %23 = vector.extract_strided_slice %17 {offsets = [1, 0], sizes = [16, 16], strides = [1, 1]} : vector<17x16xbf16> to vector<16x16xbf16>
      %c3 = arith.constant 3 : index
      %c0_17 = arith.constant 0 : index
      %c0_18 = arith.constant 0 : index
      %24 = vector.load %arg2[%c3, %c0_17, %c0_18] : memref<4x16x16xbf16, #tpu.memory_space<vmem>>, vector<1x16x16xbf16>
      %25 = vector.shape_cast %24 : vector<1x16x16xbf16> to vector<16x16xbf16>
      %cst_19 = arith.constant dense<0.000000e+00> : vector<16x16xf32>
      %26 = tpu.matmul %23, %25, %cst_19 {dimension_numbers = #tpu.dot_dimension_numbers<[1], [0], [0], [1], [0, 0, 1, 1], [], []>} : vector<16x16xbf16>, vector<16x16xbf16>, vector<16x16xf32> -> vector<16x16xf32>
      %27 = arith.addf %22, %26 : vector<16x16xf32>
      %c0_20 = arith.constant 0 : index
      %c0_21 = arith.constant 0 : index
      %28 = vector.load %arg3[%c0_20, %c0_21] : memref<1x16xf32, #tpu.memory_space<vmem>>, vector<1x16xf32>
      %29 = vector.broadcast %28 : vector<1x16xf32> to vector<16x16xf32>
      %30 = arith.addf %27, %29 : vector<16x16xf32>
      %cst_22 = arith.constant 0.000000e+00 : f32
      %31 = vector.broadcast %cst_22 : f32 to vector<16x16xf32>
      %32 = arith.cmpf oge, %30, %31 : vector<16x16xf32>
      %cst_23 = arith.constant 2.000000e-01 : f32
      %33 = vector.broadcast %cst_23 : f32 to vector<16x16xf32>
      %34 = arith.mulf %33, %30 : vector<16x16xf32>
      %35 = arith.select %32, %30, %34 : vector<16x16xi1>, vector<16x16xf32>
      %36 = arith.truncf %35 : vector<16x16xf32> to vector<16x16xbf16>
      %c0_24 = arith.constant 0 : index
      %37 = arith.index_cast %arg5 : i32 to index
      %c0_25 = arith.constant 0 : index
      %c0_26 = arith.constant 0 : index
      %38 = vector.load %arg4[%c0_24, %37, %c0_25, %c0_26] : memref<1x16x16x16xbf16, #tpu.memory_space<vmem>>, vector<1x1x16x16xbf16>
      %39 = vector.shape_cast %38 : vector<1x1x16x16xbf16> to vector<16x16xbf16>
      %40 = vector.shape_cast %36 : vector<16x16xbf16> to vector<1x1x16x16xbf16>
      tpu.vector_store %arg4[%c0_24, %37, %c0_25, %c0_26], %40 {strides = array<i32>} : memref<1x16x16x16xbf16, #tpu.memory_space<vmem>>, vector<1x1x16x16xbf16>,
    }
    %c16_i32_0 = arith.constant 16 : i32
    return
  }
  func.func @transform_0(%arg0: i32) -> (i32, i32, i32, i32) {
    %c0_i32 = arith.constant 0 : i32
    %c0_i32_0 = arith.constant 0 : i32
    %c0_i32_1 = arith.constant 0 : i32
    %c0_i32_2 = arith.constant 0 : i32
    return %arg0, %c0_i32, %c0_i32_0, %c0_i32_1 : i32, i32, i32, i32
  }
  func.func @transform_1(%arg0: i32) -> (i32, i32, i32) {
    %c0_i32 = arith.constant 0 : i32
    %c0_i32_0 = arith.constant 0 : i32
    %c0_i32_1 = arith.constant 0 : i32
    %c0_i32_2 = arith.constant 0 : i32
    return %c0_i32, %c0_i32_0, %c0_i32_1 : i32, i32, i32
  }
  func.func @transform_2(%arg0: i32) -> (i32, i32) {
    %c0_i32 = arith.constant 0 : i32
    %c0_i32_0 = arith.constant 0 : i32
    %c0_i32_1 = arith.constant 0 : i32
    return %c0_i32, %c0_i32_0 : i32, i32
  }
  func.func @transform_3(%arg0: i32) -> (i32, i32, i32, i32) {
    %c0_i32 = arith.constant 0 : i32
    %c0_i32_0 = arith.constant 0 : i32
    %c0_i32_1 = arith.constant 0 : i32
    %c0_i32_2 = arith.constant 0 : i32
    return %arg0, %c0_i32, %c0_i32_0, %c0_i32_1 : i32, i32, i32, i32
  }
}

module attributes {stable_mosaic.version = 11 : i64} {
  func.func @_conv_norm_kernel(%arg0: i32, %arg1: memref<1x9x9x64xbf16, #tpu.memory_space<vmem>>, %arg2: memref<4x64x32xbf16, #tpu.memory_space<vmem>>, %arg3: memref<1x32xf32, #tpu.memory_space<vmem>>, %arg4: memref<1x8x8x32xbf16, #tpu.memory_space<vmem>>, %arg5: memref<8x8x32xf32, #tpu.memory_space<vmem>>) attributes {dimension_semantics = [#tpu.dimension_semantics<parallel>], iteration_bounds = array<i64: 2>, scalar_prefetch = 0 : i64, scratch_operands = 1 : i64, tpu.core_type = #tpu.core_type<tc>, window_params = [{transform_indices = @transform_0, window_bounds = array<i64: 1, 9, 9, 64>}, {pipeline_mode = #tpu.pipeline_mode<synchronous>, transform_indices = @transform_1, window_bounds = array<i64: 4, 64, 32>}, {pipeline_mode = #tpu.pipeline_mode<synchronous>, transform_indices = @transform_2, window_bounds = array<i64: 1, 32>}, {transform_indices = @transform_3, window_bounds = array<i64: 1, 8, 8, 32>}]} {
    %cst = arith.constant 0.000000e+00 : f32
    %0 = vector.broadcast %cst : f32 to vector<1x32xf32>
    %c0_i32 = arith.constant 0 : i32
    %c8_i32 = arith.constant 8 : i32
    %1 = arith.addi %c0_i32, %c8_i32 : i32
    %c1_i32 = arith.constant 1 : i32
    %2 = scf.for %arg6 = %c0_i32 to %1 step %c1_i32 iter_args(%arg7 = %0) -> (vector<1x32xf32>)  : i32 {
      %c0_i32_13 = arith.constant 0 : i32
      %14 = arith.addi %arg6, %c0_i32_13 : i32
      %c0 = arith.constant 0 : index
      %15 = arith.index_cast %14 : i32 to index
      %c0_14 = arith.constant 0 : index
      %c0_15 = arith.constant 0 : index
      %16 = vector.load %arg1[%c0, %15, %c0_14, %c0_15] : memref<1x9x9x64xbf16, #tpu.memory_space<vmem>>, vector<1x1x9x64xbf16>
      %17 = vector.shape_cast %16 : vector<1x1x9x64xbf16> to vector<9x64xbf16>
      %18 = vector.extract_strided_slice %17 {offsets = [0, 0], sizes = [8, 64], strides = [1, 1]} : vector<9x64xbf16> to vector<8x64xbf16>
      %c0_16 = arith.constant 0 : index
      %c0_17 = arith.constant 0 : index
      %c0_18 = arith.constant 0 : index
      %19 = vector.load %arg2[%c0_16, %c0_17, %c0_18] : memref<4x64x32xbf16, #tpu.memory_space<vmem>>, vector<1x64x32xbf16>
      %20 = vector.shape_cast %19 : vector<1x64x32xbf16> to vector<64x32xbf16>
      %cst_19 = arith.constant dense<0.000000e+00> : vector<8x32xf32>
      %21 = tpu.matmul %18, %20, %cst_19 {dimension_numbers = #tpu.dot_dimension_numbers<[1], [0], [0], [1], [0, 0, 1, 1], [], []>} : vector<8x64xbf16>, vector<64x32xbf16>, vector<8x32xf32> -> vector<8x32xf32>
      %22 = vector.extract_strided_slice %17 {offsets = [1, 0], sizes = [8, 64], strides = [1, 1]} : vector<9x64xbf16> to vector<8x64xbf16>
      %c1 = arith.constant 1 : index
      %c0_20 = arith.constant 0 : index
      %c0_21 = arith.constant 0 : index
      %23 = vector.load %arg2[%c1, %c0_20, %c0_21] : memref<4x64x32xbf16, #tpu.memory_space<vmem>>, vector<1x64x32xbf16>
      %24 = vector.shape_cast %23 : vector<1x64x32xbf16> to vector<64x32xbf16>
      %cst_22 = arith.constant dense<0.000000e+00> : vector<8x32xf32>
      %25 = tpu.matmul %22, %24, %cst_22 {dimension_numbers = #tpu.dot_dimension_numbers<[1], [0], [0], [1], [0, 0, 1, 1], [], []>} : vector<8x64xbf16>, vector<64x32xbf16>, vector<8x32xf32> -> vector<8x32xf32>
      %26 = arith.addf %21, %25 : vector<8x32xf32>
      %c1_i32_23 = arith.constant 1 : i32
      %27 = arith.addi %arg6, %c1_i32_23 : i32
      %c0_24 = arith.constant 0 : index
      %28 = arith.index_cast %27 : i32 to index
      %c0_25 = arith.constant 0 : index
      %c0_26 = arith.constant 0 : index
      %29 = vector.load %arg1[%c0_24, %28, %c0_25, %c0_26] : memref<1x9x9x64xbf16, #tpu.memory_space<vmem>>, vector<1x1x9x64xbf16>
      %30 = vector.shape_cast %29 : vector<1x1x9x64xbf16> to vector<9x64xbf16>
      %31 = vector.extract_strided_slice %30 {offsets = [0, 0], sizes = [8, 64], strides = [1, 1]} : vector<9x64xbf16> to vector<8x64xbf16>
      %c2 = arith.constant 2 : index
      %c0_27 = arith.constant 0 : index
      %c0_28 = arith.constant 0 : index
      %32 = vector.load %arg2[%c2, %c0_27, %c0_28] : memref<4x64x32xbf16, #tpu.memory_space<vmem>>, vector<1x64x32xbf16>
      %33 = vector.shape_cast %32 : vector<1x64x32xbf16> to vector<64x32xbf16>
      %cst_29 = arith.constant dense<0.000000e+00> : vector<8x32xf32>
      %34 = tpu.matmul %31, %33, %cst_29 {dimension_numbers = #tpu.dot_dimension_numbers<[1], [0], [0], [1], [0, 0, 1, 1], [], []>} : vector<8x64xbf16>, vector<64x32xbf16>, vector<8x32xf32> -> vector<8x32xf32>
      %35 = arith.addf %26, %34 : vector<8x32xf32>
      %36 = vector.extract_strided_slice %30 {offsets = [1, 0], sizes = [8, 64], strides = [1, 1]} : vector<9x64xbf16> to vector<8x64xbf16>
      %c3 = arith.constant 3 : index
      %c0_30 = arith.constant 0 : index
      %c0_31 = arith.constant 0 : index
      %37 = vector.load %arg2[%c3, %c0_30, %c0_31] : memref<4x64x32xbf16, #tpu.memory_space<vmem>>, vector<1x64x32xbf16>
      %38 = vector.shape_cast %37 : vector<1x64x32xbf16> to vector<64x32xbf16>
      %cst_32 = arith.constant dense<0.000000e+00> : vector<8x32xf32>
      %39 = tpu.matmul %36, %38, %cst_32 {dimension_numbers = #tpu.dot_dimension_numbers<[1], [0], [0], [1], [0, 0, 1, 1], [], []>} : vector<8x64xbf16>, vector<64x32xbf16>, vector<8x32xf32> -> vector<8x32xf32>
      %40 = arith.addf %35, %39 : vector<8x32xf32>
      %c0_33 = arith.constant 0 : index
      %c0_34 = arith.constant 0 : index
      %41 = vector.load %arg3[%c0_33, %c0_34] : memref<1x32xf32, #tpu.memory_space<vmem>>, vector<1x32xf32>
      %42 = vector.broadcast %41 : vector<1x32xf32> to vector<8x32xf32>
      %43 = arith.addf %40, %42 : vector<8x32xf32>
      %44 = arith.index_cast %arg6 : i32 to index
      %c0_35 = arith.constant 0 : index
      %c0_36 = arith.constant 0 : index
      %45 = vector.load %arg5[%44, %c0_35, %c0_36] : memref<8x8x32xf32, #tpu.memory_space<vmem>>, vector<1x8x32xf32>
      %46 = vector.shape_cast %45 : vector<1x8x32xf32> to vector<8x32xf32>
      %47 = vector.shape_cast %43 : vector<8x32xf32> to vector<1x8x32xf32>
      tpu.vector_store %arg5[%44, %c0_35, %c0_36], %47 {strides = array<i32>} : memref<8x8x32xf32, #tpu.memory_space<vmem>>, vector<1x8x32xf32>,
      %cst_37 = arith.constant dense<0.000000e+00> : vector<32xf32>
      %48 = vector.multi_reduction <add>, %43, %cst_37 [0] : vector<8x32xf32> to vector<32xf32>
      %49 = vector.shape_cast %48 : vector<32xf32> to vector<1x32xf32>
      %50 = arith.addf %arg7, %49 : vector<1x32xf32>
      scf.yield %50 : vector<1x32xf32>
    }
    %c8_i32_0 = arith.constant 8 : i32
    %cst_1 = arith.constant 1.562500e-02 : f32
    %3 = vector.broadcast %cst_1 : f32 to vector<1x32xf32>
    %4 = arith.mulf %2, %3 : vector<1x32xf32>
    %cst_2 = arith.constant 0.000000e+00 : f32
    %5 = vector.broadcast %cst_2 : f32 to vector<1x32xf32>
    %c0_i32_3 = arith.constant 0 : i32
    %c8_i32_4 = arith.constant 8 : i32
    %6 = arith.addi %c0_i32_3, %c8_i32_4 : i32
    %c1_i32_5 = arith.constant 1 : i32
    %7 = scf.for %arg6 = %c0_i32_3 to %6 step %c1_i32_5 iter_args(%arg7 = %5) -> (vector<1x32xf32>)  : i32 {
      %14 = arith.index_cast %arg6 : i32 to index
      %c0 = arith.constant 0 : index
      %c0_13 = arith.constant 0 : index
      %15 = vector.load %arg5[%14, %c0, %c0_13] : memref<8x8x32xf32, #tpu.memory_space<vmem>>, vector<1x8x32xf32>
      %16 = vector.shape_cast %15 : vector<1x8x32xf32> to vector<8x32xf32>
      %17 = vector.broadcast %4 : vector<1x32xf32> to vector<8x32xf32>
      %18 = arith.subf %16, %17 : vector<8x32xf32>
      %19 = arith.mulf %18, %18 : vector<8x32xf32>
      %cst_14 = arith.constant dense<0.000000e+00> : vector<32xf32>
      %20 = vector.multi_reduction <add>, %19, %cst_14 [0] : vector<8x32xf32> to vector<32xf32>
      %21 = vector.shape_cast %20 : vector<32xf32> to vector<1x32xf32>
      %22 = arith.addf %arg7, %21 : vector<1x32xf32>
      scf.yield %22 : vector<1x32xf32>
    }
    %c8_i32_6 = arith.constant 8 : i32
    %cst_7 = arith.constant 1.562500e-02 : f32
    %8 = vector.broadcast %cst_7 : f32 to vector<1x32xf32>
    %9 = arith.mulf %7, %8 : vector<1x32xf32>
    %cst_8 = arith.constant 9.99999974E-6 : f32
    %10 = vector.broadcast %cst_8 : f32 to vector<1x32xf32>
    %11 = arith.addf %9, %10 : vector<1x32xf32>
    %12 = math.rsqrt %11 : vector<1x32xf32>
    %c0_i32_9 = arith.constant 0 : i32
    %c8_i32_10 = arith.constant 8 : i32
    %13 = arith.addi %c0_i32_9, %c8_i32_10 : i32
    %c1_i32_11 = arith.constant 1 : i32
    scf.for %arg6 = %c0_i32_9 to %13 step %c1_i32_11  : i32 {
      %14 = arith.index_cast %arg6 : i32 to index
      %c0 = arith.constant 0 : index
      %c0_13 = arith.constant 0 : index
      %15 = vector.load %arg5[%14, %c0, %c0_13] : memref<8x8x32xf32, #tpu.memory_space<vmem>>, vector<1x8x32xf32>
      %16 = vector.shape_cast %15 : vector<1x8x32xf32> to vector<8x32xf32>
      %17 = vector.broadcast %4 : vector<1x32xf32> to vector<8x32xf32>
      %18 = arith.subf %16, %17 : vector<8x32xf32>
      %19 = vector.broadcast %12 : vector<1x32xf32> to vector<8x32xf32>
      %20 = arith.mulf %18, %19 : vector<8x32xf32>
      %cst_14 = arith.constant 0.000000e+00 : f32
      %21 = vector.broadcast %cst_14 : f32 to vector<8x32xf32>
      %22 = arith.cmpf oge, %20, %21 : vector<8x32xf32>
      %cst_15 = arith.constant 2.000000e-01 : f32
      %23 = vector.broadcast %cst_15 : f32 to vector<8x32xf32>
      %24 = arith.mulf %23, %20 : vector<8x32xf32>
      %25 = arith.select %22, %20, %24 : vector<8x32xi1>, vector<8x32xf32>
      %26 = arith.truncf %25 : vector<8x32xf32> to vector<8x32xbf16>
      %c0_16 = arith.constant 0 : index
      %27 = arith.index_cast %arg6 : i32 to index
      %c0_17 = arith.constant 0 : index
      %c0_18 = arith.constant 0 : index
      %28 = vector.load %arg4[%c0_16, %27, %c0_17, %c0_18] : memref<1x8x8x32xbf16, #tpu.memory_space<vmem>>, vector<1x1x8x32xbf16>
      %29 = vector.shape_cast %28 : vector<1x1x8x32xbf16> to vector<8x32xbf16>
      %30 = vector.shape_cast %26 : vector<8x32xbf16> to vector<1x1x8x32xbf16>
      tpu.vector_store %arg4[%c0_16, %27, %c0_17, %c0_18], %30 {strides = array<i32>} : memref<1x8x8x32xbf16, #tpu.memory_space<vmem>>, vector<1x1x8x32xbf16>,
    }
    %c8_i32_12 = arith.constant 8 : i32
    return
  }
  func.func @transform_0(%arg0: i32) -> (i32, i32, i32, i32) {
    %c0_i32 = arith.constant 0 : i32
    %c0_i32_0 = arith.constant 0 : i32
    %c0_i32_1 = arith.constant 0 : i32
    %c0_i32_2 = arith.constant 0 : i32
    return %arg0, %c0_i32, %c0_i32_0, %c0_i32_1 : i32, i32, i32, i32
  }
  func.func @transform_1(%arg0: i32) -> (i32, i32, i32) {
    %c0_i32 = arith.constant 0 : i32
    %c0_i32_0 = arith.constant 0 : i32
    %c0_i32_1 = arith.constant 0 : i32
    %c0_i32_2 = arith.constant 0 : i32
    return %c0_i32, %c0_i32_0, %c0_i32_1 : i32, i32, i32
  }
  func.func @transform_2(%arg0: i32) -> (i32, i32) {
    %c0_i32 = arith.constant 0 : i32
    %c0_i32_0 = arith.constant 0 : i32
    %c0_i32_1 = arith.constant 0 : i32
    return %c0_i32, %c0_i32_0 : i32, i32
  }
  func.func @transform_3(%arg0: i32) -> (i32, i32, i32, i32) {
    %c0_i32 = arith.constant 0 : i32
    %c0_i32_0 = arith.constant 0 : i32
    %c0_i32_1 = arith.constant 0 : i32
    %c0_i32_2 = arith.constant 0 : i32
    return %arg0, %c0_i32, %c0_i32_0, %c0_i32_1 : i32, i32, i32, i32
  }
}

module attributes {stable_mosaic.version = 11 : i64} {
  func.func @_conv_norm_kernel(%arg0: i32, %arg1: memref<1x5x5x128xbf16, #tpu.memory_space<vmem>>, %arg2: memref<4x128x64xbf16, #tpu.memory_space<vmem>>, %arg3: memref<1x64xf32, #tpu.memory_space<vmem>>, %arg4: memref<1x4x4x64xbf16, #tpu.memory_space<vmem>>, %arg5: memref<4x4x64xf32, #tpu.memory_space<vmem>>) attributes {dimension_semantics = [#tpu.dimension_semantics<parallel>], iteration_bounds = array<i64: 2>, scalar_prefetch = 0 : i64, scratch_operands = 1 : i64, tpu.core_type = #tpu.core_type<tc>, window_params = [{transform_indices = @transform_0, window_bounds = array<i64: 1, 5, 5, 128>}, {pipeline_mode = #tpu.pipeline_mode<synchronous>, transform_indices = @transform_1, window_bounds = array<i64: 4, 128, 64>}, {pipeline_mode = #tpu.pipeline_mode<synchronous>, transform_indices = @transform_2, window_bounds = array<i64: 1, 64>}, {transform_indices = @transform_3, window_bounds = array<i64: 1, 4, 4, 64>}]} {
    %cst = arith.constant 0.000000e+00 : f32
    %0 = vector.broadcast %cst : f32 to vector<1x64xf32>
    %c0_i32 = arith.constant 0 : i32
    %c4_i32 = arith.constant 4 : i32
    %1 = arith.addi %c0_i32, %c4_i32 : i32
    %c1_i32 = arith.constant 1 : i32
    %2 = scf.for %arg6 = %c0_i32 to %1 step %c1_i32 iter_args(%arg7 = %0) -> (vector<1x64xf32>)  : i32 {
      %c0_i32_13 = arith.constant 0 : i32
      %14 = arith.addi %arg6, %c0_i32_13 : i32
      %c0 = arith.constant 0 : index
      %15 = arith.index_cast %14 : i32 to index
      %c0_14 = arith.constant 0 : index
      %c0_15 = arith.constant 0 : index
      %16 = vector.load %arg1[%c0, %15, %c0_14, %c0_15] : memref<1x5x5x128xbf16, #tpu.memory_space<vmem>>, vector<1x1x5x128xbf16>
      %17 = vector.shape_cast %16 : vector<1x1x5x128xbf16> to vector<5x128xbf16>
      %18 = vector.extract_strided_slice %17 {offsets = [0, 0], sizes = [4, 128], strides = [1, 1]} : vector<5x128xbf16> to vector<4x128xbf16>
      %c0_16 = arith.constant 0 : index
      %c0_17 = arith.constant 0 : index
      %c0_18 = arith.constant 0 : index
      %19 = vector.load %arg2[%c0_16, %c0_17, %c0_18] : memref<4x128x64xbf16, #tpu.memory_space<vmem>>, vector<1x128x64xbf16>
      %20 = vector.shape_cast %19 : vector<1x128x64xbf16> to vector<128x64xbf16>
      %cst_19 = arith.constant dense<0.000000e+00> : vector<4x64xf32>
      %21 = tpu.matmul %18, %20, %cst_19 {dimension_numbers = #tpu.dot_dimension_numbers<[1], [0], [0], [1], [0, 0, 1, 1], [], []>} : vector<4x128xbf16>, vector<128x64xbf16>, vector<4x64xf32> -> vector<4x64xf32>
      %22 = vector.extract_strided_slice %17 {offsets = [1, 0], sizes = [4, 128], strides = [1, 1]} : vector<5x128xbf16> to vector<4x128xbf16>
      %c1 = arith.constant 1 : index
      %c0_20 = arith.constant 0 : index
      %c0_21 = arith.constant 0 : index
      %23 = vector.load %arg2[%c1, %c0_20, %c0_21] : memref<4x128x64xbf16, #tpu.memory_space<vmem>>, vector<1x128x64xbf16>
      %24 = vector.shape_cast %23 : vector<1x128x64xbf16> to vector<128x64xbf16>
      %cst_22 = arith.constant dense<0.000000e+00> : vector<4x64xf32>
      %25 = tpu.matmul %22, %24, %cst_22 {dimension_numbers = #tpu.dot_dimension_numbers<[1], [0], [0], [1], [0, 0, 1, 1], [], []>} : vector<4x128xbf16>, vector<128x64xbf16>, vector<4x64xf32> -> vector<4x64xf32>
      %26 = arith.addf %21, %25 : vector<4x64xf32>
      %c1_i32_23 = arith.constant 1 : i32
      %27 = arith.addi %arg6, %c1_i32_23 : i32
      %c0_24 = arith.constant 0 : index
      %28 = arith.index_cast %27 : i32 to index
      %c0_25 = arith.constant 0 : index
      %c0_26 = arith.constant 0 : index
      %29 = vector.load %arg1[%c0_24, %28, %c0_25, %c0_26] : memref<1x5x5x128xbf16, #tpu.memory_space<vmem>>, vector<1x1x5x128xbf16>
      %30 = vector.shape_cast %29 : vector<1x1x5x128xbf16> to vector<5x128xbf16>
      %31 = vector.extract_strided_slice %30 {offsets = [0, 0], sizes = [4, 128], strides = [1, 1]} : vector<5x128xbf16> to vector<4x128xbf16>
      %c2 = arith.constant 2 : index
      %c0_27 = arith.constant 0 : index
      %c0_28 = arith.constant 0 : index
      %32 = vector.load %arg2[%c2, %c0_27, %c0_28] : memref<4x128x64xbf16, #tpu.memory_space<vmem>>, vector<1x128x64xbf16>
      %33 = vector.shape_cast %32 : vector<1x128x64xbf16> to vector<128x64xbf16>
      %cst_29 = arith.constant dense<0.000000e+00> : vector<4x64xf32>
      %34 = tpu.matmul %31, %33, %cst_29 {dimension_numbers = #tpu.dot_dimension_numbers<[1], [0], [0], [1], [0, 0, 1, 1], [], []>} : vector<4x128xbf16>, vector<128x64xbf16>, vector<4x64xf32> -> vector<4x64xf32>
      %35 = arith.addf %26, %34 : vector<4x64xf32>
      %36 = vector.extract_strided_slice %30 {offsets = [1, 0], sizes = [4, 128], strides = [1, 1]} : vector<5x128xbf16> to vector<4x128xbf16>
      %c3 = arith.constant 3 : index
      %c0_30 = arith.constant 0 : index
      %c0_31 = arith.constant 0 : index
      %37 = vector.load %arg2[%c3, %c0_30, %c0_31] : memref<4x128x64xbf16, #tpu.memory_space<vmem>>, vector<1x128x64xbf16>
      %38 = vector.shape_cast %37 : vector<1x128x64xbf16> to vector<128x64xbf16>
      %cst_32 = arith.constant dense<0.000000e+00> : vector<4x64xf32>
      %39 = tpu.matmul %36, %38, %cst_32 {dimension_numbers = #tpu.dot_dimension_numbers<[1], [0], [0], [1], [0, 0, 1, 1], [], []>} : vector<4x128xbf16>, vector<128x64xbf16>, vector<4x64xf32> -> vector<4x64xf32>
      %40 = arith.addf %35, %39 : vector<4x64xf32>
      %c0_33 = arith.constant 0 : index
      %c0_34 = arith.constant 0 : index
      %41 = vector.load %arg3[%c0_33, %c0_34] : memref<1x64xf32, #tpu.memory_space<vmem>>, vector<1x64xf32>
      %42 = vector.broadcast %41 : vector<1x64xf32> to vector<4x64xf32>
      %43 = arith.addf %40, %42 : vector<4x64xf32>
      %44 = arith.index_cast %arg6 : i32 to index
      %c0_35 = arith.constant 0 : index
      %c0_36 = arith.constant 0 : index
      %45 = vector.load %arg5[%44, %c0_35, %c0_36] : memref<4x4x64xf32, #tpu.memory_space<vmem>>, vector<1x4x64xf32>
      %46 = vector.shape_cast %45 : vector<1x4x64xf32> to vector<4x64xf32>
      %47 = vector.shape_cast %43 : vector<4x64xf32> to vector<1x4x64xf32>
      tpu.vector_store %arg5[%44, %c0_35, %c0_36], %47 {strides = array<i32>} : memref<4x4x64xf32, #tpu.memory_space<vmem>>, vector<1x4x64xf32>,
      %cst_37 = arith.constant dense<0.000000e+00> : vector<64xf32>
      %48 = vector.multi_reduction <add>, %43, %cst_37 [0] : vector<4x64xf32> to vector<64xf32>
      %49 = vector.shape_cast %48 : vector<64xf32> to vector<1x64xf32>
      %50 = arith.addf %arg7, %49 : vector<1x64xf32>
      scf.yield %50 : vector<1x64xf32>
    }
    %c4_i32_0 = arith.constant 4 : i32
    %cst_1 = arith.constant 6.250000e-02 : f32
    %3 = vector.broadcast %cst_1 : f32 to vector<1x64xf32>
    %4 = arith.mulf %2, %3 : vector<1x64xf32>
    %cst_2 = arith.constant 0.000000e+00 : f32
    %5 = vector.broadcast %cst_2 : f32 to vector<1x64xf32>
    %c0_i32_3 = arith.constant 0 : i32
    %c4_i32_4 = arith.constant 4 : i32
    %6 = arith.addi %c0_i32_3, %c4_i32_4 : i32
    %c1_i32_5 = arith.constant 1 : i32
    %7 = scf.for %arg6 = %c0_i32_3 to %6 step %c1_i32_5 iter_args(%arg7 = %5) -> (vector<1x64xf32>)  : i32 {
      %14 = arith.index_cast %arg6 : i32 to index
      %c0 = arith.constant 0 : index
      %c0_13 = arith.constant 0 : index
      %15 = vector.load %arg5[%14, %c0, %c0_13] : memref<4x4x64xf32, #tpu.memory_space<vmem>>, vector<1x4x64xf32>
      %16 = vector.shape_cast %15 : vector<1x4x64xf32> to vector<4x64xf32>
      %17 = vector.broadcast %4 : vector<1x64xf32> to vector<4x64xf32>
      %18 = arith.subf %16, %17 : vector<4x64xf32>
      %19 = arith.mulf %18, %18 : vector<4x64xf32>
      %cst_14 = arith.constant dense<0.000000e+00> : vector<64xf32>
      %20 = vector.multi_reduction <add>, %19, %cst_14 [0] : vector<4x64xf32> to vector<64xf32>
      %21 = vector.shape_cast %20 : vector<64xf32> to vector<1x64xf32>
      %22 = arith.addf %arg7, %21 : vector<1x64xf32>
      scf.yield %22 : vector<1x64xf32>
    }
    %c4_i32_6 = arith.constant 4 : i32
    %cst_7 = arith.constant 6.250000e-02 : f32
    %8 = vector.broadcast %cst_7 : f32 to vector<1x64xf32>
    %9 = arith.mulf %7, %8 : vector<1x64xf32>
    %cst_8 = arith.constant 9.99999974E-6 : f32
    %10 = vector.broadcast %cst_8 : f32 to vector<1x64xf32>
    %11 = arith.addf %9, %10 : vector<1x64xf32>
    %12 = math.rsqrt %11 : vector<1x64xf32>
    %c0_i32_9 = arith.constant 0 : i32
    %c4_i32_10 = arith.constant 4 : i32
    %13 = arith.addi %c0_i32_9, %c4_i32_10 : i32
    %c1_i32_11 = arith.constant 1 : i32
    scf.for %arg6 = %c0_i32_9 to %13 step %c1_i32_11  : i32 {
      %14 = arith.index_cast %arg6 : i32 to index
      %c0 = arith.constant 0 : index
      %c0_13 = arith.constant 0 : index
      %15 = vector.load %arg5[%14, %c0, %c0_13] : memref<4x4x64xf32, #tpu.memory_space<vmem>>, vector<1x4x64xf32>
      %16 = vector.shape_cast %15 : vector<1x4x64xf32> to vector<4x64xf32>
      %17 = vector.broadcast %4 : vector<1x64xf32> to vector<4x64xf32>
      %18 = arith.subf %16, %17 : vector<4x64xf32>
      %19 = vector.broadcast %12 : vector<1x64xf32> to vector<4x64xf32>
      %20 = arith.mulf %18, %19 : vector<4x64xf32>
      %cst_14 = arith.constant 0.000000e+00 : f32
      %21 = vector.broadcast %cst_14 : f32 to vector<4x64xf32>
      %22 = arith.cmpf oge, %20, %21 : vector<4x64xf32>
      %cst_15 = arith.constant 2.000000e-01 : f32
      %23 = vector.broadcast %cst_15 : f32 to vector<4x64xf32>
      %24 = arith.mulf %23, %20 : vector<4x64xf32>
      %25 = arith.select %22, %20, %24 : vector<4x64xi1>, vector<4x64xf32>
      %26 = arith.truncf %25 : vector<4x64xf32> to vector<4x64xbf16>
      %c0_16 = arith.constant 0 : index
      %27 = arith.index_cast %arg6 : i32 to index
      %c0_17 = arith.constant 0 : index
      %c0_18 = arith.constant 0 : index
      %28 = vector.load %arg4[%c0_16, %27, %c0_17, %c0_18] : memref<1x4x4x64xbf16, #tpu.memory_space<vmem>>, vector<1x1x4x64xbf16>
      %29 = vector.shape_cast %28 : vector<1x1x4x64xbf16> to vector<4x64xbf16>
      %30 = vector.shape_cast %26 : vector<4x64xbf16> to vector<1x1x4x64xbf16>
      tpu.vector_store %arg4[%c0_16, %27, %c0_17, %c0_18], %30 {strides = array<i32>} : memref<1x4x4x64xbf16, #tpu.memory_space<vmem>>, vector<1x1x4x64xbf16>,
    }
    %c4_i32_12 = arith.constant 4 : i32
    return
  }
  func.func @transform_0(%arg0: i32) -> (i32, i32, i32, i32) {
    %c0_i32 = arith.constant 0 : i32
    %c0_i32_0 = arith.constant 0 : i32
    %c0_i32_1 = arith.constant 0 : i32
    %c0_i32_2 = arith.constant 0 : i32
    return %arg0, %c0_i32, %c0_i32_0, %c0_i32_1 : i32, i32, i32, i32
  }
  func.func @transform_1(%arg0: i32) -> (i32, i32, i32) {
    %c0_i32 = arith.constant 0 : i32
    %c0_i32_0 = arith.constant 0 : i32
    %c0_i32_1 = arith.constant 0 : i32
    %c0_i32_2 = arith.constant 0 : i32
    return %c0_i32, %c0_i32_0, %c0_i32_1 : i32, i32, i32
  }
  func.func @transform_2(%arg0: i32) -> (i32, i32) {
    %c0_i32 = arith.constant 0 : i32
    %c0_i32_0 = arith.constant 0 : i32
    %c0_i32_1 = arith.constant 0 : i32
    return %c0_i32, %c0_i32_0 : i32, i32
  }
  func.func @transform_3(%arg0: i32) -> (i32, i32, i32, i32) {
    %c0_i32 = arith.constant 0 : i32
    %c0_i32_0 = arith.constant 0 : i32
    %c0_i32_1 = arith.constant 0 : i32
    %c0_i32_2 = arith.constant 0 : i32
    return %arg0, %c0_i32, %c0_i32_0, %c0_i32_1 : i32, i32, i32, i32
  }
}

module attributes {stable_mosaic.version = 11 : i64} {
  func.func @_conv_norm_kernel(%arg0: i32, %arg1: memref<1x6x6x64xbf16, #tpu.memory_space<vmem>>, %arg2: memref<16x64x128xbf16, #tpu.memory_space<vmem>>, %arg3: memref<1x128xf32, #tpu.memory_space<vmem>>, %arg4: memref<1x3x3x128xbf16, #tpu.memory_space<vmem>>, %arg5: memref<3x3x128xf32, #tpu.memory_space<vmem>>) attributes {dimension_semantics = [#tpu.dimension_semantics<parallel>], iteration_bounds = array<i64: 2>, scalar_prefetch = 0 : i64, scratch_operands = 1 : i64, tpu.core_type = #tpu.core_type<tc>, window_params = [{transform_indices = @transform_0, window_bounds = array<i64: 1, 6, 6, 64>}, {pipeline_mode = #tpu.pipeline_mode<synchronous>, transform_indices = @transform_1, window_bounds = array<i64: 16, 64, 128>}, {pipeline_mode = #tpu.pipeline_mode<synchronous>, transform_indices = @transform_2, window_bounds = array<i64: 1, 128>}, {transform_indices = @transform_3, window_bounds = array<i64: 1, 3, 3, 128>}]} {
    %cst = arith.constant 0.000000e+00 : f32
    %0 = vector.broadcast %cst : f32 to vector<1x128xf32>
    %c0_i32 = arith.constant 0 : i32
    %c3_i32 = arith.constant 3 : i32
    %1 = arith.addi %c0_i32, %c3_i32 : i32
    %c1_i32 = arith.constant 1 : i32
    %2 = scf.for %arg6 = %c0_i32 to %1 step %c1_i32 iter_args(%arg7 = %0) -> (vector<1x128xf32>)  : i32 {
      %c0_i32_13 = arith.constant 0 : i32
      %14 = arith.addi %arg6, %c0_i32_13 : i32
      %c0 = arith.constant 0 : index
      %15 = arith.index_cast %14 : i32 to index
      %c0_14 = arith.constant 0 : index
      %c0_15 = arith.constant 0 : index
      %16 = vector.load %arg1[%c0, %15, %c0_14, %c0_15] : memref<1x6x6x64xbf16, #tpu.memory_space<vmem>>, vector<1x1x6x64xbf16>
      %17 = vector.shape_cast %16 : vector<1x1x6x64xbf16> to vector<6x64xbf16>
      %18 = vector.extract_strided_slice %17 {offsets = [0, 0], sizes = [3, 64], strides = [1, 1]} : vector<6x64xbf16> to vector<3x64xbf16>
      %c0_16 = arith.constant 0 : index
      %c0_17 = arith.constant 0 : index
      %c0_18 = arith.constant 0 : index
      %19 = vector.load %arg2[%c0_16, %c0_17, %c0_18] : memref<16x64x128xbf16, #tpu.memory_space<vmem>>, vector<1x64x128xbf16>
      %20 = vector.shape_cast %19 : vector<1x64x128xbf16> to vector<64x128xbf16>
      %cst_19 = arith.constant dense<0.000000e+00> : vector<3x128xf32>
      %21 = tpu.matmul %18, %20, %cst_19 {dimension_numbers = #tpu.dot_dimension_numbers<[1], [0], [0], [1], [0, 0, 1, 1], [], []>} : vector<3x64xbf16>, vector<64x128xbf16>, vector<3x128xf32> -> vector<3x128xf32>
      %22 = vector.extract_strided_slice %17 {offsets = [1, 0], sizes = [3, 64], strides = [1, 1]} : vector<6x64xbf16> to vector<3x64xbf16>
      %c1 = arith.constant 1 : index
      %c0_20 = arith.constant 0 : index
      %c0_21 = arith.constant 0 : index
      %23 = vector.load %arg2[%c1, %c0_20, %c0_21] : memref<16x64x128xbf16, #tpu.memory_space<vmem>>, vector<1x64x128xbf16>
      %24 = vector.shape_cast %23 : vector<1x64x128xbf16> to vector<64x128xbf16>
      %cst_22 = arith.constant dense<0.000000e+00> : vector<3x128xf32>
      %25 = tpu.matmul %22, %24, %cst_22 {dimension_numbers = #tpu.dot_dimension_numbers<[1], [0], [0], [1], [0, 0, 1, 1], [], []>} : vector<3x64xbf16>, vector<64x128xbf16>, vector<3x128xf32> -> vector<3x128xf32>
      %26 = arith.addf %21, %25 : vector<3x128xf32>
      %27 = vector.extract_strided_slice %17 {offsets = [2, 0], sizes = [3, 64], strides = [1, 1]} : vector<6x64xbf16> to vector<3x64xbf16>
      %c2 = arith.constant 2 : index
      %c0_23 = arith.constant 0 : index
      %c0_24 = arith.constant 0 : index
      %28 = vector.load %arg2[%c2, %c0_23, %c0_24] : memref<16x64x128xbf16, #tpu.memory_space<vmem>>, vector<1x64x128xbf16>
      %29 = vector.shape_cast %28 : vector<1x64x128xbf16> to vector<64x128xbf16>
      %cst_25 = arith.constant dense<0.000000e+00> : vector<3x128xf32>
      %30 = tpu.matmul %27, %29, %cst_25 {dimension_numbers = #tpu.dot_dimension_numbers<[1], [0], [0], [1], [0, 0, 1, 1], [], []>} : vector<3x64xbf16>, vector<64x128xbf16>, vector<3x128xf32> -> vector<3x128xf32>
      %31 = arith.addf %26, %30 : vector<3x128xf32>
      %32 = vector.extract_strided_slice %17 {offsets = [3, 0], sizes = [3, 64], strides = [1, 1]} : vector<6x64xbf16> to vector<3x64xbf16>
      %c3 = arith.constant 3 : index
      %c0_26 = arith.constant 0 : index
      %c0_27 = arith.constant 0 : index
      %33 = vector.load %arg2[%c3, %c0_26, %c0_27] : memref<16x64x128xbf16, #tpu.memory_space<vmem>>, vector<1x64x128xbf16>
      %34 = vector.shape_cast %33 : vector<1x64x128xbf16> to vector<64x128xbf16>
      %cst_28 = arith.constant dense<0.000000e+00> : vector<3x128xf32>
      %35 = tpu.matmul %32, %34, %cst_28 {dimension_numbers = #tpu.dot_dimension_numbers<[1], [0], [0], [1], [0, 0, 1, 1], [], []>} : vector<3x64xbf16>, vector<64x128xbf16>, vector<3x128xf32> -> vector<3x128xf32>
      %36 = arith.addf %31, %35 : vector<3x128xf32>
      %c1_i32_29 = arith.constant 1 : i32
      %37 = arith.addi %arg6, %c1_i32_29 : i32
      %c0_30 = arith.constant 0 : index
      %38 = arith.index_cast %37 : i32 to index
      %c0_31 = arith.constant 0 : index
      %c0_32 = arith.constant 0 : index
      %39 = vector.load %arg1[%c0_30, %38, %c0_31, %c0_32] : memref<1x6x6x64xbf16, #tpu.memory_space<vmem>>, vector<1x1x6x64xbf16>
      %40 = vector.shape_cast %39 : vector<1x1x6x64xbf16> to vector<6x64xbf16>
      %41 = vector.extract_strided_slice %40 {offsets = [0, 0], sizes = [3, 64], strides = [1, 1]} : vector<6x64xbf16> to vector<3x64xbf16>
      %c4 = arith.constant 4 : index
      %c0_33 = arith.constant 0 : index
      %c0_34 = arith.constant 0 : index
      %42 = vector.load %arg2[%c4, %c0_33, %c0_34] : memref<16x64x128xbf16, #tpu.memory_space<vmem>>, vector<1x64x128xbf16>
      %43 = vector.shape_cast %42 : vector<1x64x128xbf16> to vector<64x128xbf16>
      %cst_35 = arith.constant dense<0.000000e+00> : vector<3x128xf32>
      %44 = tpu.matmul %41, %43, %cst_35 {dimension_numbers = #tpu.dot_dimension_numbers<[1], [0], [0], [1], [0, 0, 1, 1], [], []>} : vector<3x64xbf16>, vector<64x128xbf16>, vector<3x128xf32> -> vector<3x128xf32>
      %45 = arith.addf %36, %44 : vector<3x128xf32>
      %46 = vector.extract_strided_slice %40 {offsets = [1, 0], sizes = [3, 64], strides = [1, 1]} : vector<6x64xbf16> to vector<3x64xbf16>
      %c5 = arith.constant 5 : index
      %c0_36 = arith.constant 0 : index
      %c0_37 = arith.constant 0 : index
      %47 = vector.load %arg2[%c5, %c0_36, %c0_37] : memref<16x64x128xbf16, #tpu.memory_space<vmem>>, vector<1x64x128xbf16>
      %48 = vector.shape_cast %47 : vector<1x64x128xbf16> to vector<64x128xbf16>
      %cst_38 = arith.constant dense<0.000000e+00> : vector<3x128xf32>
      %49 = tpu.matmul %46, %48, %cst_38 {dimension_numbers = #tpu.dot_dimension_numbers<[1], [0], [0], [1], [0, 0, 1, 1], [], []>} : vector<3x64xbf16>, vector<64x128xbf16>, vector<3x128xf32> -> vector<3x128xf32>
      %50 = arith.addf %45, %49 : vector<3x128xf32>
      %51 = vector.extract_strided_slice %40 {offsets = [2, 0], sizes = [3, 64], strides = [1, 1]} : vector<6x64xbf16> to vector<3x64xbf16>
      %c6 = arith.constant 6 : index
      %c0_39 = arith.constant 0 : index
      %c0_40 = arith.constant 0 : index
      %52 = vector.load %arg2[%c6, %c0_39, %c0_40] : memref<16x64x128xbf16, #tpu.memory_space<vmem>>, vector<1x64x128xbf16>
      %53 = vector.shape_cast %52 : vector<1x64x128xbf16> to vector<64x128xbf16>
      %cst_41 = arith.constant dense<0.000000e+00> : vector<3x128xf32>
      %54 = tpu.matmul %51, %53, %cst_41 {dimension_numbers = #tpu.dot_dimension_numbers<[1], [0], [0], [1], [0, 0, 1, 1], [], []>} : vector<3x64xbf16>, vector<64x128xbf16>, vector<3x128xf32> -> vector<3x128xf32>
      %55 = arith.addf %50, %54 : vector<3x128xf32>
      %56 = vector.extract_strided_slice %40 {offsets = [3, 0], sizes = [3, 64], strides = [1, 1]} : vector<6x64xbf16> to vector<3x64xbf16>
      %c7 = arith.constant 7 : index
      %c0_42 = arith.constant 0 : index
      %c0_43 = arith.constant 0 : index
      %57 = vector.load %arg2[%c7, %c0_42, %c0_43] : memref<16x64x128xbf16, #tpu.memory_space<vmem>>, vector<1x64x128xbf16>
      %58 = vector.shape_cast %57 : vector<1x64x128xbf16> to vector<64x128xbf16>
      %cst_44 = arith.constant dense<0.000000e+00> : vector<3x128xf32>
      %59 = tpu.matmul %56, %58, %cst_44 {dimension_numbers = #tpu.dot_dimension_numbers<[1], [0], [0], [1], [0, 0, 1, 1], [], []>} : vector<3x64xbf16>, vector<64x128xbf16>, vector<3x128xf32> -> vector<3x128xf32>
      %60 = arith.addf %55, %59 : vector<3x128xf32>
      %c2_i32 = arith.constant 2 : i32
      %61 = arith.addi %arg6, %c2_i32 : i32
      %c0_45 = arith.constant 0 : index
      %62 = arith.index_cast %61 : i32 to index
      %c0_46 = arith.constant 0 : index
      %c0_47 = arith.constant 0 : index
      %63 = vector.load %arg1[%c0_45, %62, %c0_46, %c0_47] : memref<1x6x6x64xbf16, #tpu.memory_space<vmem>>, vector<1x1x6x64xbf16>
      %64 = vector.shape_cast %63 : vector<1x1x6x64xbf16> to vector<6x64xbf16>
      %65 = vector.extract_strided_slice %64 {offsets = [0, 0], sizes = [3, 64], strides = [1, 1]} : vector<6x64xbf16> to vector<3x64xbf16>
      %c8 = arith.constant 8 : index
      %c0_48 = arith.constant 0 : index
      %c0_49 = arith.constant 0 : index
      %66 = vector.load %arg2[%c8, %c0_48, %c0_49] : memref<16x64x128xbf16, #tpu.memory_space<vmem>>, vector<1x64x128xbf16>
      %67 = vector.shape_cast %66 : vector<1x64x128xbf16> to vector<64x128xbf16>
      %cst_50 = arith.constant dense<0.000000e+00> : vector<3x128xf32>
      %68 = tpu.matmul %65, %67, %cst_50 {dimension_numbers = #tpu.dot_dimension_numbers<[1], [0], [0], [1], [0, 0, 1, 1], [], []>} : vector<3x64xbf16>, vector<64x128xbf16>, vector<3x128xf32> -> vector<3x128xf32>
      %69 = arith.addf %60, %68 : vector<3x128xf32>
      %70 = vector.extract_strided_slice %64 {offsets = [1, 0], sizes = [3, 64], strides = [1, 1]} : vector<6x64xbf16> to vector<3x64xbf16>
      %c9 = arith.constant 9 : index
      %c0_51 = arith.constant 0 : index
      %c0_52 = arith.constant 0 : index
      %71 = vector.load %arg2[%c9, %c0_51, %c0_52] : memref<16x64x128xbf16, #tpu.memory_space<vmem>>, vector<1x64x128xbf16>
      %72 = vector.shape_cast %71 : vector<1x64x128xbf16> to vector<64x128xbf16>
      %cst_53 = arith.constant dense<0.000000e+00> : vector<3x128xf32>
      %73 = tpu.matmul %70, %72, %cst_53 {dimension_numbers = #tpu.dot_dimension_numbers<[1], [0], [0], [1], [0, 0, 1, 1], [], []>} : vector<3x64xbf16>, vector<64x128xbf16>, vector<3x128xf32> -> vector<3x128xf32>
      %74 = arith.addf %69, %73 : vector<3x128xf32>
      %75 = vector.extract_strided_slice %64 {offsets = [2, 0], sizes = [3, 64], strides = [1, 1]} : vector<6x64xbf16> to vector<3x64xbf16>
      %c10 = arith.constant 10 : index
      %c0_54 = arith.constant 0 : index
      %c0_55 = arith.constant 0 : index
      %76 = vector.load %arg2[%c10, %c0_54, %c0_55] : memref<16x64x128xbf16, #tpu.memory_space<vmem>>, vector<1x64x128xbf16>
      %77 = vector.shape_cast %76 : vector<1x64x128xbf16> to vector<64x128xbf16>
      %cst_56 = arith.constant dense<0.000000e+00> : vector<3x128xf32>
      %78 = tpu.matmul %75, %77, %cst_56 {dimension_numbers = #tpu.dot_dimension_numbers<[1], [0], [0], [1], [0, 0, 1, 1], [], []>} : vector<3x64xbf16>, vector<64x128xbf16>, vector<3x128xf32> -> vector<3x128xf32>
      %79 = arith.addf %74, %78 : vector<3x128xf32>
      %80 = vector.extract_strided_slice %64 {offsets = [3, 0], sizes = [3, 64], strides = [1, 1]} : vector<6x64xbf16> to vector<3x64xbf16>
      %c11 = arith.constant 11 : index
      %c0_57 = arith.constant 0 : index
      %c0_58 = arith.constant 0 : index
      %81 = vector.load %arg2[%c11, %c0_57, %c0_58] : memref<16x64x128xbf16, #tpu.memory_space<vmem>>, vector<1x64x128xbf16>
      %82 = vector.shape_cast %81 : vector<1x64x128xbf16> to vector<64x128xbf16>
      %cst_59 = arith.constant dense<0.000000e+00> : vector<3x128xf32>
      %83 = tpu.matmul %80, %82, %cst_59 {dimension_numbers = #tpu.dot_dimension_numbers<[1], [0], [0], [1], [0, 0, 1, 1], [], []>} : vector<3x64xbf16>, vector<64x128xbf16>, vector<3x128xf32> -> vector<3x128xf32>
      %84 = arith.addf %79, %83 : vector<3x128xf32>
      %c3_i32_60 = arith.constant 3 : i32
      %85 = arith.addi %arg6, %c3_i32_60 : i32
      %c0_61 = arith.constant 0 : index
      %86 = arith.index_cast %85 : i32 to index
      %c0_62 = arith.constant 0 : index
      %c0_63 = arith.constant 0 : index
      %87 = vector.load %arg1[%c0_61, %86, %c0_62, %c0_63] : memref<1x6x6x64xbf16, #tpu.memory_space<vmem>>, vector<1x1x6x64xbf16>
      %88 = vector.shape_cast %87 : vector<1x1x6x64xbf16> to vector<6x64xbf16>
      %89 = vector.extract_strided_slice %88 {offsets = [0, 0], sizes = [3, 64], strides = [1, 1]} : vector<6x64xbf16> to vector<3x64xbf16>
      %c12 = arith.constant 12 : index
      %c0_64 = arith.constant 0 : index
      %c0_65 = arith.constant 0 : index
      %90 = vector.load %arg2[%c12, %c0_64, %c0_65] : memref<16x64x128xbf16, #tpu.memory_space<vmem>>, vector<1x64x128xbf16>
      %91 = vector.shape_cast %90 : vector<1x64x128xbf16> to vector<64x128xbf16>
      %cst_66 = arith.constant dense<0.000000e+00> : vector<3x128xf32>
      %92 = tpu.matmul %89, %91, %cst_66 {dimension_numbers = #tpu.dot_dimension_numbers<[1], [0], [0], [1], [0, 0, 1, 1], [], []>} : vector<3x64xbf16>, vector<64x128xbf16>, vector<3x128xf32> -> vector<3x128xf32>
      %93 = arith.addf %84, %92 : vector<3x128xf32>
      %94 = vector.extract_strided_slice %88 {offsets = [1, 0], sizes = [3, 64], strides = [1, 1]} : vector<6x64xbf16> to vector<3x64xbf16>
      %c13 = arith.constant 13 : index
      %c0_67 = arith.constant 0 : index
      %c0_68 = arith.constant 0 : index
      %95 = vector.load %arg2[%c13, %c0_67, %c0_68] : memref<16x64x128xbf16, #tpu.memory_space<vmem>>, vector<1x64x128xbf16>
      %96 = vector.shape_cast %95 : vector<1x64x128xbf16> to vector<64x128xbf16>
      %cst_69 = arith.constant dense<0.000000e+00> : vector<3x128xf32>
      %97 = tpu.matmul %94, %96, %cst_69 {dimension_numbers = #tpu.dot_dimension_numbers<[1], [0], [0], [1], [0, 0, 1, 1], [], []>} : vector<3x64xbf16>, vector<64x128xbf16>, vector<3x128xf32> -> vector<3x128xf32>
      %98 = arith.addf %93, %97 : vector<3x128xf32>
      %99 = vector.extract_strided_slice %88 {offsets = [2, 0], sizes = [3, 64], strides = [1, 1]} : vector<6x64xbf16> to vector<3x64xbf16>
      %c14 = arith.constant 14 : index
      %c0_70 = arith.constant 0 : index
      %c0_71 = arith.constant 0 : index
      %100 = vector.load %arg2[%c14, %c0_70, %c0_71] : memref<16x64x128xbf16, #tpu.memory_space<vmem>>, vector<1x64x128xbf16>
      %101 = vector.shape_cast %100 : vector<1x64x128xbf16> to vector<64x128xbf16>
      %cst_72 = arith.constant dense<0.000000e+00> : vector<3x128xf32>
      %102 = tpu.matmul %99, %101, %cst_72 {dimension_numbers = #tpu.dot_dimension_numbers<[1], [0], [0], [1], [0, 0, 1, 1], [], []>} : vector<3x64xbf16>, vector<64x128xbf16>, vector<3x128xf32> -> vector<3x128xf32>
      %103 = arith.addf %98, %102 : vector<3x128xf32>
      %104 = vector.extract_strided_slice %88 {offsets = [3, 0], sizes = [3, 64], strides = [1, 1]} : vector<6x64xbf16> to vector<3x64xbf16>
      %c15 = arith.constant 15 : index
      %c0_73 = arith.constant 0 : index
      %c0_74 = arith.constant 0 : index
      %105 = vector.load %arg2[%c15, %c0_73, %c0_74] : memref<16x64x128xbf16, #tpu.memory_space<vmem>>, vector<1x64x128xbf16>
      %106 = vector.shape_cast %105 : vector<1x64x128xbf16> to vector<64x128xbf16>
      %cst_75 = arith.constant dense<0.000000e+00> : vector<3x128xf32>
      %107 = tpu.matmul %104, %106, %cst_75 {dimension_numbers = #tpu.dot_dimension_numbers<[1], [0], [0], [1], [0, 0, 1, 1], [], []>} : vector<3x64xbf16>, vector<64x128xbf16>, vector<3x128xf32> -> vector<3x128xf32>
      %108 = arith.addf %103, %107 : vector<3x128xf32>
      %c0_76 = arith.constant 0 : index
      %c0_77 = arith.constant 0 : index
      %109 = vector.load %arg3[%c0_76, %c0_77] : memref<1x128xf32, #tpu.memory_space<vmem>>, vector<1x128xf32>
      %110 = vector.broadcast %109 : vector<1x128xf32> to vector<3x128xf32>
      %111 = arith.addf %108, %110 : vector<3x128xf32>
      %112 = arith.index_cast %arg6 : i32 to index
      %c0_78 = arith.constant 0 : index
      %c0_79 = arith.constant 0 : index
      %113 = vector.load %arg5[%112, %c0_78, %c0_79] : memref<3x3x128xf32, #tpu.memory_space<vmem>>, vector<1x3x128xf32>
      %114 = vector.shape_cast %113 : vector<1x3x128xf32> to vector<3x128xf32>
      %115 = vector.shape_cast %111 : vector<3x128xf32> to vector<1x3x128xf32>
      tpu.vector_store %arg5[%112, %c0_78, %c0_79], %115 {strides = array<i32>} : memref<3x3x128xf32, #tpu.memory_space<vmem>>, vector<1x3x128xf32>,
      %cst_80 = arith.constant dense<0.000000e+00> : vector<128xf32>
      %116 = vector.multi_reduction <add>, %111, %cst_80 [0] : vector<3x128xf32> to vector<128xf32>
      %117 = vector.shape_cast %116 : vector<128xf32> to vector<1x128xf32>
      %118 = arith.addf %arg7, %117 : vector<1x128xf32>
      scf.yield %118 : vector<1x128xf32>
    }
    %c3_i32_0 = arith.constant 3 : i32
    %cst_1 = arith.constant 0.111111112 : f32
    %3 = vector.broadcast %cst_1 : f32 to vector<1x128xf32>
    %4 = arith.mulf %2, %3 : vector<1x128xf32>
    %cst_2 = arith.constant 0.000000e+00 : f32
    %5 = vector.broadcast %cst_2 : f32 to vector<1x128xf32>
    %c0_i32_3 = arith.constant 0 : i32
    %c3_i32_4 = arith.constant 3 : i32
    %6 = arith.addi %c0_i32_3, %c3_i32_4 : i32
    %c1_i32_5 = arith.constant 1 : i32
    %7 = scf.for %arg6 = %c0_i32_3 to %6 step %c1_i32_5 iter_args(%arg7 = %5) -> (vector<1x128xf32>)  : i32 {
      %14 = arith.index_cast %arg6 : i32 to index
      %c0 = arith.constant 0 : index
      %c0_13 = arith.constant 0 : index
      %15 = vector.load %arg5[%14, %c0, %c0_13] : memref<3x3x128xf32, #tpu.memory_space<vmem>>, vector<1x3x128xf32>
      %16 = vector.shape_cast %15 : vector<1x3x128xf32> to vector<3x128xf32>
      %17 = vector.broadcast %4 : vector<1x128xf32> to vector<3x128xf32>
      %18 = arith.subf %16, %17 : vector<3x128xf32>
      %19 = arith.mulf %18, %18 : vector<3x128xf32>
      %cst_14 = arith.constant dense<0.000000e+00> : vector<128xf32>
      %20 = vector.multi_reduction <add>, %19, %cst_14 [0] : vector<3x128xf32> to vector<128xf32>
      %21 = vector.shape_cast %20 : vector<128xf32> to vector<1x128xf32>
      %22 = arith.addf %arg7, %21 : vector<1x128xf32>
      scf.yield %22 : vector<1x128xf32>
    }
    %c3_i32_6 = arith.constant 3 : i32
    %cst_7 = arith.constant 0.111111112 : f32
    %8 = vector.broadcast %cst_7 : f32 to vector<1x128xf32>
    %9 = arith.mulf %7, %8 : vector<1x128xf32>
    %cst_8 = arith.constant 9.99999974E-6 : f32
    %10 = vector.broadcast %cst_8 : f32 to vector<1x128xf32>
    %11 = arith.addf %9, %10 : vector<1x128xf32>
    %12 = math.rsqrt %11 : vector<1x128xf32>
    %c0_i32_9 = arith.constant 0 : i32
    %c3_i32_10 = arith.constant 3 : i32
    %13 = arith.addi %c0_i32_9, %c3_i32_10 : i32
    %c1_i32_11 = arith.constant 1 : i32
    scf.for %arg6 = %c0_i32_9 to %13 step %c1_i32_11  : i32 {
      %14 = arith.index_cast %arg6 : i32 to index
      %c0 = arith.constant 0 : index
      %c0_13 = arith.constant 0 : index
      %15 = vector.load %arg5[%14, %c0, %c0_13] : memref<3x3x128xf32, #tpu.memory_space<vmem>>, vector<1x3x128xf32>
      %16 = vector.shape_cast %15 : vector<1x3x128xf32> to vector<3x128xf32>
      %17 = vector.broadcast %4 : vector<1x128xf32> to vector<3x128xf32>
      %18 = arith.subf %16, %17 : vector<3x128xf32>
      %19 = vector.broadcast %12 : vector<1x128xf32> to vector<3x128xf32>
      %20 = arith.mulf %18, %19 : vector<3x128xf32>
      %cst_14 = arith.constant 0.000000e+00 : f32
      %21 = vector.broadcast %cst_14 : f32 to vector<3x128xf32>
      %22 = arith.cmpf oge, %20, %21 : vector<3x128xf32>
      %cst_15 = arith.constant 2.000000e-01 : f32
      %23 = vector.broadcast %cst_15 : f32 to vector<3x128xf32>
      %24 = arith.mulf %23, %20 : vector<3x128xf32>
      %25 = arith.select %22, %20, %24 : vector<3x128xi1>, vector<3x128xf32>
      %26 = arith.truncf %25 : vector<3x128xf32> to vector<3x128xbf16>
      %c0_16 = arith.constant 0 : index
      %27 = arith.index_cast %arg6 : i32 to index
      %c0_17 = arith.constant 0 : index
      %c0_18 = arith.constant 0 : index
      %28 = vector.load %arg4[%c0_16, %27, %c0_17, %c0_18] : memref<1x3x3x128xbf16, #tpu.memory_space<vmem>>, vector<1x1x3x128xbf16>
      %29 = vector.shape_cast %28 : vector<1x1x3x128xbf16> to vector<3x128xbf16>
      %30 = vector.shape_cast %26 : vector<3x128xbf16> to vector<1x1x3x128xbf16>
      tpu.vector_store %arg4[%c0_16, %27, %c0_17, %c0_18], %30 {strides = array<i32>} : memref<1x3x3x128xbf16, #tpu.memory_space<vmem>>, vector<1x1x3x128xbf16>,
    }
    %c3_i32_12 = arith.constant 3 : i32
    return
  }
  func.func @transform_0(%arg0: i32) -> (i32, i32, i32, i32) {
    %c0_i32 = arith.constant 0 : i32
    %c0_i32_0 = arith.constant 0 : i32
    %c0_i32_1 = arith.constant 0 : i32
    %c0_i32_2 = arith.constant 0 : i32
    return %arg0, %c0_i32, %c0_i32_0, %c0_i32_1 : i32, i32, i32, i32
  }
  func.func @transform_1(%arg0: i32) -> (i32, i32, i32) {
    %c0_i32 = arith.constant 0 : i32
    %c0_i32_0 = arith.constant 0 : i32
    %c0_i32_1 = arith.constant 0 : i32
    %c0_i32_2 = arith.constant 0 : i32
    return %c0_i32, %c0_i32_0, %c0_i32_1 : i32, i32, i32
  }
  func.func @transform_2(%arg0: i32) -> (i32, i32) {
    %c0_i32 = arith.constant 0 : i32
    %c0_i32_0 = arith.constant 0 : i32
    %c0_i32_1 = arith.constant 0 : i32
    return %c0_i32, %c0_i32_0 : i32, i32
  }
  func.func @transform_3(%arg0: i32) -> (i32, i32, i32, i32) {
    %c0_i32 = arith.constant 0 : i32
    %c0_i32_0 = arith.constant 0 : i32
    %c0_i32_1 = arith.constant 0 : i32
    %c0_i32_2 = arith.constant 0 : i32
    return %arg0, %c0_i32, %c0_i32_0, %c0_i32_1 : i32, i32, i32, i32
  }
}

module attributes {stable_mosaic.version = 11 : i64} {
  func.func @_conv_act_kernel(%arg0: i32, %arg1: memref<1x5x5x128xbf16, #tpu.memory_space<vmem>>, %arg2: memref<16x128x128xbf16, #tpu.memory_space<vmem>>, %arg3: memref<1x128xf32, #tpu.memory_space<vmem>>, %arg4: memref<1x2x2x128xf32, #tpu.memory_space<vmem>>) attributes {dimension_semantics = [#tpu.dimension_semantics<parallel>], iteration_bounds = array<i64: 2>, scalar_prefetch = 0 : i64, scratch_operands = 0 : i64, tpu.core_type = #tpu.core_type<tc>, window_params = [{transform_indices = @transform_0, window_bounds = array<i64: 1, 5, 5, 128>}, {pipeline_mode = #tpu.pipeline_mode<synchronous>, transform_indices = @transform_1, window_bounds = array<i64: 16, 128, 128>}, {pipeline_mode = #tpu.pipeline_mode<synchronous>, transform_indices = @transform_2, window_bounds = array<i64: 1, 128>}, {transform_indices = @transform_3, window_bounds = array<i64: 1, 2, 2, 128>}]} {
    %c0_i32 = arith.constant 0 : i32
    %c2_i32 = arith.constant 2 : i32
    %0 = arith.addi %c0_i32, %c2_i32 : i32
    %c1_i32 = arith.constant 1 : i32
    scf.for %arg5 = %c0_i32 to %0 step %c1_i32  : i32 {
      %c0_i32_1 = arith.constant 0 : i32
      %1 = arith.addi %arg5, %c0_i32_1 : i32
      %c0 = arith.constant 0 : index
      %2 = arith.index_cast %1 : i32 to index
      %c0_2 = arith.constant 0 : index
      %c0_3 = arith.constant 0 : index
      %3 = vector.load %arg1[%c0, %2, %c0_2, %c0_3] : memref<1x5x5x128xbf16, #tpu.memory_space<vmem>>, vector<1x1x5x128xbf16>
      %4 = vector.shape_cast %3 : vector<1x1x5x128xbf16> to vector<5x128xbf16>
      %5 = vector.extract_strided_slice %4 {offsets = [0, 0], sizes = [2, 128], strides = [1, 1]} : vector<5x128xbf16> to vector<2x128xbf16>
      %c0_4 = arith.constant 0 : index
      %c0_5 = arith.constant 0 : index
      %c0_6 = arith.constant 0 : index
      %6 = vector.load %arg2[%c0_4, %c0_5, %c0_6] : memref<16x128x128xbf16, #tpu.memory_space<vmem>>, vector<1x128x128xbf16>
      %7 = vector.shape_cast %6 : vector<1x128x128xbf16> to vector<128x128xbf16>
      %cst = arith.constant dense<0.000000e+00> : vector<2x128xf32>
      %8 = tpu.matmul %5, %7, %cst {dimension_numbers = #tpu.dot_dimension_numbers<[1], [0], [0], [1], [0, 0, 1, 1], [], []>} : vector<2x128xbf16>, vector<128x128xbf16>, vector<2x128xf32> -> vector<2x128xf32>
      %9 = vector.extract_strided_slice %4 {offsets = [1, 0], sizes = [2, 128], strides = [1, 1]} : vector<5x128xbf16> to vector<2x128xbf16>
      %c1 = arith.constant 1 : index
      %c0_7 = arith.constant 0 : index
      %c0_8 = arith.constant 0 : index
      %10 = vector.load %arg2[%c1, %c0_7, %c0_8] : memref<16x128x128xbf16, #tpu.memory_space<vmem>>, vector<1x128x128xbf16>
      %11 = vector.shape_cast %10 : vector<1x128x128xbf16> to vector<128x128xbf16>
      %cst_9 = arith.constant dense<0.000000e+00> : vector<2x128xf32>
      %12 = tpu.matmul %9, %11, %cst_9 {dimension_numbers = #tpu.dot_dimension_numbers<[1], [0], [0], [1], [0, 0, 1, 1], [], []>} : vector<2x128xbf16>, vector<128x128xbf16>, vector<2x128xf32> -> vector<2x128xf32>
      %13 = arith.addf %8, %12 : vector<2x128xf32>
      %14 = vector.extract_strided_slice %4 {offsets = [2, 0], sizes = [2, 128], strides = [1, 1]} : vector<5x128xbf16> to vector<2x128xbf16>
      %c2 = arith.constant 2 : index
      %c0_10 = arith.constant 0 : index
      %c0_11 = arith.constant 0 : index
      %15 = vector.load %arg2[%c2, %c0_10, %c0_11] : memref<16x128x128xbf16, #tpu.memory_space<vmem>>, vector<1x128x128xbf16>
      %16 = vector.shape_cast %15 : vector<1x128x128xbf16> to vector<128x128xbf16>
      %cst_12 = arith.constant dense<0.000000e+00> : vector<2x128xf32>
      %17 = tpu.matmul %14, %16, %cst_12 {dimension_numbers = #tpu.dot_dimension_numbers<[1], [0], [0], [1], [0, 0, 1, 1], [], []>} : vector<2x128xbf16>, vector<128x128xbf16>, vector<2x128xf32> -> vector<2x128xf32>
      %18 = arith.addf %13, %17 : vector<2x128xf32>
      %19 = vector.extract_strided_slice %4 {offsets = [3, 0], sizes = [2, 128], strides = [1, 1]} : vector<5x128xbf16> to vector<2x128xbf16>
      %c3 = arith.constant 3 : index
      %c0_13 = arith.constant 0 : index
      %c0_14 = arith.constant 0 : index
      %20 = vector.load %arg2[%c3, %c0_13, %c0_14] : memref<16x128x128xbf16, #tpu.memory_space<vmem>>, vector<1x128x128xbf16>
      %21 = vector.shape_cast %20 : vector<1x128x128xbf16> to vector<128x128xbf16>
      %cst_15 = arith.constant dense<0.000000e+00> : vector<2x128xf32>
      %22 = tpu.matmul %19, %21, %cst_15 {dimension_numbers = #tpu.dot_dimension_numbers<[1], [0], [0], [1], [0, 0, 1, 1], [], []>} : vector<2x128xbf16>, vector<128x128xbf16>, vector<2x128xf32> -> vector<2x128xf32>
      %23 = arith.addf %18, %22 : vector<2x128xf32>
      %c1_i32_16 = arith.constant 1 : i32
      %24 = arith.addi %arg5, %c1_i32_16 : i32
      %c0_17 = arith.constant 0 : index
      %25 = arith.index_cast %24 : i32 to index
      %c0_18 = arith.constant 0 : index
      %c0_19 = arith.constant 0 : index
      %26 = vector.load %arg1[%c0_17, %25, %c0_18, %c0_19] : memref<1x5x5x128xbf16, #tpu.memory_space<vmem>>, vector<1x1x5x128xbf16>
      %27 = vector.shape_cast %26 : vector<1x1x5x128xbf16> to vector<5x128xbf16>
      %28 = vector.extract_strided_slice %27 {offsets = [0, 0], sizes = [2, 128], strides = [1, 1]} : vector<5x128xbf16> to vector<2x128xbf16>
      %c4 = arith.constant 4 : index
      %c0_20 = arith.constant 0 : index
      %c0_21 = arith.constant 0 : index
      %29 = vector.load %arg2[%c4, %c0_20, %c0_21] : memref<16x128x128xbf16, #tpu.memory_space<vmem>>, vector<1x128x128xbf16>
      %30 = vector.shape_cast %29 : vector<1x128x128xbf16> to vector<128x128xbf16>
      %cst_22 = arith.constant dense<0.000000e+00> : vector<2x128xf32>
      %31 = tpu.matmul %28, %30, %cst_22 {dimension_numbers = #tpu.dot_dimension_numbers<[1], [0], [0], [1], [0, 0, 1, 1], [], []>} : vector<2x128xbf16>, vector<128x128xbf16>, vector<2x128xf32> -> vector<2x128xf32>
      %32 = arith.addf %23, %31 : vector<2x128xf32>
      %33 = vector.extract_strided_slice %27 {offsets = [1, 0], sizes = [2, 128], strides = [1, 1]} : vector<5x128xbf16> to vector<2x128xbf16>
      %c5 = arith.constant 5 : index
      %c0_23 = arith.constant 0 : index
      %c0_24 = arith.constant 0 : index
      %34 = vector.load %arg2[%c5, %c0_23, %c0_24] : memref<16x128x128xbf16, #tpu.memory_space<vmem>>, vector<1x128x128xbf16>
      %35 = vector.shape_cast %34 : vector<1x128x128xbf16> to vector<128x128xbf16>
      %cst_25 = arith.constant dense<0.000000e+00> : vector<2x128xf32>
      %36 = tpu.matmul %33, %35, %cst_25 {dimension_numbers = #tpu.dot_dimension_numbers<[1], [0], [0], [1], [0, 0, 1, 1], [], []>} : vector<2x128xbf16>, vector<128x128xbf16>, vector<2x128xf32> -> vector<2x128xf32>
      %37 = arith.addf %32, %36 : vector<2x128xf32>
      %38 = vector.extract_strided_slice %27 {offsets = [2, 0], sizes = [2, 128], strides = [1, 1]} : vector<5x128xbf16> to vector<2x128xbf16>
      %c6 = arith.constant 6 : index
      %c0_26 = arith.constant 0 : index
      %c0_27 = arith.constant 0 : index
      %39 = vector.load %arg2[%c6, %c0_26, %c0_27] : memref<16x128x128xbf16, #tpu.memory_space<vmem>>, vector<1x128x128xbf16>
      %40 = vector.shape_cast %39 : vector<1x128x128xbf16> to vector<128x128xbf16>
      %cst_28 = arith.constant dense<0.000000e+00> : vector<2x128xf32>
      %41 = tpu.matmul %38, %40, %cst_28 {dimension_numbers = #tpu.dot_dimension_numbers<[1], [0], [0], [1], [0, 0, 1, 1], [], []>} : vector<2x128xbf16>, vector<128x128xbf16>, vector<2x128xf32> -> vector<2x128xf32>
      %42 = arith.addf %37, %41 : vector<2x128xf32>
      %43 = vector.extract_strided_slice %27 {offsets = [3, 0], sizes = [2, 128], strides = [1, 1]} : vector<5x128xbf16> to vector<2x128xbf16>
      %c7 = arith.constant 7 : index
      %c0_29 = arith.constant 0 : index
      %c0_30 = arith.constant 0 : index
      %44 = vector.load %arg2[%c7, %c0_29, %c0_30] : memref<16x128x128xbf16, #tpu.memory_space<vmem>>, vector<1x128x128xbf16>
      %45 = vector.shape_cast %44 : vector<1x128x128xbf16> to vector<128x128xbf16>
      %cst_31 = arith.constant dense<0.000000e+00> : vector<2x128xf32>
      %46 = tpu.matmul %43, %45, %cst_31 {dimension_numbers = #tpu.dot_dimension_numbers<[1], [0], [0], [1], [0, 0, 1, 1], [], []>} : vector<2x128xbf16>, vector<128x128xbf16>, vector<2x128xf32> -> vector<2x128xf32>
      %47 = arith.addf %42, %46 : vector<2x128xf32>
      %c2_i32_32 = arith.constant 2 : i32
      %48 = arith.addi %arg5, %c2_i32_32 : i32
      %c0_33 = arith.constant 0 : index
      %49 = arith.index_cast %48 : i32 to index
      %c0_34 = arith.constant 0 : index
      %c0_35 = arith.constant 0 : index
      %50 = vector.load %arg1[%c0_33, %49, %c0_34, %c0_35] : memref<1x5x5x128xbf16, #tpu.memory_space<vmem>>, vector<1x1x5x128xbf16>
      %51 = vector.shape_cast %50 : vector<1x1x5x128xbf16> to vector<5x128xbf16>
      %52 = vector.extract_strided_slice %51 {offsets = [0, 0], sizes = [2, 128], strides = [1, 1]} : vector<5x128xbf16> to vector<2x128xbf16>
      %c8 = arith.constant 8 : index
      %c0_36 = arith.constant 0 : index
      %c0_37 = arith.constant 0 : index
      %53 = vector.load %arg2[%c8, %c0_36, %c0_37] : memref<16x128x128xbf16, #tpu.memory_space<vmem>>, vector<1x128x128xbf16>
      %54 = vector.shape_cast %53 : vector<1x128x128xbf16> to vector<128x128xbf16>
      %cst_38 = arith.constant dense<0.000000e+00> : vector<2x128xf32>
      %55 = tpu.matmul %52, %54, %cst_38 {dimension_numbers = #tpu.dot_dimension_numbers<[1], [0], [0], [1], [0, 0, 1, 1], [], []>} : vector<2x128xbf16>, vector<128x128xbf16>, vector<2x128xf32> -> vector<2x128xf32>
      %56 = arith.addf %47, %55 : vector<2x128xf32>
      %57 = vector.extract_strided_slice %51 {offsets = [1, 0], sizes = [2, 128], strides = [1, 1]} : vector<5x128xbf16> to vector<2x128xbf16>
      %c9 = arith.constant 9 : index
      %c0_39 = arith.constant 0 : index
      %c0_40 = arith.constant 0 : index
      %58 = vector.load %arg2[%c9, %c0_39, %c0_40] : memref<16x128x128xbf16, #tpu.memory_space<vmem>>, vector<1x128x128xbf16>
      %59 = vector.shape_cast %58 : vector<1x128x128xbf16> to vector<128x128xbf16>
      %cst_41 = arith.constant dense<0.000000e+00> : vector<2x128xf32>
      %60 = tpu.matmul %57, %59, %cst_41 {dimension_numbers = #tpu.dot_dimension_numbers<[1], [0], [0], [1], [0, 0, 1, 1], [], []>} : vector<2x128xbf16>, vector<128x128xbf16>, vector<2x128xf32> -> vector<2x128xf32>
      %61 = arith.addf %56, %60 : vector<2x128xf32>
      %62 = vector.extract_strided_slice %51 {offsets = [2, 0], sizes = [2, 128], strides = [1, 1]} : vector<5x128xbf16> to vector<2x128xbf16>
      %c10 = arith.constant 10 : index
      %c0_42 = arith.constant 0 : index
      %c0_43 = arith.constant 0 : index
      %63 = vector.load %arg2[%c10, %c0_42, %c0_43] : memref<16x128x128xbf16, #tpu.memory_space<vmem>>, vector<1x128x128xbf16>
      %64 = vector.shape_cast %63 : vector<1x128x128xbf16> to vector<128x128xbf16>
      %cst_44 = arith.constant dense<0.000000e+00> : vector<2x128xf32>
      %65 = tpu.matmul %62, %64, %cst_44 {dimension_numbers = #tpu.dot_dimension_numbers<[1], [0], [0], [1], [0, 0, 1, 1], [], []>} : vector<2x128xbf16>, vector<128x128xbf16>, vector<2x128xf32> -> vector<2x128xf32>
      %66 = arith.addf %61, %65 : vector<2x128xf32>
      %67 = vector.extract_strided_slice %51 {offsets = [3, 0], sizes = [2, 128], strides = [1, 1]} : vector<5x128xbf16> to vector<2x128xbf16>
      %c11 = arith.constant 11 : index
      %c0_45 = arith.constant 0 : index
      %c0_46 = arith.constant 0 : index
      %68 = vector.load %arg2[%c11, %c0_45, %c0_46] : memref<16x128x128xbf16, #tpu.memory_space<vmem>>, vector<1x128x128xbf16>
      %69 = vector.shape_cast %68 : vector<1x128x128xbf16> to vector<128x128xbf16>
      %cst_47 = arith.constant dense<0.000000e+00> : vector<2x128xf32>
      %70 = tpu.matmul %67, %69, %cst_47 {dimension_numbers = #tpu.dot_dimension_numbers<[1], [0], [0], [1], [0, 0, 1, 1], [], []>} : vector<2x128xbf16>, vector<128x128xbf16>, vector<2x128xf32> -> vector<2x128xf32>
      %71 = arith.addf %66, %70 : vector<2x128xf32>
      %c3_i32 = arith.constant 3 : i32
      %72 = arith.addi %arg5, %c3_i32 : i32
      %c0_48 = arith.constant 0 : index
      %73 = arith.index_cast %72 : i32 to index
      %c0_49 = arith.constant 0 : index
      %c0_50 = arith.constant 0 : index
      %74 = vector.load %arg1[%c0_48, %73, %c0_49, %c0_50] : memref<1x5x5x128xbf16, #tpu.memory_space<vmem>>, vector<1x1x5x128xbf16>
      %75 = vector.shape_cast %74 : vector<1x1x5x128xbf16> to vector<5x128xbf16>
      %76 = vector.extract_strided_slice %75 {offsets = [0, 0], sizes = [2, 128], strides = [1, 1]} : vector<5x128xbf16> to vector<2x128xbf16>
      %c12 = arith.constant 12 : index
      %c0_51 = arith.constant 0 : index
      %c0_52 = arith.constant 0 : index
      %77 = vector.load %arg2[%c12, %c0_51, %c0_52] : memref<16x128x128xbf16, #tpu.memory_space<vmem>>, vector<1x128x128xbf16>
      %78 = vector.shape_cast %77 : vector<1x128x128xbf16> to vector<128x128xbf16>
      %cst_53 = arith.constant dense<0.000000e+00> : vector<2x128xf32>
      %79 = tpu.matmul %76, %78, %cst_53 {dimension_numbers = #tpu.dot_dimension_numbers<[1], [0], [0], [1], [0, 0, 1, 1], [], []>} : vector<2x128xbf16>, vector<128x128xbf16>, vector<2x128xf32> -> vector<2x128xf32>
      %80 = arith.addf %71, %79 : vector<2x128xf32>
      %81 = vector.extract_strided_slice %75 {offsets = [1, 0], sizes = [2, 128], strides = [1, 1]} : vector<5x128xbf16> to vector<2x128xbf16>
      %c13 = arith.constant 13 : index
      %c0_54 = arith.constant 0 : index
      %c0_55 = arith.constant 0 : index
      %82 = vector.load %arg2[%c13, %c0_54, %c0_55] : memref<16x128x128xbf16, #tpu.memory_space<vmem>>, vector<1x128x128xbf16>
      %83 = vector.shape_cast %82 : vector<1x128x128xbf16> to vector<128x128xbf16>
      %cst_56 = arith.constant dense<0.000000e+00> : vector<2x128xf32>
      %84 = tpu.matmul %81, %83, %cst_56 {dimension_numbers = #tpu.dot_dimension_numbers<[1], [0], [0], [1], [0, 0, 1, 1], [], []>} : vector<2x128xbf16>, vector<128x128xbf16>, vector<2x128xf32> -> vector<2x128xf32>
      %85 = arith.addf %80, %84 : vector<2x128xf32>
      %86 = vector.extract_strided_slice %75 {offsets = [2, 0], sizes = [2, 128], strides = [1, 1]} : vector<5x128xbf16> to vector<2x128xbf16>
      %c14 = arith.constant 14 : index
      %c0_57 = arith.constant 0 : index
      %c0_58 = arith.constant 0 : index
      %87 = vector.load %arg2[%c14, %c0_57, %c0_58] : memref<16x128x128xbf16, #tpu.memory_space<vmem>>, vector<1x128x128xbf16>
      %88 = vector.shape_cast %87 : vector<1x128x128xbf16> to vector<128x128xbf16>
      %cst_59 = arith.constant dense<0.000000e+00> : vector<2x128xf32>
      %89 = tpu.matmul %86, %88, %cst_59 {dimension_numbers = #tpu.dot_dimension_numbers<[1], [0], [0], [1], [0, 0, 1, 1], [], []>} : vector<2x128xbf16>, vector<128x128xbf16>, vector<2x128xf32> -> vector<2x128xf32>
      %90 = arith.addf %85, %89 : vector<2x128xf32>
      %91 = vector.extract_strided_slice %75 {offsets = [3, 0], sizes = [2, 128], strides = [1, 1]} : vector<5x128xbf16> to vector<2x128xbf16>
      %c15 = arith.constant 15 : index
      %c0_60 = arith.constant 0 : index
      %c0_61 = arith.constant 0 : index
      %92 = vector.load %arg2[%c15, %c0_60, %c0_61] : memref<16x128x128xbf16, #tpu.memory_space<vmem>>, vector<1x128x128xbf16>
      %93 = vector.shape_cast %92 : vector<1x128x128xbf16> to vector<128x128xbf16>
      %cst_62 = arith.constant dense<0.000000e+00> : vector<2x128xf32>
      %94 = tpu.matmul %91, %93, %cst_62 {dimension_numbers = #tpu.dot_dimension_numbers<[1], [0], [0], [1], [0, 0, 1, 1], [], []>} : vector<2x128xbf16>, vector<128x128xbf16>, vector<2x128xf32> -> vector<2x128xf32>
      %95 = arith.addf %90, %94 : vector<2x128xf32>
      %c0_63 = arith.constant 0 : index
      %c0_64 = arith.constant 0 : index
      %96 = vector.load %arg3[%c0_63, %c0_64] : memref<1x128xf32, #tpu.memory_space<vmem>>, vector<1x128xf32>
      %97 = vector.broadcast %96 : vector<1x128xf32> to vector<2x128xf32>
      %98 = arith.addf %95, %97 : vector<2x128xf32>
      %99 = arith.negf %98 : vector<2x128xf32>
      %100 = math.exp %99 : vector<2x128xf32>
      %cst_65 = arith.constant 1.000000e+00 : f32
      %101 = vector.broadcast %cst_65 : f32 to vector<2x128xf32>
      %102 = arith.addf %101, %100 : vector<2x128xf32>
      %103 = arith.divf %101, %102 : vector<2x128xf32>
      %c0_66 = arith.constant 0 : index
      %104 = arith.index_cast %arg5 : i32 to index
      %c0_67 = arith.constant 0 : index
      %c0_68 = arith.constant 0 : index
      %105 = vector.load %arg4[%c0_66, %104, %c0_67, %c0_68] : memref<1x2x2x128xf32, #tpu.memory_space<vmem>>, vector<1x1x2x128xf32>
      %106 = vector.shape_cast %105 : vector<1x1x2x128xf32> to vector<2x128xf32>
      %107 = vector.shape_cast %103 : vector<2x128xf32> to vector<1x1x2x128xf32>
      tpu.vector_store %arg4[%c0_66, %104, %c0_67, %c0_68], %107 {strides = array<i32>} : memref<1x2x2x128xf32, #tpu.memory_space<vmem>>, vector<1x1x2x128xf32>,
    }
    %c2_i32_0 = arith.constant 2 : i32
    return
  }
  func.func @transform_0(%arg0: i32) -> (i32, i32, i32, i32) {
    %c0_i32 = arith.constant 0 : i32
    %c0_i32_0 = arith.constant 0 : i32
    %c0_i32_1 = arith.constant 0 : i32
    %c0_i32_2 = arith.constant 0 : i32
    return %arg0, %c0_i32, %c0_i32_0, %c0_i32_1 : i32, i32, i32, i32
  }
  func.func @transform_1(%arg0: i32) -> (i32, i32, i32) {
    %c0_i32 = arith.constant 0 : i32
    %c0_i32_0 = arith.constant 0 : i32
    %c0_i32_1 = arith.constant 0 : i32
    %c0_i32_2 = arith.constant 0 : i32
    return %c0_i32, %c0_i32_0, %c0_i32_1 : i32, i32, i32
  }
  func.func @transform_2(%arg0: i32) -> (i32, i32) {
    %c0_i32 = arith.constant 0 : i32
    %c0_i32_0 = arith.constant 0 : i32
    %c0_i32_1 = arith.constant 0 : i32
    return %c0_i32, %c0_i32_0 : i32, i32
  }
  func.func @transform_3(%arg0: i32) -> (i32, i32, i32, i32) {
    %c0_i32 = arith.constant 0 : i32
    %c0_i32_0 = arith.constant 0 : i32
    %c0_i32_1 = arith.constant 0 : i32
    %c0_i32_2 = arith.constant 0 : i32
    return %arg0, %c0_i32, %c0_i32_0, %c0_i32_1 : i32, i32, i32, i32
  }
}

</mosaic_0001>

<llo_original>
// kernel: discriminator_forward.5
$region0: #{discriminator_forward.5}
  #allocation0 [shape = 'u32[]', space=smem, size = 0x4, offset = 0x4, fixed_abs, tag = 'smem constant byte address 0x4 - core index']
  #allocation1 [shape = 'u32[72,128]{1,0:T(1,128)}', space=vmem, size = 0x9000, scoped, tag = 'internal scratch']
  %s0 = inlined_call_operand.vmem [shape: bf16[2,17,17,16], index: 0, kind: input, shape index: {}]
  %s1 = inlined_call_operand.vmem [shape: bf16[4,16,16], index: 1, kind: input, shape index: {}]
  %s2 = inlined_call_operand.vmem [shape: f32[1,16], index: 2, kind: input, shape index: {}]
  %s3 = inlined_call_operand.vmem [shape: bf16[2,16,16,16], index: 3, kind: output, shape index: {}]
  %s4 = sld [smem:[#allocation0]]
  $region52: #{discriminator_forward.5} parent=0
    _
  %s6 = ssub.s32 1, %s4
  %s7 = scalar_select 0, %s6, %s4
  loop: start=0, step=1, limit=4
  $region2: #{discriminator_forward.5} parent=0 // loop_pre_header
    _
  $region3: #{discriminator_forward.5} parent=0 // loop_header
    %s9 = sphi 0, %s13
    %p10 = scmp.ge.s32.totalorder %s9, 4
    %s19 = sphi 0, %s21
    %s22 = sphi 0, %s19
    %s23 = sphi 0, %s22
    %s39 = sphi 0, %s23
    %s43 = sphi 0, %s43
    %s45 = sphi 0, %s43
    %s46 = sphi 0, %s45
    %s60 = sphi 0, %s46
    %s64 = sphi 0, %s64
    %s66 = sphi 0, %s64
    %s67 = sphi 0, %s66
    %s81 = sphi 0, %s67
    %s87 = sphi 0, %s89
    %s90 = sphi 0, %s87
    %s91 = sphi 0, %s90
    %s107 = sphi 0, %s91
  $region4: #{discriminator_forward.5} parent=0 // loop_header_branch
    %12 = sbr.rel (%p10) target = $region8
  $region5: #{discriminator_forward.5} parent=0 // loop_body
    %s14 = ssub.s32 %s9, 1
    %s15 = ssub.s32 %s9, 2
    %s16 = sadd.s32 %s9, 1
    %s17 = ssub.s32 %s9, %s16
    %p18 = scmp.eq.s32.totalorder %s17, 0
    %s20 = sadd.s32 %s19, 1
    %s21 = scalar_select %p18, %s19, %s20
    %p24 = pneg %p18
    %p25 = scmp.eq.s32.totalorder %s9, 1
    %p26 = por %p24, %p25
    %p27 = scmp.ne.s32.totalorder %s19, %s22
    %p28 = scmp.eq.s32.totalorder %s9, 0
    %p29 = por %p27, %p28
    %p30 = scmp.ne.s32.totalorder %s19, %s22
    %p31 = scmp.eq.s32.totalorder %s14, 1
    %p32 = por %p30, %p31
    %p33 = scmp.ne.s32.totalorder %s22, %s23
    %p34 = scmp.eq.s32.totalorder %s14, 0
    %p35 = por %p33, %p34
    %p36 = scmp.ne.s32.totalorder %s22, %s23
    %p37 = scmp.eq.s32.totalorder %s15, 1
    %p38 = por %p36, %p37
    %p40 = scmp.ne.s32.totalorder %s23, %s39
    %p41 = scmp.eq.s32.totalorder %s15, 0
    %p42 = por %p40, %p41
    %s44 = sadd.s32 %s43, 1
    %p47 = scmp.eq.s32.totalorder %s9, 1
    %p48 = scmp.ne.s32.totalorder %s43, %s45
    %p49 = scmp.eq.s32.totalorder %s9, 0
    %p50 = por %p48, %p49
    %p51 = scmp.ne.s32.totalorder %s43, %s45
    %p52 = scmp.eq.s32.totalorder %s14, 1
    %p53 = por %p51, %p52
    %p54 = scmp.ne.s32.totalorder %s45, %s46
    %p55 = scmp.eq.s32.totalorder %s14, 0
    %p56 = por %p54, %p55
    %p57 = scmp.ne.s32.totalorder %s45, %s46
    %p58 = scmp.eq.s32.totalorder %s15, 1
    %p59 = por %p57, %p58
    %p61 = scmp.ne.s32.totalorder %s46, %s60
    %p62 = scmp.eq.s32.totalorder %s15, 0
    %p63 = por %p61, %p62
    %s65 = sadd.s32 %s64, 1
    %p68 = scmp.eq.s32.totalorder %s9, 1
    %p69 = scmp.ne.s32.totalorder %s64, %s66
    %p70 = scmp.eq.s32.totalorder %s9, 0
    %p71 = por %p69, %p70
    %p72 = scmp.ne.s32.totalorder %s64, %s66
    %p73 = scmp.eq.s32.totalorder %s14, 1
    %p74 = por %p72, %p73
    %p75 = scmp.ne.s32.totalorder %s66, %s67
    %p76 = scmp.eq.s32.totalorder %s14, 0
    %p77 = por %p75, %p76
    %p78 = scmp.ne.s32.totalorder %s66, %s67
    %p79 = scmp.eq.s32.totalorder %s15, 1
    %p80 = por %p78, %p79
    %p82 = scmp.ne.s32.totalorder %s67, %s81
    %p83 = scmp.eq.s32.totalorder %s15, 0
    %p84 = por %p82, %p83
    %s85 = ssub.s32 %s9, %s16
    %p86 = scmp.eq.s32.totalorder %s85, 0
    %s88 = sadd.s32 %s87, 1
    %s89 = scalar_select %p86, %s87, %s88
    %p92 = pneg %p86
    %p93 = scmp.eq.s32.totalorder %s9, 1
    %p94 = por %p92, %p93
    %p95 = scmp.ne.s32.totalorder %s87, %s90
    %p96 = scmp.eq.s32.totalorder %s9, 0
    %p97 = por %p95, %p96
    %p98 = scmp.ne.s32.totalorder %s87, %s90
    %p99 = scmp.eq.s32.totalorder %s14, 1
    %p100 = por %p98, %p99
    %p101 = scmp.ne.s32.totalorder %s90, %s91
    %p102 = scmp.eq.s32.totalorder %s14, 0
    %p103 = por %p101, %p102
    %p104 = scmp.ne.s32.totalorder %s90, %s91
    %p105 = scmp.eq.s32.totalorder %s15, 1
    %p106 = por %p104, %p105
    %p108 = scmp.ne.s32.totalorder %s91, %s107
    %p109 = scmp.eq.s32.totalorder %s15, 0
    %p110 = por %p108, %p109
    %p111 = scmp.le.s32.totalorder 1, %s9
    %p112 = scmp.lt.s32.totalorder %s9, 3
    %p113 = pnand %p111, %p112
    %p114 = pneg %p113
    // Predicated region
    $region9: #{discriminator_forward.5} parent=5 // pred_check
      _
    $region10: #{discriminator_forward.5} parent=5 // pred_check_branch
      %116 = sbr.rel (%p113) target = $region12
    $region11: #{discriminator_forward.5} parent=5 // pred_region
      %s117 = ssub.s32 %s9, 1
      // Predicated region
      $region13: #{discriminator_forward.5} parent=11 // pred_check
        %p118 = pneg %p56
      $region14: #{discriminator_forward.5} parent=11 // pred_check_branch
        %120 = sbr.rel (%p118) target = $region16
      $region15: #{discriminator_forward.5} parent=11 // pred_region
        _
      $region16: #{discriminator_forward.5} parent=11 // pred_fallthru
        _
      // Predicated region
      $region17: #{discriminator_forward.5} parent=11 // pred_check
        %p121 = pneg %p77
      $region18: #{discriminator_forward.5} parent=11 // pred_check_branch
        %123 = sbr.rel (%p121) target = $region20
      $region19: #{discriminator_forward.5} parent=11 // pred_region
        _
      $region20: #{discriminator_forward.5} parent=11 // pred_fallthru
        _
    $region12: #{discriminator_forward.5} parent=5 // pred_fallthru
      _
    %p124 = scmp.lt.s32.totalorder %s9, 2
    // Predicated region
    $region21: #{discriminator_forward.5} parent=5 // pred_check
      %p125 = pneg %p124
    $region22: #{discriminator_forward.5} parent=5 // pred_check_branch
      %127 = sbr.rel (%p125) target = $region24
    $region23: #{discriminator_forward.5} parent=5 // pred_region
      // Predicated region
      $region25: #{discriminator_forward.5} parent=23 // pred_check
        %p128 = pneg %p29
      $region26: #{discriminator_forward.5} parent=23 // pred_check_branch
        %130 = sbr.rel (%p128) target = $region28
      $region27: #{discriminator_forward.5} parent=23 // pred_region
        %p131 = scmp.lt.s32.totalorder %s9, 1
        %s132 = scalar_select %p131, %s9, 1
        %s133 = smul.addr %s132, 51
        %s134 = smul.addr %s133, 4
        %s135 = scalar_lea.vmem %s0, %s134
      $region28: #{discriminator_forward.5} parent=23 // pred_fallthru
        _
    $region24: #{discriminator_forward.5} parent=5 // pred_fallthru
      _
    %p136 = scmp.le.s32.totalorder 1, %s9
    %p137 = scmp.lt.s32.totalorder %s9, 3
    %p138 = pnand %p136, %p137
    %p139 = pneg %p138
    // Predicated region
    $region29: #{discriminator_forward.5} parent=5 // pred_check
      _
    $region30: #{discriminator_forward.5} parent=5 // pred_check_branch
      %141 = sbr.rel (%p138) target = $region32
    $region31: #{discriminator_forward.5} parent=5 // pred_region
      %s142 = ssub.s32 %s9, 1
      %p143 = scmp.lt.s32.totalorder %s14, 1
      %s144 = scalar_select %p143, %s14, 1
      %s145 = smul.addr %s144, 51
      %s146 = smul.addr %s145, 4
      %s147 = scalar_lea.vmem %s0, %s146
      %p148 = pneg %p35
      %p149 = pneg %p32
      %p150 = pneg %p56
      %p151 = pneg %p53
      %p152 = pneg %p77
      %p153 = pneg %p74
      %p154 = pneg %p103
      %p155 = pneg %p100
      %p156 = scmp.lt.s32.totalorder %s14, 1
      %s157 = scalar_select %p156, %s14, 1
      %s158 = smul.addr %s157, 32
      %s159 = smul.addr %s158, 4
      %s160 = scalar_lea.vmem %s3, %s159
      %p161 = scmp.lt.s32.totalorder %s14, 1
      %s162 = scalar_select %p161, %s14, 1
      %s163 = smul.addr %s162, 51
      %s164 = smul.addr %s163, 4
      %s165 = scalar_lea.vmem %s0, %s164
      %p166 = scmp.lt.s32.totalorder %s14, 1
      %s167 = scalar_select %p166, %s14, 1
      %s168 = smul.addr %s167, 32
      %s169 = smul.addr %s168, 4
      %s170 = scalar_lea.vmem %s3, %s169
      loop: start=0, step=1, limit=16
      $region33: #{discriminator_forward.5} parent=31 // loop_pre_header
        _
      $region34: #{discriminator_forward.5} parent=31 // loop_header
        %s173 = sphi 0, %s177
        %p174 = scmp.ge.s32.totalorder %s173, 16
      $region35: #{discriminator_forward.5} parent=31 // loop_header_branch
        %176 = sbr.rel (%p174) target = $region39
      $region36: #{discriminator_forward.5} parent=31 // loop_body
        %s178 = smul.u32 %s173, 3
        %s179 = smul.addr %s178, 4
        %s180 = scalar_lea.vmem %s165, %s179
        %v181 = vld [vmem:[%s180] sm:$0xf]
        %v182 = vld [vmem:[%s180 + $0x4] sm:$0xf]
        %v183 = vld [vmem:[%s180 + $0x8] sm:$0x1]
        %v184 = vld [vmem:[%s1] sm:$0xf]
        %v185 = vld [vmem:[%s1 + $0x4] sm:$0xf]
        %s186 = scalar_lea.vmem %s1, 8
        %v187 = vld [vmem:[%s186] sm:$0xf]
        %v188 = vld [vmem:[%s186 + $0x4] sm:$0xf]
        %v192 = vunpack.c.l.b16 %v181
        %v193 = vunpack.c.l.b16 %v182
        %v194 = vunpack.c.l.b16 %v183
        %v195 = vpack.c.b16 %v193, %v192
        %v196 = vpack.c.b16 %v194, %v194
        %vm197 = vsmask.f32 7424
        %v199 = vshrl.u32 %v195, 16
        %v201 = vshll.u32 %v195, 16
        %v203 = vrot.slane %v201, 1
        %v204 = vor.u32 %v199, %v203
        %v206 = vshll.u32 %v196, 16
        %v208 = vrot.slane %v206, 1
        %v209 = vsel %vm197, %v204, %v208
        %v212 = vunpack.c.l.b16 %v187
        %v213 = vunpack.c.l.b16 %v188
        %v214 = vpack.c.b16 %v213, %v212
        %vm216 = vcmask 130048
        %v218 = vsel %vm216, %v209, 0
        %220 = vmatpush.bf16.msra.mxu0 0
        %221 = vmatpush.bf16.msra.mxu0 0
        %222 = vmatpush.bf16.msra.mxu0 0
        %223 = vmatpush.bf16.msra.mxu0 0
        %224 = vmatpush.bf16.msra.mxu0 0
        %225 = vmatpush.bf16.msra.mxu0 0
        %226 = vmatpush.bf16.msra.mxu0 0
        %227 = vmatpush.bf16.msra.mxu0 %v214
        %228 = vmatmul.bf16.gmra.mxu0 %v218
        %v229 = vpop.f32.mrf.mxu0
        %v230 = vadd.f32 0.0, %v229
        %v231 = vpop.f32.mrf.mxu0
        %v232 = vadd.f32 0.0, %v231
        %233 = vdwg.mxu0
        %v236 = vunpack.c.l.b16 %v184
        %v237 = vunpack.c.l.b16 %v185
        %v238 = vpack.c.b16 %v237, %v236
        %v240 = vsel %vm216, %v195, 0
        %242 = vmatpush.bf16.msra.mxu0 0
        %243 = vmatpush.bf16.msra.mxu0 0
        %244 = vmatpush.bf16.msra.mxu0 0
        %245 = vmatpush.bf16.msra.mxu0 0
        %246 = vmatpush.bf16.msra.mxu0 0
        %247 = vmatpush.bf16.msra.mxu0 0
        %248 = vmatpush.bf16.msra.mxu0 0
        %249 = vmatpush.bf16.msra.mxu0 %v238
        %250 = vmatmul.bf16.gmra.mxu0 %v240
        %v251 = vpop.f32.mrf.mxu0
        %v252 = vadd.f32 %v230, %v251
        %v253 = vpop.f32.mrf.mxu0
        %v254 = vadd.f32 %v232, %v253
        %255 = vdwg.mxu0
        %s256 = sadd.s32 %s173, 1
        %s257 = smul.u32 %s256, 3
        %s258 = smul.addr %s257, 4
        %s259 = scalar_lea.vmem %s165, %s258
        %v260 = vld [vmem:[%s259] sm:$0xf]
        %v261 = vld [vmem:[%s259 + $0x4] sm:$0xf]
        %v262 = vld [vmem:[%s259 + $0x8] sm:$0x1]
        %s263 = scalar_lea.vmem %s1, 16
        %v264 = vld [vmem:[%s263] sm:$0xf]
        %v265 = vld [vmem:[%s263 + $0x4] sm:$0xf]
        %v268 = vunpack.c.l.b16 %v260
        %v269 = vunpack.c.l.b16 %v261
        %v270 = vpack.c.b16 %v269, %v268
        %v273 = vunpack.c.l.b16 %v264
        %v274 = vunpack.c.l.b16 %v265
        %v275 = vpack.c.b16 %v274, %v273
        %v278 = vsel %vm216, %v270, 0
        %280 = vmatpush.bf16.msra.mxu0 0
        %281 = vmatpush.bf16.msra.mxu0 0
        %282 = vmatpush.bf16.msra.mxu0 0
        %283 = vmatpush.bf16.msra.mxu0 0
        %284 = vmatpush.bf16.msra.mxu0 0
        %285 = vmatpush.bf16.msra.mxu0 0
        %286 = vmatpush.bf16.msra.mxu0 0
        %287 = vmatpush.bf16.msra.mxu0 %v275
        %288 = vmatmul.bf16.gmra.mxu0 %v278
        %v289 = vpop.f32.mrf.mxu0
        %v290 = vadd.f32 0.0, %v289
        %v291 = vpop.f32.mrf.mxu0
        %v292 = vadd.f32 0.0, %v291
        %293 = vdwg.mxu0
        %v294 = vadd.f32 %v252, %v290
        %v295 = vadd.f32 %v254, %v292
        %s296 = scalar_lea.vmem %s1, 24
        %v297 = vld [vmem:[%s296] sm:$0xf]
        %v298 = vld [vmem:[%s296 + $0x4] sm:$0xf]
        %v300 = vunpack.c.l.b16 %v262
        %v301 = vpack.c.b16 %v300, %v300
        %v302 = vshrl.u32 %v270, 16
        %v304 = vshll.u32 %v270, 16
        %v306 = vrot.slane %v304, 1
        %v307 = vor.u32 %v302, %v306
        %v309 = vshll.u32 %v301, 16
        %v311 = vrot.slane %v309, 1
        %v312 = vsel %vm197, %v307, %v311
        %v315 = vunpack.c.l.b16 %v297
        %v316 = vunpack.c.l.b16 %v298
        %v317 = vpack.c.b16 %v316, %v315
        %v320 = vsel %vm216, %v312, 0
        %322 = vmatpush.bf16.msra.mxu0 0
        %323 = vmatpush.bf16.msra.mxu0 0
        %324 = vmatpush.bf16.msra.mxu0 0
        %325 = vmatpush.bf16.msra.mxu0 0
        %326 = vmatpush.bf16.msra.mxu0 0
        %327 = vmatpush.bf16.msra.mxu0 0
        %328 = vmatpush.bf16.msra.mxu0 0
        %329 = vmatpush.bf16.msra.mxu0 %v317
        %330 = vmatmul.bf16.gmra.mxu0 %v320
        %v331 = vpop.f32.mrf.mxu0
        %v332 = vadd.f32 0.0, %v331
        %v333 = vpop.f32.mrf.mxu0
        %v334 = vadd.f32 0.0, %v333
        %335 = vdwg.mxu0
        %v336 = vadd.f32 %v294, %v332
        %v337 = vadd.f32 %v295, %v334
        %v338 = vld [vmem:[%s2] sm:$0x1]
        %v340 = vperm.slane %v338, 0
        %v342 = vadd.f32 %v336, %v340
        %v343 = vadd.f32 %v337, %v340
        %vm344 = vcmp.ge.f32.partialorder %v342, 0.0
        %vm345 = vcmp.ge.f32.partialorder %v343, 0.0
        %v346 = vmul.f32 %v342, 0.2
        %v347 = vmul.f32 %v343, 0.2
        %v348 = vsel %vm344, %v342, %v346
        %v349 = vsel %vm345, %v343, %v347
        %v350 = vpack.c.bf16 %v348, %v348
        %v351 = vpack.c.bf16 %v349, %v349
        %s352 = smul.u32 %s173, 2
        %s353 = smul.addr %s352, 4
        %s354 = scalar_lea.vmem %s170, %s353
        %vm355 = vcmask 125952
        %356 = vst.msk [vmem:[%s354] sm:$0xf] %vm355, %v350
        %357 = vst.msk [vmem:[%s354 + $0x4] sm:$0xf] %vm355, %v351
      $region37: #{discriminator_forward.5} parent=31 // loop_footer
        %s177 = sadd.s32 1, %s173
      $region38: #{discriminator_forward.5} parent=31 // loop_footer_branch
        %172 = sbr.rel target = $region34
      $region39: #{discriminator_forward.5} parent=31 // loop_exit
        _
      %p358 = scmp.lt.s32.totalorder %s14, 1
      %s359 = scalar_select %p358, %s14, 1
      %s360 = smul.addr %s359, 32
      %s361 = smul.addr %s360, 4
      %s362 = scalar_lea.vmem %s3, %s361
      // Predicated region
      $region40: #{discriminator_forward.5} parent=31 // pred_check
        %p363 = pneg %p100
      $region41: #{discriminator_forward.5} parent=31 // pred_check_branch
        %365 = sbr.rel (%p363) target = $region43
      $region42: #{discriminator_forward.5} parent=31 // pred_region
        _
      $region43: #{discriminator_forward.5} parent=31 // pred_fallthru
        _
    $region32: #{discriminator_forward.5} parent=5 // pred_fallthru
      _
    %p366 = scmp.le.s32.totalorder 2, %s9
    // Predicated region
    $region44: #{discriminator_forward.5} parent=5 // pred_check
      %p367 = pneg %p366
    $region45: #{discriminator_forward.5} parent=5 // pred_check_branch
      %369 = sbr.rel (%p367) target = $region47
    $region46: #{discriminator_forward.5} parent=5 // pred_region
      %s370 = ssub.s32 %s9, 2
      // Predicated region
      $region48: #{discriminator_forward.5} parent=46 // pred_check
        %p371 = pneg %p106
      $region49: #{discriminator_forward.5} parent=46 // pred_check_branch
        %373 = sbr.rel (%p371) target = $region51
      $region50: #{discriminator_forward.5} parent=46 // pred_region
        %p374 = scmp.lt.s32.totalorder %s15, 1
        %s375 = scalar_select %p374, %s15, 1
        %s376 = smul.addr %s375, 32
        %s377 = smul.addr %s376, 4
        %s378 = scalar_lea.vmem %s3, %s377
      $region51: #{discriminator_forward.5} parent=46 // pred_fallthru
        _
    $region47: #{discriminator_forward.5} parent=5 // pred_fallthru
      _
  $region6: #{discriminator_forward.5} parent=0 // loop_footer
    %s13 = sadd.s32 1, %s9
  $region7: #{discriminator_forward.5} parent=0 // loop_footer_branch
    %8 = sbr.rel target = $region3
  $region8: #{discriminator_forward.5} parent=0 // loop_exit
    _

// kernel: discriminator_forward.6
$region0: #{discriminator_forward.6}
  #allocation0 [shape = 'u32[]', space=smem, size = 0x4, offset = 0x4, fixed_abs, tag = 'smem constant byte address 0x4 - core index']
  #allocation1 [shape = 'u32[72,128]{1,0:T(1,128)}', space=vmem, size = 0x9000, scoped, tag = 'internal scratch']
  #allocation2 [shape = 'f32[8,8,32]{2,1,0:T(8,128)}', space=vmem, size = 0x8000, scoped, tag = 'scratch operand']
  %s0 = inlined_call_operand.vmem [shape: bf16[2,9,9,64], index: 0, kind: input, shape index: {}]
  %s1 = inlined_call_operand.vmem [shape: bf16[4,64,32], index: 1, kind: input, shape index: {}]
  %s2 = inlined_call_operand.vmem [shape: f32[1,32], index: 2, kind: input, shape index: {}]
  %s3 = inlined_call_operand.vmem [shape: bf16[2,8,8,32], index: 3, kind: output, shape index: {}]
  %s4 = sld [smem:[#allocation0]]
  $region66: #{discriminator_forward.6} parent=0
    _
  %s6 = ssub.s32 1, %s4
  %s7 = scalar_select 0, %s6, %s4
  loop: start=0, step=1, limit=4
  $region2: #{discriminator_forward.6} parent=0 // loop_pre_header
    _
  $region3: #{discriminator_forward.6} parent=0 // loop_header
    %s9 = sphi 0, %s13
    %p10 = scmp.ge.s32.totalorder %s9, 4
    %s19 = sphi 0, %s21
    %s22 = sphi 0, %s19
    %s23 = sphi 0, %s22
    %s39 = sphi 0, %s23
    %s43 = sphi 0, %s43
    %s45 = sphi 0, %s43
    %s46 = sphi 0, %s45
    %s60 = sphi 0, %s46
    %s64 = sphi 0, %s64
    %s66 = sphi 0, %s64
    %s67 = sphi 0, %s66
    %s81 = sphi 0, %s67
    %s87 = sphi 0, %s89
    %s90 = sphi 0, %s87
    %s91 = sphi 0, %s90
    %s107 = sphi 0, %s91
  $region4: #{discriminator_forward.6} parent=0 // loop_header_branch
    %12 = sbr.rel (%p10) target = $region8
  $region5: #{discriminator_forward.6} parent=0 // loop_body
    %s14 = ssub.s32 %s9, 1
    %s15 = ssub.s32 %s9, 2
    %s16 = sadd.s32 %s9, 1
    %s17 = ssub.s32 %s9, %s16
    %p18 = scmp.eq.s32.totalorder %s17, 0
    %s20 = sadd.s32 %s19, 1
    %s21 = scalar_select %p18, %s19, %s20
    %p24 = pneg %p18
    %p25 = scmp.eq.s32.totalorder %s9, 1
    %p26 = por %p24, %p25
    %p27 = scmp.ne.s32.totalorder %s19, %s22
    %p28 = scmp.eq.s32.totalorder %s9, 0
    %p29 = por %p27, %p28
    %p30 = scmp.ne.s32.totalorder %s19, %s22
    %p31 = scmp.eq.s32.totalorder %s14, 1
    %p32 = por %p30, %p31
    %p33 = scmp.ne.s32.totalorder %s22, %s23
    %p34 = scmp.eq.s32.totalorder %s14, 0
    %p35 = por %p33, %p34
    %p36 = scmp.ne.s32.totalorder %s22, %s23
    %p37 = scmp.eq.s32.totalorder %s15, 1
    %p38 = por %p36, %p37
    %p40 = scmp.ne.s32.totalorder %s23, %s39
    %p41 = scmp.eq.s32.totalorder %s15, 0
    %p42 = por %p40, %p41
    %s44 = sadd.s32 %s43, 1
    %p47 = scmp.eq.s32.totalorder %s9, 1
    %p48 = scmp.ne.s32.totalorder %s43, %s45
    %p49 = scmp.eq.s32.totalorder %s9, 0
    %p50 = por %p48, %p49
    %p51 = scmp.ne.s32.totalorder %s43, %s45
    %p52 = scmp.eq.s32.totalorder %s14, 1
    %p53 = por %p51, %p52
    %p54 = scmp.ne.s32.totalorder %s45, %s46
    %p55 = scmp.eq.s32.totalorder %s14, 0
    %p56 = por %p54, %p55
    %p57 = scmp.ne.s32.totalorder %s45, %s46
    %p58 = scmp.eq.s32.totalorder %s15, 1
    %p59 = por %p57, %p58
    %p61 = scmp.ne.s32.totalorder %s46, %s60
    %p62 = scmp.eq.s32.totalorder %s15, 0
    %p63 = por %p61, %p62
    %s65 = sadd.s32 %s64, 1
    %p68 = scmp.eq.s32.totalorder %s9, 1
    %p69 = scmp.ne.s32.totalorder %s64, %s66
    %p70 = scmp.eq.s32.totalorder %s9, 0
    %p71 = por %p69, %p70
    %p72 = scmp.ne.s32.totalorder %s64, %s66
    %p73 = scmp.eq.s32.totalorder %s14, 1
    %p74 = por %p72, %p73
    %p75 = scmp.ne.s32.totalorder %s66, %s67
    %p76 = scmp.eq.s32.totalorder %s14, 0
    %p77 = por %p75, %p76
    %p78 = scmp.ne.s32.totalorder %s66, %s67
    %p79 = scmp.eq.s32.totalorder %s15, 1
    %p80 = por %p78, %p79
    %p82 = scmp.ne.s32.totalorder %s67, %s81
    %p83 = scmp.eq.s32.totalorder %s15, 0
    %p84 = por %p82, %p83
    %s85 = ssub.s32 %s9, %s16
    %p86 = scmp.eq.s32.totalorder %s85, 0
    %s88 = sadd.s32 %s87, 1
    %s89 = scalar_select %p86, %s87, %s88
    %p92 = pneg %p86
    %p93 = scmp.eq.s32.totalorder %s9, 1
    %p94 = por %p92, %p93
    %p95 = scmp.ne.s32.totalorder %s87, %s90
    %p96 = scmp.eq.s32.totalorder %s9, 0
    %p97 = por %p95, %p96
    %p98 = scmp.ne.s32.totalorder %s87, %s90
    %p99 = scmp.eq.s32.totalorder %s14, 1
    %p100 = por %p98, %p99
    %p101 = scmp.ne.s32.totalorder %s90, %s91
    %p102 = scmp.eq.s32.totalorder %s14, 0
    %p103 = por %p101, %p102
    %p104 = scmp.ne.s32.totalorder %s90, %s91
    %p105 = scmp.eq.s32.totalorder %s15, 1
    %p106 = por %p104, %p105
    %p108 = scmp.ne.s32.totalorder %s91, %s107
    %p109 = scmp.eq.s32.totalorder %s15, 0
    %p110 = por %p108, %p109
    %p111 = scmp.le.s32.totalorder 1, %s9
    %p112 = scmp.lt.s32.totalorder %s9, 3
    %p113 = pnand %p111, %p112
    %p114 = pneg %p113
    // Predicated region
    $region9: #{discriminator_forward.6} parent=5 // pred_check
      _
    $region10: #{discriminator_forward.6} parent=5 // pred_check_branch
      %116 = sbr.rel (%p113) target = $region12
    $region11: #{discriminator_forward.6} parent=5 // pred_region
      %s117 = ssub.s32 %s9, 1
      // Predicated region
      $region13: #{discriminator_forward.6} parent=11 // pred_check
        %p118 = pneg %p56
      $region14: #{discriminator_forward.6} parent=11 // pred_check_branch
        %120 = sbr.rel (%p118) target = $region16
      $region15: #{discriminator_forward.6} parent=11 // pred_region
        _
      $region16: #{discriminator_forward.6} parent=11 // pred_fallthru
        _
      // Predicated region
      $region17: #{discriminator_forward.6} parent=11 // pred_check
        %p121 = pneg %p77
      $region18: #{discriminator_forward.6} parent=11 // pred_check_branch
        %123 = sbr.rel (%p121) target = $region20
      $region19: #{discriminator_forward.6} parent=11 // pred_region
        _
      $region20: #{discriminator_forward.6} parent=11 // pred_fallthru
        _
    $region12: #{discriminator_forward.6} parent=5 // pred_fallthru
      _
    %p124 = scmp.lt.s32.totalorder %s9, 2
    // Predicated region
    $region21: #{discriminator_forward.6} parent=5 // pred_check
      %p125 = pneg %p124
    $region22: #{discriminator_forward.6} parent=5 // pred_check_branch
      %127 = sbr.rel (%p125) target = $region24
    $region23: #{discriminator_forward.6} parent=5 // pred_region
      // Predicated region
      $region25: #{discriminator_forward.6} parent=23 // pred_check
        %p128 = pneg %p29
      $region26: #{discriminator_forward.6} parent=23 // pred_check_branch
        %130 = sbr.rel (%p128) target = $region28
      $region27: #{discriminator_forward.6} parent=23 // pred_region
        %p131 = scmp.lt.s32.totalorder %s9, 1
        %s132 = scalar_select %p131, %s9, 1
        %s133 = smul.addr %s132, 18
        %s134 = smul.addr %s133, 4
        %s135 = scalar_lea.vmem %s0, %s134
      $region28: #{discriminator_forward.6} parent=23 // pred_fallthru
        _
    $region24: #{discriminator_forward.6} parent=5 // pred_fallthru
      _
    %p136 = scmp.le.s32.totalorder 1, %s9
    %p137 = scmp.lt.s32.totalorder %s9, 3
    %p138 = pnand %p136, %p137
    %p139 = pneg %p138
    // Predicated region
    $region29: #{discriminator_forward.6} parent=5 // pred_check
      _
    $region30: #{discriminator_forward.6} parent=5 // pred_check_branch
      %141 = sbr.rel (%p138) target = $region32
    $region31: #{discriminator_forward.6} parent=5 // pred_region
      %s142 = ssub.s32 %s9, 1
      %p143 = scmp.lt.s32.totalorder %s14, 1
      %s144 = scalar_select %p143, %s14, 1
      %s145 = smul.addr %s144, 18
      %s146 = smul.addr %s145, 4
      %s147 = scalar_lea.vmem %s0, %s146
      %p148 = pneg %p35
      %p149 = pneg %p32
      %p150 = pneg %p56
      %p151 = pneg %p53
      %p152 = pneg %p77
      %p153 = pneg %p74
      %p154 = pneg %p103
      %p155 = pneg %p100
      %p156 = scmp.lt.s32.totalorder %s14, 1
      %s157 = scalar_select %p156, %s14, 1
      %s158 = smul.addr %s157, 8
      %s159 = smul.addr %s158, 4
      %s160 = scalar_lea.vmem %s3, %s159
      %p161 = scmp.lt.s32.totalorder %s14, 1
      %s162 = scalar_select %p161, %s14, 1
      %s163 = smul.addr %s162, 18
      %s164 = smul.addr %s163, 4
      %s165 = scalar_lea.vmem %s0, %s164
      %p166 = scmp.lt.s32.totalorder %s14, 1
      %s167 = scalar_select %p166, %s14, 1
      %s168 = smul.addr %s167, 8
      %s169 = smul.addr %s168, 4
      %s170 = scalar_lea.vmem %s3, %s169
      loop: start=0, step=1, limit=8
      $region33: #{discriminator_forward.6} parent=31 // loop_pre_header
        _
      $region34: #{discriminator_forward.6} parent=31 // loop_header
        %s173 = sphi 0, %s177
        %p174 = scmp.ge.s32.totalorder %s173, 8
        %v178 = vphi 0.0, %v428
      $region35: #{discriminator_forward.6} parent=31 // loop_header_branch
        %176 = sbr.rel (%p174) target = $region39
      $region36: #{discriminator_forward.6} parent=31 // loop_body
        %s179 = smul.u32 %s173, 2
        %s180 = smul.addr %s179, 4
        %s181 = scalar_lea.vmem %s165, %s180
        %v182 = vld [vmem:[%s181] sm:$0xf]
        %v183 = vld [vmem:[%s181 + $0x4] sm:$0x1]
        %v184 = vld [vmem:[%s1] sm:$0xf]
        %v185 = vld [vmem:[%s1 + $0x4] sm:$0xf]
        %v186 = vld [vmem:[%s1 + $0x8] sm:$0xf]
        %v187 = vld [vmem:[%s1 + $0xc] sm:$0xf]
        %v188 = vld [vmem:[%s1 + $0x10] sm:$0xf]
        %v189 = vld [vmem:[%s1 + $0x14] sm:$0xf]
        %v190 = vld [vmem:[%s1 + $0x18] sm:$0xf]
        %v191 = vld [vmem:[%s1 + $0x1c] sm:$0xf]
        %s192 = scalar_lea.vmem %s1, 32
        %v193 = vld [vmem:[%s192] sm:$0xf]
        %v194 = vld [vmem:[%s192 + $0x4] sm:$0xf]
        %v195 = vld [vmem:[%s192 + $0x8] sm:$0xf]
        %v196 = vld [vmem:[%s192 + $0xc] sm:$0xf]
        %v197 = vld [vmem:[%s192 + $0x10] sm:$0xf]
        %v198 = vld [vmem:[%s192 + $0x14] sm:$0xf]
        %v199 = vld [vmem:[%s192 + $0x18] sm:$0xf]
        %v200 = vld [vmem:[%s192 + $0x1c] sm:$0xf]
        %v203 = vunpack.c.l.b16 %v182
        %v204 = vunpack.c.l.b16 %v183
        %v205 = vpack.c.b16 %v204, %v203
        %v207 = vshrl.u32 %v205, 16
        %v209 = vshll.u32 %v205, 16
        %v211 = vrot.slane %v209, 1
        %v212 = vor.u32 %v207, %v211
        %v221 = vunpack.c.l.b16 %v193
        %v222 = vunpack.c.l.b16 %v194
        %v223 = vunpack.c.l.b16 %v195
        %v224 = vunpack.c.l.b16 %v196
        %v225 = vunpack.c.l.b16 %v197
        %v226 = vunpack.c.l.b16 %v198
        %v227 = vunpack.c.l.b16 %v199
        %v228 = vunpack.c.l.b16 %v200
        %v229 = vpack.c.b16 %v222, %v221
        %v230 = vpack.c.b16 %v224, %v223
        %v231 = vpack.c.b16 %v226, %v225
        %v232 = vpack.c.b16 %v228, %v227
        %vm237 = vcmask 523264
        %v239 = vsel %vm237, %v212, 0
        %241 = vmatpush.bf16.msra.mxu0 0
        %242 = vmatpush.bf16.msra.mxu0 0
        %243 = vmatpush.bf16.msra.mxu0 0
        %244 = vmatpush.bf16.msra.mxu0 0
        %245 = vmatpush.bf16.msra.mxu0 %v232
        %246 = vmatpush.bf16.msra.mxu0 %v231
        %247 = vmatpush.bf16.msra.mxu0 %v230
        %248 = vmatpush.bf16.msra.mxu0 %v229
        %249 = vmatmul.bf16.gmra.mxu0 %v239
        %v250 = vpop.f32.mrf.mxu0
        %v251 = vadd.f32 0.0, %v250
        %v252 = vpop.f32.mrf.mxu0
        %253 = vdwg.mxu0
        %v262 = vunpack.c.l.b16 %v184
        %v263 = vunpack.c.l.b16 %v185
        %v264 = vunpack.c.l.b16 %v186
        %v265 = vunpack.c.l.b16 %v187
        %v266 = vunpack.c.l.b16 %v188
        %v267 = vunpack.c.l.b16 %v189
        %v268 = vunpack.c.l.b16 %v190
        %v269 = vunpack.c.l.b16 %v191
        %v270 = vpack.c.b16 %v263, %v262
        %v271 = vpack.c.b16 %v265, %v264
        %v272 = vpack.c.b16 %v267, %v266
        %v273 = vpack.c.b16 %v269, %v268
        %v279 = vsel %vm237, %v182, 0
        %281 = vmatpush.bf16.msra.mxu0 0
        %282 = vmatpush.bf16.msra.mxu0 0
        %283 = vmatpush.bf16.msra.mxu0 0
        %284 = vmatpush.bf16.msra.mxu0 0
        %285 = vmatpush.bf16.msra.mxu0 %v273
        %286 = vmatpush.bf16.msra.mxu0 %v272
        %287 = vmatpush.bf16.msra.mxu0 %v271
        %288 = vmatpush.bf16.msra.mxu0 %v270
        %289 = vmatmul.bf16.gmra.mxu0 %v279
        %v290 = vpop.f32.mrf.mxu0
        %v291 = vadd.f32 %v251, %v290
        %v292 = vpop.f32.mrf.mxu0
        %293 = vdwg.mxu0
        %s294 = sadd.s32 %s173, 1
        %s295 = smul.u32 %s294, 2
        %s296 = smul.addr %s295, 4
        %s297 = scalar_lea.vmem %s165, %s296
        %v298 = vld [vmem:[%s297] sm:$0xf]
        %v299 = vld [vmem:[%s297 + $0x4] sm:$0x1]
        %s300 = scalar_lea.vmem %s1, 64
        %v301 = vld [vmem:[%s300] sm:$0xf]
        %v302 = vld [vmem:[%s300 + $0x4] sm:$0xf]
        %v303 = vld [vmem:[%s300 + $0x8] sm:$0xf]
        %v304 = vld [vmem:[%s300 + $0xc] sm:$0xf]
        %v305 = vld [vmem:[%s300 + $0x10] sm:$0xf]
        %v306 = vld [vmem:[%s300 + $0x14] sm:$0xf]
        %v307 = vld [vmem:[%s300 + $0x18] sm:$0xf]
        %v308 = vld [vmem:[%s300 + $0x1c] sm:$0xf]
        %v317 = vunpack.c.l.b16 %v301
        %v318 = vunpack.c.l.b16 %v302
        %v319 = vunpack.c.l.b16 %v303
        %v320 = vunpack.c.l.b16 %v304
        %v321 = vunpack.c.l.b16 %v305
        %v322 = vunpack.c.l.b16 %v306
        %v323 = vunpack.c.l.b16 %v307
        %v324 = vunpack.c.l.b16 %v308
        %v325 = vpack.c.b16 %v318, %v317
        %v326 = vpack.c.b16 %v320, %v319
        %v327 = vpack.c.b16 %v322, %v321
        %v328 = vpack.c.b16 %v324, %v323
        %v334 = vsel %vm237, %v298, 0
        %336 = vmatpush.bf16.msra.mxu0 0
        %337 = vmatpush.bf16.msra.mxu0 0
        %338 = vmatpush.bf16.msra.mxu0 0
        %339 = vmatpush.bf16.msra.mxu0 0
        %340 = vmatpush.bf16.msra.mxu0 %v328
        %341 = vmatpush.bf16.msra.mxu0 %v327
        %342 = vmatpush.bf16.msra.mxu0 %v326
        %343 = vmatpush.bf16.msra.mxu0 %v325
        %344 = vmatmul.bf16.gmra.mxu0 %v334
        %v345 = vpop.f32.mrf.mxu0
        %v346 = vadd.f32 0.0, %v345
        %v347 = vpop.f32.mrf.mxu0
        %348 = vdwg.mxu0
        %v349 = vadd.f32 %v291, %v346
        %s350 = scalar_lea.vmem %s1, 96
        %v351 = vld [vmem:[%s350] sm:$0xf]
        %v352 = vld [vmem:[%s350 + $0x4] sm:$0xf]
        %v353 = vld [vmem:[%s350 + $0x8] sm:$0xf]
        %v354 = vld [vmem:[%s350 + $0xc] sm:$0xf]
        %v355 = vld [vmem:[%s350 + $0x10] sm:$0xf]
        %v356 = vld [vmem:[%s350 + $0x14] sm:$0xf]
        %v357 = vld [vmem:[%s350 + $0x18] sm:$0xf]
        %v358 = vld [vmem:[%s350 + $0x1c] sm:$0xf]
        %v361 = vunpack.c.l.b16 %v298
        %v362 = vunpack.c.l.b16 %v299
        %v363 = vpack.c.b16 %v362, %v361
        %v365 = vshrl.u32 %v363, 16
        %v367 = vshll.u32 %v363, 16
        %v369 = vrot.slane %v367, 1
        %v370 = vor.u32 %v365, %v369
        %v379 = vunpack.c.l.b16 %v351
        %v380 = vunpack.c.l.b16 %v352
        %v381 = vunpack.c.l.b16 %v353
        %v382 = vunpack.c.l.b16 %v354
        %v383 = vunpack.c.l.b16 %v355
        %v384 = vunpack.c.l.b16 %v356
        %v385 = vunpack.c.l.b16 %v357
        %v386 = vunpack.c.l.b16 %v358
        %v387 = vpack.c.b16 %v380, %v379
        %v388 = vpack.c.b16 %v382, %v381
        %v389 = vpack.c.b16 %v384, %v383
        %v390 = vpack.c.b16 %v386, %v385
        %v396 = vsel %vm237, %v370, 0
        %398 = vmatpush.bf16.msra.mxu0 0
        %399 = vmatpush.bf16.msra.mxu0 0
        %400 = vmatpush.bf16.msra.mxu0 0
        %401 = vmatpush.bf16.msra.mxu0 0
        %402 = vmatpush.bf16.msra.mxu0 %v390
        %403 = vmatpush.bf16.msra.mxu0 %v389
        %404 = vmatpush.bf16.msra.mxu0 %v388
        %405 = vmatpush.bf16.msra.mxu0 %v387
        %406 = vmatmul.bf16.gmra.mxu0 %v396
        %v407 = vpop.f32.mrf.mxu0
        %v408 = vadd.f32 0.0, %v407
        %v409 = vpop.f32.mrf.mxu0
        %410 = vdwg.mxu0
        %v411 = vadd.f32 %v349, %v408
        %v412 = vld [vmem:[%s2] sm:$0x1]
        %v414 = vperm.slane %v412, 0
        %v416 = vadd.f32 %v411, %v414
        %s417 = smul.u32 %s173, 8
        %s418 = scalar_lea.vmem [#allocation2], %s417
        %vm419 = vcmask 261120
        %420 = vst.msk [vmem:[%s418] sm:$0xff] %vm419, %v416
        %v421 = vsel %vm419, %v416, 0.0
        %v422 = vrot.slane %v421, 4
        %v423 = vadd.f32 %v421, %v422
        %v424 = vrot.slane %v423, 2
        %v425 = vadd.f32 %v423, %v424
        %v426 = vrot.slane %v425, 1
        %v427 = vadd.f32 %v425, %v426
        %v428 = vadd.f32 %v178, %v427
      $region37: #{discriminator_forward.6} parent=31 // loop_footer
        %s177 = sadd.s32 1, %s173
      $region38: #{discriminator_forward.6} parent=31 // loop_footer_branch
        %172 = sbr.rel target = $region34
      $region39: #{discriminator_forward.6} parent=31 // loop_exit
        _
      %v429 = vmul.f32 %v178, 0.015625
      loop: start=0, step=1, limit=8
      $region40: #{discriminator_forward.6} parent=31 // loop_pre_header
        _
      $region41: #{discriminator_forward.6} parent=31 // loop_header
        %s431 = sphi 0, %s435
        %p432 = scmp.ge.s32.totalorder %s431, 8
        %v436 = vphi 0.0, %v450
      $region42: #{discriminator_forward.6} parent=31 // loop_header_branch
        %434 = sbr.rel (%p432) target = $region46
      $region43: #{discriminator_forward.6} parent=31 // loop_body
        %s437 = smul.u32 %s431, 8
        %s438 = scalar_lea.vmem [#allocation2], %s437
        %v439 = vld [vmem:[%s438] sm:$0xff]
        %v440 = vsub.f32 %v439, %v429
        %v441 = vmul.f32 %v440, %v440
        %vm442 = vcmask 261120
        %v443 = vsel %vm442, %v441, 0.0
        %v444 = vrot.slane %v443, 4
        %v445 = vadd.f32 %v443, %v444
        %v446 = vrot.slane %v445, 2
        %v447 = vadd.f32 %v445, %v446
        %v448 = vrot.slane %v447, 1
        %v449 = vadd.f32 %v447, %v448
        %v450 = vadd.f32 %v436, %v449
      $region44: #{discriminator_forward.6} parent=31 // loop_footer
        %s435 = sadd.s32 1, %s431
      $region45: #{discriminator_forward.6} parent=31 // loop_footer_branch
        %430 = sbr.rel target = $region41
      $region46: #{discriminator_forward.6} parent=31 // loop_exit
        _
      %v451 = vmul.f32 %v436, 0.015625
      %v452 = vadd.f32 %v451, 1e-05
      %v453 = vrsqrt.pop %v452
      %v454 = vmul.f32 %v453, %v452
      %v455 = vmul.f32 %v454, %v453
      %v456 = vmul.f32 0.5, %v455
      %v457 = vsub.f32 1.5, %v456
      %v458 = vmul.f32 %v453, %v457
      %vm459 = vweird.f32 %v452
      %vm460 = vweird.f32 %v453
      %vm461 = vmor %vm459, %vm460
      %v462 = vsel %vm461, %v453, %v458
      loop: start=0, step=1, limit=8
      $region47: #{discriminator_forward.6} parent=31 // loop_pre_header
        _
      $region48: #{discriminator_forward.6} parent=31 // loop_header
        %s464 = sphi 0, %s468
        %p465 = scmp.ge.s32.totalorder %s464, 8
      $region49: #{discriminator_forward.6} parent=31 // loop_header_branch
        %467 = sbr.rel (%p465) target = $region53
      $region50: #{discriminator_forward.6} parent=31 // loop_body
        %s469 = smul.u32 %s464, 8
        %s470 = scalar_lea.vmem [#allocation2], %s469
        %v471 = vld [vmem:[%s470] sm:$0xff]
        %v472 = vsub.f32 %v471, %v429
        %v473 = vmul.f32 %v472, %v462
        %vm474 = vcmp.ge.f32.partialorder %v473, 0.0
        %v475 = vmul.f32 %v473, 0.2
        %v476 = vsel %vm474, %v473, %v475
        %v477 = vpack.c.bf16 %v476, %v476
        %s478 = smul.addr %s464, 4
        %s479 = scalar_lea.vmem %s170, %s478
        %vm480 = vcmask 257024
        %481 = vst.msk [vmem:[%s479] sm:$0xf] %vm480, %v477
      $region51: #{discriminator_forward.6} parent=31 // loop_footer
        %s468 = sadd.s32 1, %s464
      $region52: #{discriminator_forward.6} parent=31 // loop_footer_branch
        %463 = sbr.rel target = $region48
      $region53: #{discriminator_forward.6} parent=31 // loop_exit
        _
      %p482 = scmp.lt.s32.totalorder %s14, 1
      %s483 = scalar_select %p482, %s14, 1
      %s484 = smul.addr %s483, 8
      %s485 = smul.addr %s484, 4
      %s486 = scalar_lea.vmem %s3, %s485
      // Predicated region
      $region54: #{discriminator_forward.6} parent=31 // pred_check
        %p487 = pneg %p100
      $region55: #{discriminator_forward.6} parent=31 // pred_check_branch
        %489 = sbr.rel (%p487) target = $region57
      $region56: #{discriminator_forward.6} parent=31 // pred_region
        _
      $region57: #{discriminator_forward.6} parent=31 // pred_fallthru
        _
    $region32: #{discriminator_forward.6} parent=5 // pred_fallthru
      _
    %p490 = scmp.le.s32.totalorder 2, %s9
    // Predicated region
    $region58: #{discriminator_forward.6} parent=5 // pred_check
      %p491 = pneg %p490
    $region59: #{discriminator_forward.6} parent=5 // pred_check_branch
      %493 = sbr.rel (%p491) target = $region61
    $region60: #{discriminator_forward.6} parent=5 // pred_region
      %s494 = ssub.s32 %s9, 2
      // Predicated region
      $region62: #{discriminator_forward.6} parent=60 // pred_check
        %p495 = pneg %p106
      $region63: #{discriminator_forward.6} parent=60 // pred_check_branch
        %497 = sbr.rel (%p495) target = $region65
      $region64: #{discriminator_forward.6} parent=60 // pred_region
        %p498 = scmp.lt.s32.totalorder %s15, 1
        %s499 = scalar_select %p498, %s15, 1
        %s500 = smul.addr %s499, 8
        %s501 = smul.addr %s500, 4
        %s502 = scalar_lea.vmem %s3, %s501
      $region65: #{discriminator_forward.6} parent=60 // pred_fallthru
        _
    $region61: #{discriminator_forward.6} parent=5 // pred_fallthru
      _
  $region6: #{discriminator_forward.6} parent=0 // loop_footer
    %s13 = sadd.s32 1, %s9
  $region7: #{discriminator_forward.6} parent=0 // loop_footer_branch
    %8 = sbr.rel target = $region3
  $region8: #{discriminator_forward.6} parent=0 // loop_exit
    _

// kernel: discriminator_forward.7
$region0: #{discriminator_forward.7}
  #allocation0 [shape = 'u32[]', space=smem, size = 0x4, offset = 0x4, fixed_abs, tag = 'smem constant byte address 0x4 - core index']
  #allocation1 [shape = 'u32[72,128]{1,0:T(1,128)}', space=vmem, size = 0x9000, scoped, tag = 'internal scratch']
  #allocation2 [shape = 'f32[4,4,64]{2,1,0:T(4,128)}', space=vmem, size = 0x2000, scoped, tag = 'scratch operand']
  %s0 = inlined_call_operand.vmem [shape: bf16[2,5,5,128], index: 0, kind: input, shape index: {}]
  %s1 = inlined_call_operand.vmem [shape: bf16[4,128,64], index: 1, kind: input, shape index: {}]
  %s2 = inlined_call_operand.vmem [shape: f32[1,64], index: 2, kind: input, shape index: {}]
  %s3 = inlined_call_operand.vmem [shape: bf16[2,4,4,64], index: 3, kind: output, shape index: {}]
  %s4 = sld [smem:[#allocation0]]
  $region66: #{discriminator_forward.7} parent=0
    _
  %s6 = ssub.s32 1, %s4
  %s7 = scalar_select 0, %s6, %s4
  loop: start=0, step=1, limit=4
  $region2: #{discriminator_forward.7} parent=0 // loop_pre_header
    _
  $region3: #{discriminator_forward.7} parent=0 // loop_header
    %s9 = sphi 0, %s13
    %p10 = scmp.ge.s32.totalorder %s9, 4
    %s19 = sphi 0, %s21
    %s22 = sphi 0, %s19
    %s23 = sphi 0, %s22
    %s39 = sphi 0, %s23
    %s43 = sphi 0, %s43
    %s45 = sphi 0, %s43
    %s46 = sphi 0, %s45
    %s60 = sphi 0, %s46
    %s64 = sphi 0, %s64
    %s66 = sphi 0, %s64
    %s67 = sphi 0, %s66
    %s81 = sphi 0, %s67
    %s87 = sphi 0, %s89
    %s90 = sphi 0, %s87
    %s91 = sphi 0, %s90
    %s107 = sphi 0, %s91
  $region4: #{discriminator_forward.7} parent=0 // loop_header_branch
    %12 = sbr.rel (%p10) target = $region8
  $region5: #{discriminator_forward.7} parent=0 // loop_body
    %s14 = ssub.s32 %s9, 1
    %s15 = ssub.s32 %s9, 2
    %s16 = sadd.s32 %s9, 1
    %s17 = ssub.s32 %s9, %s16
    %p18 = scmp.eq.s32.totalorder %s17, 0
    %s20 = sadd.s32 %s19, 1
    %s21 = scalar_select %p18, %s19, %s20
    %p24 = pneg %p18
    %p25 = scmp.eq.s32.totalorder %s9, 1
    %p26 = por %p24, %p25
    %p27 = scmp.ne.s32.totalorder %s19, %s22
    %p28 = scmp.eq.s32.totalorder %s9, 0
    %p29 = por %p27, %p28
    %p30 = scmp.ne.s32.totalorder %s19, %s22
    %p31 = scmp.eq.s32.totalorder %s14, 1
    %p32 = por %p30, %p31
    %p33 = scmp.ne.s32.totalorder %s22, %s23
    %p34 = scmp.eq.s32.totalorder %s14, 0
    %p35 = por %p33, %p34
    %p36 = scmp.ne.s32.totalorder %s22, %s23
    %p37 = scmp.eq.s32.totalorder %s15, 1
    %p38 = por %p36, %p37
    %p40 = scmp.ne.s32.totalorder %s23, %s39
    %p41 = scmp.eq.s32.totalorder %s15, 0
    %p42 = por %p40, %p41
    %s44 = sadd.s32 %s43, 1
    %p47 = scmp.eq.s32.totalorder %s9, 1
    %p48 = scmp.ne.s32.totalorder %s43, %s45
    %p49 = scmp.eq.s32.totalorder %s9, 0
    %p50 = por %p48, %p49
    %p51 = scmp.ne.s32.totalorder %s43, %s45
    %p52 = scmp.eq.s32.totalorder %s14, 1
    %p53 = por %p51, %p52
    %p54 = scmp.ne.s32.totalorder %s45, %s46
    %p55 = scmp.eq.s32.totalorder %s14, 0
    %p56 = por %p54, %p55
    %p57 = scmp.ne.s32.totalorder %s45, %s46
    %p58 = scmp.eq.s32.totalorder %s15, 1
    %p59 = por %p57, %p58
    %p61 = scmp.ne.s32.totalorder %s46, %s60
    %p62 = scmp.eq.s32.totalorder %s15, 0
    %p63 = por %p61, %p62
    %s65 = sadd.s32 %s64, 1
    %p68 = scmp.eq.s32.totalorder %s9, 1
    %p69 = scmp.ne.s32.totalorder %s64, %s66
    %p70 = scmp.eq.s32.totalorder %s9, 0
    %p71 = por %p69, %p70
    %p72 = scmp.ne.s32.totalorder %s64, %s66
    %p73 = scmp.eq.s32.totalorder %s14, 1
    %p74 = por %p72, %p73
    %p75 = scmp.ne.s32.totalorder %s66, %s67
    %p76 = scmp.eq.s32.totalorder %s14, 0
    %p77 = por %p75, %p76
    %p78 = scmp.ne.s32.totalorder %s66, %s67
    %p79 = scmp.eq.s32.totalorder %s15, 1
    %p80 = por %p78, %p79
    %p82 = scmp.ne.s32.totalorder %s67, %s81
    %p83 = scmp.eq.s32.totalorder %s15, 0
    %p84 = por %p82, %p83
    %s85 = ssub.s32 %s9, %s16
    %p86 = scmp.eq.s32.totalorder %s85, 0
    %s88 = sadd.s32 %s87, 1
    %s89 = scalar_select %p86, %s87, %s88
    %p92 = pneg %p86
    %p93 = scmp.eq.s32.totalorder %s9, 1
    %p94 = por %p92, %p93
    %p95 = scmp.ne.s32.totalorder %s87, %s90
    %p96 = scmp.eq.s32.totalorder %s9, 0
    %p97 = por %p95, %p96
    %p98 = scmp.ne.s32.totalorder %s87, %s90
    %p99 = scmp.eq.s32.totalorder %s14, 1
    %p100 = por %p98, %p99
    %p101 = scmp.ne.s32.totalorder %s90, %s91
    %p102 = scmp.eq.s32.totalorder %s14, 0
    %p103 = por %p101, %p102
    %p104 = scmp.ne.s32.totalorder %s90, %s91
    %p105 = scmp.eq.s32.totalorder %s15, 1
    %p106 = por %p104, %p105
    %p108 = scmp.ne.s32.totalorder %s91, %s107
    %p109 = scmp.eq.s32.totalorder %s15, 0
    %p110 = por %p108, %p109
    %p111 = scmp.le.s32.totalorder 1, %s9
    %p112 = scmp.lt.s32.totalorder %s9, 3
    %p113 = pnand %p111, %p112
    %p114 = pneg %p113
    // Predicated region
    $region9: #{discriminator_forward.7} parent=5 // pred_check
      _
    $region10: #{discriminator_forward.7} parent=5 // pred_check_branch
      %116 = sbr.rel (%p113) target = $region12
    $region11: #{discriminator_forward.7} parent=5 // pred_region
      %s117 = ssub.s32 %s9, 1
      // Predicated region
      $region13: #{discriminator_forward.7} parent=11 // pred_check
        %p118 = pneg %p56
      $region14: #{discriminator_forward.7} parent=11 // pred_check_branch
        %120 = sbr.rel (%p118) target = $region16
      $region15: #{discriminator_forward.7} parent=11 // pred_region
        _
      $region16: #{discriminator_forward.7} parent=11 // pred_fallthru
        _
      // Predicated region
      $region17: #{discriminator_forward.7} parent=11 // pred_check
        %p121 = pneg %p77
      $region18: #{discriminator_forward.7} parent=11 // pred_check_branch
        %123 = sbr.rel (%p121) target = $region20
      $region19: #{discriminator_forward.7} parent=11 // pred_region
        _
      $region20: #{discriminator_forward.7} parent=11 // pred_fallthru
        _
    $region12: #{discriminator_forward.7} parent=5 // pred_fallthru
      _
    %p124 = scmp.lt.s32.totalorder %s9, 2
    // Predicated region
    $region21: #{discriminator_forward.7} parent=5 // pred_check
      %p125 = pneg %p124
    $region22: #{discriminator_forward.7} parent=5 // pred_check_branch
      %127 = sbr.rel (%p125) target = $region24
    $region23: #{discriminator_forward.7} parent=5 // pred_region
      // Predicated region
      $region25: #{discriminator_forward.7} parent=23 // pred_check
        %p128 = pneg %p29
      $region26: #{discriminator_forward.7} parent=23 // pred_check_branch
        %130 = sbr.rel (%p128) target = $region28
      $region27: #{discriminator_forward.7} parent=23 // pred_region
        %p131 = scmp.lt.s32.totalorder %s9, 1
        %s132 = scalar_select %p131, %s9, 1
        %s133 = smul.addr %s132, 5
        %s134 = smul.addr %s133, 4
        %s135 = scalar_lea.vmem %s0, %s134
      $region28: #{discriminator_forward.7} parent=23 // pred_fallthru
        _
    $region24: #{discriminator_forward.7} parent=5 // pred_fallthru
      _
    %p136 = scmp.le.s32.totalorder 1, %s9
    %p137 = scmp.lt.s32.totalorder %s9, 3
    %p138 = pnand %p136, %p137
    %p139 = pneg %p138
    // Predicated region
    $region29: #{discriminator_forward.7} parent=5 // pred_check
      _
    $region30: #{discriminator_forward.7} parent=5 // pred_check_branch
      %141 = sbr.rel (%p138) target = $region32
    $region31: #{discriminator_forward.7} parent=5 // pred_region
      %s142 = ssub.s32 %s9, 1
      %p143 = scmp.lt.s32.totalorder %s14, 1
      %s144 = scalar_select %p143, %s14, 1
      %s145 = smul.addr %s144, 5
      %s146 = smul.addr %s145, 4
      %s147 = scalar_lea.vmem %s0, %s146
      %p148 = pneg %p35
      %p149 = pneg %p32
      %p150 = pneg %p56
      %p151 = pneg %p53
      %p152 = pneg %p77
      %p153 = pneg %p74
      %p154 = pneg %p103
      %p155 = pneg %p100
      %p156 = scmp.lt.s32.totalorder %s14, 1
      %s157 = scalar_select %p156, %s14, 1
      %s158 = smul.addr %s157, 4
      %s159 = smul.addr %s158, 2
      %s160 = scalar_lea.vmem %s3, %s159
      %p161 = scmp.lt.s32.totalorder %s14, 1
      %s162 = scalar_select %p161, %s14, 1
      %s163 = smul.addr %s162, 5
      %s164 = smul.addr %s163, 4
      %s165 = scalar_lea.vmem %s0, %s164
      %p166 = scmp.lt.s32.totalorder %s14, 1
      %s167 = scalar_select %p166, %s14, 1
      %s168 = smul.addr %s167, 4
      %s169 = smul.addr %s168, 2
      %s170 = scalar_lea.vmem %s3, %s169
      loop: start=0, step=1, limit=4
      $region33: #{discriminator_forward.7} parent=31 // loop_pre_header
        _
      $region34: #{discriminator_forward.7} parent=31 // loop_header
        %s172 = sphi 0, %s176
        %p173 = scmp.ge.s32.totalorder %s172, 4
        %v177 = vphi 0.0, %v536
      $region35: #{discriminator_forward.7} parent=31 // loop_header_branch
        %175 = sbr.rel (%p173) target = $region39
      $region36: #{discriminator_forward.7} parent=31 // loop_body
        %s178 = smul.addr %s172, 4
        %s179 = scalar_lea.vmem %s165, %s178
        %v180 = vld [vmem:[%s179] sm:$0x7]
        %v181 = vld [vmem:[%s1] sm:$0xf]
        %v182 = vld [vmem:[%s1 + $0x4] sm:$0xf]
        %v183 = vld [vmem:[%s1 + $0x8] sm:$0xf]
        %v184 = vld [vmem:[%s1 + $0xc] sm:$0xf]
        %v185 = vld [vmem:[%s1 + $0x10] sm:$0xf]
        %v186 = vld [vmem:[%s1 + $0x14] sm:$0xf]
        %v187 = vld [vmem:[%s1 + $0x18] sm:$0xf]
        %v188 = vld [vmem:[%s1 + $0x1c] sm:$0xf]
        %v189 = vld [vmem:[%s1 + $0x20] sm:$0xf]
        %v190 = vld [vmem:[%s1 + $0x24] sm:$0xf]
        %v191 = vld [vmem:[%s1 + $0x28] sm:$0xf]
        %v192 = vld [vmem:[%s1 + $0x2c] sm:$0xf]
        %v193 = vld [vmem:[%s1 + $0x30] sm:$0xf]
        %v194 = vld [vmem:[%s1 + $0x34] sm:$0xf]
        %v195 = vld [vmem:[%s1 + $0x38] sm:$0xf]
        %v196 = vld [vmem:[%s1 + $0x3c] sm:$0xf]
        %s197 = scalar_lea.vmem %s1, 64
        %v198 = vld [vmem:[%s197] sm:$0xf]
        %v199 = vld [vmem:[%s197 + $0x4] sm:$0xf]
        %v200 = vld [vmem:[%s197 + $0x8] sm:$0xf]
        %v201 = vld [vmem:[%s197 + $0xc] sm:$0xf]
        %v202 = vld [vmem:[%s197 + $0x10] sm:$0xf]
        %v203 = vld [vmem:[%s197 + $0x14] sm:$0xf]
        %v204 = vld [vmem:[%s197 + $0x18] sm:$0xf]
        %v205 = vld [vmem:[%s197 + $0x1c] sm:$0xf]
        %v206 = vld [vmem:[%s197 + $0x20] sm:$0xf]
        %v207 = vld [vmem:[%s197 + $0x24] sm:$0xf]
        %v208 = vld [vmem:[%s197 + $0x28] sm:$0xf]
        %v209 = vld [vmem:[%s197 + $0x2c] sm:$0xf]
        %v210 = vld [vmem:[%s197 + $0x30] sm:$0xf]
        %v211 = vld [vmem:[%s197 + $0x34] sm:$0xf]
        %v212 = vld [vmem:[%s197 + $0x38] sm:$0xf]
        %v213 = vld [vmem:[%s197 + $0x3c] sm:$0xf]
        %v215 = vunpack.c.l.b16 %v180
        %v216 = vpack.c.b16 %v215, %v215
        %v218 = vshrl.u32 %v216, 16
        %v220 = vshll.u32 %v216, 16
        %v222 = vrot.slane %v220, 1
        %v223 = vor.u32 %v218, %v222
        %v241 = vunpack.c.l.b16 %v198
        %v242 = vunpack.c.l.b16 %v199
        %v243 = vunpack.c.l.b16 %v200
        %v244 = vunpack.c.l.b16 %v201
        %v245 = vunpack.c.l.b16 %v202
        %v246 = vunpack.c.l.b16 %v203
        %v247 = vunpack.c.l.b16 %v204
        %v248 = vunpack.c.l.b16 %v205
        %v249 = vunpack.c.l.b16 %v206
        %v250 = vunpack.c.l.b16 %v207
        %v251 = vunpack.c.l.b16 %v208
        %v252 = vunpack.c.l.b16 %v209
        %v253 = vunpack.c.l.b16 %v210
        %v254 = vunpack.c.l.b16 %v211
        %v255 = vunpack.c.l.b16 %v212
        %v256 = vunpack.c.l.b16 %v213
        %v257 = vpack.c.b16 %v242, %v241
        %v258 = vpack.c.b16 %v244, %v243
        %v259 = vpack.c.b16 %v246, %v245
        %v260 = vpack.c.b16 %v248, %v247
        %v261 = vpack.c.b16 %v250, %v249
        %v262 = vpack.c.b16 %v252, %v251
        %v263 = vpack.c.b16 %v254, %v253
        %v264 = vpack.c.b16 %v256, %v255
        %273 = vmatpush.bf16.msra.mxu0 %v264
        %274 = vmatpush.bf16.msra.mxu0 %v263
        %275 = vmatpush.bf16.msra.mxu0 %v262
        %276 = vmatpush.bf16.msra.mxu0 %v261
        %277 = vmatpush.bf16.msra.mxu0 %v260
        %278 = vmatpush.bf16.msra.mxu0 %v259
        %279 = vmatpush.bf16.msra.mxu0 %v258
        %280 = vmatpush.bf16.msra.mxu0 %v257
        %281 = vmatmul.bf16.gmra.mxu0 %v223
        %v282 = vpop.f32.mrf.mxu0
        %v283 = vadd.f32 0.0, %v282
        %v284 = vpop.f32.mrf.mxu0
        %285 = vdwg.mxu0
        %v302 = vunpack.c.l.b16 %v181
        %v303 = vunpack.c.l.b16 %v182
        %v304 = vunpack.c.l.b16 %v183
        %v305 = vunpack.c.l.b16 %v184
        %v306 = vunpack.c.l.b16 %v185
        %v307 = vunpack.c.l.b16 %v186
        %v308 = vunpack.c.l.b16 %v187
        %v309 = vunpack.c.l.b16 %v188
        %v310 = vunpack.c.l.b16 %v189
        %v311 = vunpack.c.l.b16 %v190
        %v312 = vunpack.c.l.b16 %v191
        %v313 = vunpack.c.l.b16 %v192
        %v314 = vunpack.c.l.b16 %v193
        %v315 = vunpack.c.l.b16 %v194
        %v316 = vunpack.c.l.b16 %v195
        %v317 = vunpack.c.l.b16 %v196
        %v318 = vpack.c.b16 %v303, %v302
        %v319 = vpack.c.b16 %v305, %v304
        %v320 = vpack.c.b16 %v307, %v306
        %v321 = vpack.c.b16 %v309, %v308
        %v322 = vpack.c.b16 %v311, %v310
        %v323 = vpack.c.b16 %v313, %v312
        %v324 = vpack.c.b16 %v315, %v314
        %v325 = vpack.c.b16 %v317, %v316
        %334 = vmatpush.bf16.msra.mxu0 %v325
        %335 = vmatpush.bf16.msra.mxu0 %v324
        %336 = vmatpush.bf16.msra.mxu0 %v323
        %337 = vmatpush.bf16.msra.mxu0 %v322
        %338 = vmatpush.bf16.msra.mxu0 %v321
        %339 = vmatpush.bf16.msra.mxu0 %v320
        %340 = vmatpush.bf16.msra.mxu0 %v319
        %341 = vmatpush.bf16.msra.mxu0 %v318
        %342 = vmatmul.bf16.gmra.mxu0 %v180
        %v343 = vpop.f32.mrf.mxu0
        %v344 = vadd.f32 %v283, %v343
        %v345 = vpop.f32.mrf.mxu0
        %346 = vdwg.mxu0
        %s347 = sadd.s32 %s172, 1
        %s348 = smul.addr %s347, 4
        %s349 = scalar_lea.vmem %s165, %s348
        %v350 = vld [vmem:[%s349] sm:$0x7]
        %s351 = scalar_lea.vmem %s1, 128
        %v352 = vld [vmem:[%s351] sm:$0xf]
        %v353 = vld [vmem:[%s351 + $0x4] sm:$0xf]
        %v354 = vld [vmem:[%s351 + $0x8] sm:$0xf]
        %v355 = vld [vmem:[%s351 + $0xc] sm:$0xf]
        %v356 = vld [vmem:[%s351 + $0x10] sm:$0xf]
        %v357 = vld [vmem:[%s351 + $0x14] sm:$0xf]
        %v358 = vld [vmem:[%s351 + $0x18] sm:$0xf]
        %v359 = vld [vmem:[%s351 + $0x1c] sm:$0xf]
        %v360 = vld [vmem:[%s351 + $0x20] sm:$0xf]
        %v361 = vld [vmem:[%s351 + $0x24] sm:$0xf]
        %v362 = vld [vmem:[%s351 + $0x28] sm:$0xf]
        %v363 = vld [vmem:[%s351 + $0x2c] sm:$0xf]
        %v364 = vld [vmem:[%s351 + $0x30] sm:$0xf]
        %v365 = vld [vmem:[%s351 + $0x34] sm:$0xf]
        %v366 = vld [vmem:[%s351 + $0x38] sm:$0xf]
        %v367 = vld [vmem:[%s351 + $0x3c] sm:$0xf]
        %v384 = vunpack.c.l.b16 %v352
        %v385 = vunpack.c.l.b16 %v353
        %v386 = vunpack.c.l.b16 %v354
        %v387 = vunpack.c.l.b16 %v355
        %v388 = vunpack.c.l.b16 %v356
        %v389 = vunpack.c.l.b16 %v357
        %v390 = vunpack.c.l.b16 %v358
        %v391 = vunpack.c.l.b16 %v359
        %v392 = vunpack.c.l.b16 %v360
        %v393 = vunpack.c.l.b16 %v361
        %v394 = vunpack.c.l.b16 %v362
        %v395 = vunpack.c.l.b16 %v363
        %v396 = vunpack.c.l.b16 %v364
        %v397 = vunpack.c.l.b16 %v365
        %v398 = vunpack.c.l.b16 %v366
        %v399 = vunpack.c.l.b16 %v367
        %v400 = vpack.c.b16 %v385, %v384
        %v401 = vpack.c.b16 %v387, %v386
        %v402 = vpack.c.b16 %v389, %v388
        %v403 = vpack.c.b16 %v391, %v390
        %v404 = vpack.c.b16 %v393, %v392
        %v405 = vpack.c.b16 %v395, %v394
        %v406 = vpack.c.b16 %v397, %v396
        %v407 = vpack.c.b16 %v399, %v398
        %416 = vmatpush.bf16.msra.mxu0 %v407
        %417 = vmatpush.bf16.msra.mxu0 %v406
        %418 = vmatpush.bf16.msra.mxu0 %v405
        %419 = vmatpush.bf16.msra.mxu0 %v404
        %420 = vmatpush.bf16.msra.mxu0 %v403
        %421 = vmatpush.bf16.msra.mxu0 %v402
        %422 = vmatpush.bf16.msra.mxu0 %v401
        %423 = vmatpush.bf16.msra.mxu0 %v400
        %424 = vmatmul.bf16.gmra.mxu0 %v350
        %v425 = vpop.f32.mrf.mxu0
        %v426 = vadd.f32 0.0, %v425
        %v427 = vpop.f32.mrf.mxu0
        %428 = vdwg.mxu0
        %v429 = vadd.f32 %v344, %v426
        %s430 = scalar_lea.vmem %s1, 192
        %v431 = vld [vmem:[%s430] sm:$0xf]
        %v432 = vld [vmem:[%s430 + $0x4] sm:$0xf]
        %v433 = vld [vmem:[%s430 + $0x8] sm:$0xf]
        %v434 = vld [vmem:[%s430 + $0xc] sm:$0xf]
        %v435 = vld [vmem:[%s430 + $0x10] sm:$0xf]
        %v436 = vld [vmem:[%s430 + $0x14] sm:$0xf]
        %v437 = vld [vmem:[%s430 + $0x18] sm:$0xf]
        %v438 = vld [vmem:[%s430 + $0x1c] sm:$0xf]
        %v439 = vld [vmem:[%s430 + $0x20] sm:$0xf]
        %v440 = vld [vmem:[%s430 + $0x24] sm:$0xf]
        %v441 = vld [vmem:[%s430 + $0x28] sm:$0xf]
        %v442 = vld [vmem:[%s430 + $0x2c] sm:$0xf]
        %v443 = vld [vmem:[%s430 + $0x30] sm:$0xf]
        %v444 = vld [vmem:[%s430 + $0x34] sm:$0xf]
        %v445 = vld [vmem:[%s430 + $0x38] sm:$0xf]
        %v446 = vld [vmem:[%s430 + $0x3c] sm:$0xf]
        %v448 = vunpack.c.l.b16 %v350
        %v449 = vpack.c.b16 %v448, %v448
        %v451 = vshrl.u32 %v449, 16
        %v453 = vshll.u32 %v449, 16
        %v455 = vrot.slane %v453, 1
        %v456 = vor.u32 %v451, %v455
        %v474 = vunpack.c.l.b16 %v431
        %v475 = vunpack.c.l.b16 %v432
        %v476 = vunpack.c.l.b16 %v433
        %v477 = vunpack.c.l.b16 %v434
        %v478 = vunpack.c.l.b16 %v435
        %v479 = vunpack.c.l.b16 %v436
        %v480 = vunpack.c.l.b16 %v437
        %v481 = vunpack.c.l.b16 %v438
        %v482 = vunpack.c.l.b16 %v439
        %v483 = vunpack.c.l.b16 %v440
        %v484 = vunpack.c.l.b16 %v441
        %v485 = vunpack.c.l.b16 %v442
        %v486 = vunpack.c.l.b16 %v443
        %v487 = vunpack.c.l.b16 %v444
        %v488 = vunpack.c.l.b16 %v445
        %v489 = vunpack.c.l.b16 %v446
        %v490 = vpack.c.b16 %v475, %v474
        %v491 = vpack.c.b16 %v477, %v476
        %v492 = vpack.c.b16 %v479, %v478
        %v493 = vpack.c.b16 %v481, %v480
        %v494 = vpack.c.b16 %v483, %v482
        %v495 = vpack.c.b16 %v485, %v484
        %v496 = vpack.c.b16 %v487, %v486
        %v497 = vpack.c.b16 %v489, %v488
        %506 = vmatpush.bf16.msra.mxu0 %v497
        %507 = vmatpush.bf16.msra.mxu0 %v496
        %508 = vmatpush.bf16.msra.mxu0 %v495
        %509 = vmatpush.bf16.msra.mxu0 %v494
        %510 = vmatpush.bf16.msra.mxu0 %v493
        %511 = vmatpush.bf16.msra.mxu0 %v492
        %512 = vmatpush.bf16.msra.mxu0 %v491
        %513 = vmatpush.bf16.msra.mxu0 %v490
        %514 = vmatmul.bf16.gmra.mxu0 %v456
        %v515 = vpop.f32.mrf.mxu0
        %v516 = vadd.f32 0.0, %v515
        %v517 = vpop.f32.mrf.mxu0
        %518 = vdwg.mxu0
        %v519 = vadd.f32 %v429, %v516
        %v520 = vld [vmem:[%s2] sm:$0x1]
        %v522 = vperm.slane %v520, 0
        %v524 = vadd.f32 %v519, %v522
        %s525 = smul.u32 %s172, 4
        %s526 = scalar_lea.vmem [#allocation2], %s525
        %vm527 = vcmask 519168
        %528 = vst.msk [vmem:[%s526] sm:$0xf] %vm527, %v524
        %v529 = vsel %vm527, %v524, 0.0
        %v530 = vrot.slane %v529, 4
        %v531 = vadd.f32 %v529, %v530
        %v532 = vrot.slane %v531, 2
        %v533 = vadd.f32 %v531, %v532
        %v534 = vrot.slane %v533, 1
        %v535 = vadd.f32 %v533, %v534
        %v536 = vadd.f32 %v177, %v535
      $region37: #{discriminator_forward.7} parent=31 // loop_footer
        %s176 = sadd.s32 1, %s172
      $region38: #{discriminator_forward.7} parent=31 // loop_footer_branch
        %171 = sbr.rel target = $region34
      $region39: #{discriminator_forward.7} parent=31 // loop_exit
        _
      %v537 = vmul.f32 %v177, 0.0625
      loop: start=0, step=1, limit=4
      $region40: #{discriminator_forward.7} parent=31 // loop_pre_header
        _
      $region41: #{discriminator_forward.7} parent=31 // loop_header
        %s539 = sphi 0, %s543
        %p540 = scmp.ge.s32.totalorder %s539, 4
        %v544 = vphi 0.0, %v558
      $region42: #{discriminator_forward.7} parent=31 // loop_header_branch
        %542 = sbr.rel (%p540) target = $region46
      $region43: #{discriminator_forward.7} parent=31 // loop_body
        %s545 = smul.u32 %s539, 4
        %s546 = scalar_lea.vmem [#allocation2], %s545
        %v547 = vld [vmem:[%s546] sm:$0xf]
        %v548 = vsub.f32 %v547, %v537
        %v549 = vmul.f32 %v548, %v548
        %vm550 = vcmask 519168
        %v551 = vsel %vm550, %v549, 0.0
        %v552 = vrot.slane %v551, 4
        %v553 = vadd.f32 %v551, %v552
        %v554 = vrot.slane %v553, 2
        %v555 = vadd.f32 %v553, %v554
        %v556 = vrot.slane %v555, 1
        %v557 = vadd.f32 %v555, %v556
        %v558 = vadd.f32 %v544, %v557
      $region44: #{discriminator_forward.7} parent=31 // loop_footer
        %s543 = sadd.s32 1, %s539
      $region45: #{discriminator_forward.7} parent=31 // loop_footer_branch
        %538 = sbr.rel target = $region41
      $region46: #{discriminator_forward.7} parent=31 // loop_exit
        _
      %v559 = vmul.f32 %v544, 0.0625
      %v560 = vadd.f32 %v559, 1e-05
      %v561 = vrsqrt.pop %v560
      %v562 = vmul.f32 %v561, %v560
      %v563 = vmul.f32 %v562, %v561
      %v564 = vmul.f32 0.5, %v563
      %v565 = vsub.f32 1.5, %v564
      %v566 = vmul.f32 %v561, %v565
      %vm567 = vweird.f32 %v560
      %vm568 = vweird.f32 %v561
      %vm569 = vmor %vm567, %vm568
      %v570 = vsel %vm569, %v561, %v566
      loop: start=0, step=1, limit=4
      $region47: #{discriminator_forward.7} parent=31 // loop_pre_header
        _
      $region48: #{discriminator_forward.7} parent=31 // loop_header
        %s572 = sphi 0, %s576
        %p573 = scmp.ge.s32.totalorder %s572, 4
      $region49: #{discriminator_forward.7} parent=31 // loop_header_branch
        %575 = sbr.rel (%p573) target = $region53
      $region50: #{discriminator_forward.7} parent=31 // loop_body
        %s577 = smul.u32 %s572, 4
        %s578 = scalar_lea.vmem [#allocation2], %s577
        %v579 = vld [vmem:[%s578] sm:$0xf]
        %v580 = vsub.f32 %v579, %v537
        %v581 = vmul.f32 %v580, %v570
        %vm582 = vcmp.ge.f32.partialorder %v581, 0.0
        %v583 = vmul.f32 %v581, 0.2
        %v584 = vsel %vm582, %v581, %v583
        %v585 = vpack.c.bf16 %v584, %v584
        %s586 = smul.addr %s572, 2
        %s587 = scalar_lea.vmem %s170, %s586
        %vm588 = vcmask 517120
        %589 = vst.msk [vmem:[%s587] sm:$0x3] %vm588, %v585
      $region51: #{discriminator_forward.7} parent=31 // loop_footer
        %s576 = sadd.s32 1, %s572
      $region52: #{discriminator_forward.7} parent=31 // loop_footer_branch
        %571 = sbr.rel target = $region48
      $region53: #{discriminator_forward.7} parent=31 // loop_exit
        _
      %p590 = scmp.lt.s32.totalorder %s14, 1
      %s591 = scalar_select %p590, %s14, 1
      %s592 = smul.addr %s591, 4
      %s593 = smul.addr %s592, 2
      %s594 = scalar_lea.vmem %s3, %s593
      // Predicated region
      $region54: #{discriminator_forward.7} parent=31 // pred_check
        %p595 = pneg %p100
      $region55: #{discriminator_forward.7} parent=31 // pred_check_branch
        %597 = sbr.rel (%p595) target = $region57
      $region56: #{discriminator_forward.7} parent=31 // pred_region
        _
      $region57: #{discriminator_forward.7} parent=31 // pred_fallthru
        _
    $region32: #{discriminator_forward.7} parent=5 // pred_fallthru
      _
    %p598 = scmp.le.s32.totalorder 2, %s9
    // Predicated region
    $region58: #{discriminator_forward.7} parent=5 // pred_check
      %p599 = pneg %p598
    $region59: #{discriminator_forward.7} parent=5 // pred_check_branch
      %601 = sbr.rel (%p599) target = $region61
    $region60: #{discriminator_forward.7} parent=5 // pred_region
      %s602 = ssub.s32 %s9, 2
      // Predicated region
      $region62: #{discriminator_forward.7} parent=60 // pred_check
        %p603 = pneg %p106
      $region63: #{discriminator_forward.7} parent=60 // pred_check_branch
        %605 = sbr.rel (%p603) target = $region65
      $region64: #{discriminator_forward.7} parent=60 // pred_region
        %p606 = scmp.lt.s32.totalorder %s15, 1
        %s607 = scalar_select %p606, %s15, 1
        %s608 = smul.addr %s607, 4
        %s609 = smul.addr %s608, 2
        %s610 = scalar_lea.vmem %s3, %s609
      $region65: #{discriminator_forward.7} parent=60 // pred_fallthru
        _
    $region61: #{discriminator_forward.7} parent=5 // pred_fallthru
      _
  $region6: #{discriminator_forward.7} parent=0 // loop_footer
    %s13 = sadd.s32 1, %s9
  $region7: #{discriminator_forward.7} parent=0 // loop_footer_branch
    %8 = sbr.rel target = $region3
  $region8: #{discriminator_forward.7} parent=0 // loop_exit
    _

// kernel: discriminator_forward.8
$region0: #{discriminator_forward.8}
  #allocation0 [shape = 'u32[]', space=smem, size = 0x4, offset = 0x4, fixed_abs, tag = 'smem constant byte address 0x4 - core index']
  #allocation1 [shape = 'u32[72,128]{1,0:T(1,128)}', space=vmem, size = 0x9000, scoped, tag = 'internal scratch']
  #allocation2 [shape = 'f32[3,3,128]{2,1,0:T(4,128)}', space=vmem, size = 0x1800, scoped, tag = 'scratch operand']
  %s0 = inlined_call_operand.vmem [shape: bf16[2,6,6,64], index: 0, kind: input, shape index: {}]
  %s1 = inlined_call_operand.vmem [shape: bf16[16,64,128], index: 1, kind: input, shape index: {}]
  %s2 = inlined_call_operand.vmem [shape: f32[1,128], index: 2, kind: input, shape index: {}]
  %s3 = inlined_call_operand.vmem [shape: bf16[2,3,3,128], index: 3, kind: output, shape index: {}]
  %s4 = sld [smem:[#allocation0]]
  $region66: #{discriminator_forward.8} parent=0
    _
  %s6 = ssub.s32 1, %s4
  %s7 = scalar_select 0, %s6, %s4
  loop: start=0, step=1, limit=4
  $region2: #{discriminator_forward.8} parent=0 // loop_pre_header
    _
  $region3: #{discriminator_forward.8} parent=0 // loop_header
    %s9 = sphi 0, %s13
    %p10 = scmp.ge.s32.totalorder %s9, 4
    %s19 = sphi 0, %s21
    %s22 = sphi 0, %s19
    %s23 = sphi 0, %s22
    %s39 = sphi 0, %s23
    %s43 = sphi 0, %s43
    %s45 = sphi 0, %s43
    %s46 = sphi 0, %s45
    %s60 = sphi 0, %s46
    %s64 = sphi 0, %s64
    %s66 = sphi 0, %s64
    %s67 = sphi 0, %s66
    %s81 = sphi 0, %s67
    %s87 = sphi 0, %s89
    %s90 = sphi 0, %s87
    %s91 = sphi 0, %s90
    %s107 = sphi 0, %s91
  $region4: #{discriminator_forward.8} parent=0 // loop_header_branch
    %12 = sbr.rel (%p10) target = $region8
  $region5: #{discriminator_forward.8} parent=0 // loop_body
    %s14 = ssub.s32 %s9, 1
    %s15 = ssub.s32 %s9, 2
    %s16 = sadd.s32 %s9, 1
    %s17 = ssub.s32 %s9, %s16
    %p18 = scmp.eq.s32.totalorder %s17, 0
    %s20 = sadd.s32 %s19, 1
    %s21 = scalar_select %p18, %s19, %s20
    %p24 = pneg %p18
    %p25 = scmp.eq.s32.totalorder %s9, 1
    %p26 = por %p24, %p25
    %p27 = scmp.ne.s32.totalorder %s19, %s22
    %p28 = scmp.eq.s32.totalorder %s9, 0
    %p29 = por %p27, %p28
    %p30 = scmp.ne.s32.totalorder %s19, %s22
    %p31 = scmp.eq.s32.totalorder %s14, 1
    %p32 = por %p30, %p31
    %p33 = scmp.ne.s32.totalorder %s22, %s23
    %p34 = scmp.eq.s32.totalorder %s14, 0
    %p35 = por %p33, %p34
    %p36 = scmp.ne.s32.totalorder %s22, %s23
    %p37 = scmp.eq.s32.totalorder %s15, 1
    %p38 = por %p36, %p37
    %p40 = scmp.ne.s32.totalorder %s23, %s39
    %p41 = scmp.eq.s32.totalorder %s15, 0
    %p42 = por %p40, %p41
    %s44 = sadd.s32 %s43, 1
    %p47 = scmp.eq.s32.totalorder %s9, 1
    %p48 = scmp.ne.s32.totalorder %s43, %s45
    %p49 = scmp.eq.s32.totalorder %s9, 0
    %p50 = por %p48, %p49
    %p51 = scmp.ne.s32.totalorder %s43, %s45
    %p52 = scmp.eq.s32.totalorder %s14, 1
    %p53 = por %p51, %p52
    %p54 = scmp.ne.s32.totalorder %s45, %s46
    %p55 = scmp.eq.s32.totalorder %s14, 0
    %p56 = por %p54, %p55
    %p57 = scmp.ne.s32.totalorder %s45, %s46
    %p58 = scmp.eq.s32.totalorder %s15, 1
    %p59 = por %p57, %p58
    %p61 = scmp.ne.s32.totalorder %s46, %s60
    %p62 = scmp.eq.s32.totalorder %s15, 0
    %p63 = por %p61, %p62
    %s65 = sadd.s32 %s64, 1
    %p68 = scmp.eq.s32.totalorder %s9, 1
    %p69 = scmp.ne.s32.totalorder %s64, %s66
    %p70 = scmp.eq.s32.totalorder %s9, 0
    %p71 = por %p69, %p70
    %p72 = scmp.ne.s32.totalorder %s64, %s66
    %p73 = scmp.eq.s32.totalorder %s14, 1
    %p74 = por %p72, %p73
    %p75 = scmp.ne.s32.totalorder %s66, %s67
    %p76 = scmp.eq.s32.totalorder %s14, 0
    %p77 = por %p75, %p76
    %p78 = scmp.ne.s32.totalorder %s66, %s67
    %p79 = scmp.eq.s32.totalorder %s15, 1
    %p80 = por %p78, %p79
    %p82 = scmp.ne.s32.totalorder %s67, %s81
    %p83 = scmp.eq.s32.totalorder %s15, 0
    %p84 = por %p82, %p83
    %s85 = ssub.s32 %s9, %s16
    %p86 = scmp.eq.s32.totalorder %s85, 0
    %s88 = sadd.s32 %s87, 1
    %s89 = scalar_select %p86, %s87, %s88
    %p92 = pneg %p86
    %p93 = scmp.eq.s32.totalorder %s9, 1
    %p94 = por %p92, %p93
    %p95 = scmp.ne.s32.totalorder %s87, %s90
    %p96 = scmp.eq.s32.totalorder %s9, 0
    %p97 = por %p95, %p96
    %p98 = scmp.ne.s32.totalorder %s87, %s90
    %p99 = scmp.eq.s32.totalorder %s14, 1
    %p100 = por %p98, %p99
    %p101 = scmp.ne.s32.totalorder %s90, %s91
    %p102 = scmp.eq.s32.totalorder %s14, 0
    %p103 = por %p101, %p102
    %p104 = scmp.ne.s32.totalorder %s90, %s91
    %p105 = scmp.eq.s32.totalorder %s15, 1
    %p106 = por %p104, %p105
    %p108 = scmp.ne.s32.totalorder %s91, %s107
    %p109 = scmp.eq.s32.totalorder %s15, 0
    %p110 = por %p108, %p109
    %p111 = scmp.le.s32.totalorder 1, %s9
    %p112 = scmp.lt.s32.totalorder %s9, 3
    %p113 = pnand %p111, %p112
    %p114 = pneg %p113
    // Predicated region
    $region9: #{discriminator_forward.8} parent=5 // pred_check
      _
    $region10: #{discriminator_forward.8} parent=5 // pred_check_branch
      %116 = sbr.rel (%p113) target = $region12
    $region11: #{discriminator_forward.8} parent=5 // pred_region
      %s117 = ssub.s32 %s9, 1
      // Predicated region
      $region13: #{discriminator_forward.8} parent=11 // pred_check
        %p118 = pneg %p56
      $region14: #{discriminator_forward.8} parent=11 // pred_check_branch
        %120 = sbr.rel (%p118) target = $region16
      $region15: #{discriminator_forward.8} parent=11 // pred_region
        _
      $region16: #{discriminator_forward.8} parent=11 // pred_fallthru
        _
      // Predicated region
      $region17: #{discriminator_forward.8} parent=11 // pred_check
        %p121 = pneg %p77
      $region18: #{discriminator_forward.8} parent=11 // pred_check_branch
        %123 = sbr.rel (%p121) target = $region20
      $region19: #{discriminator_forward.8} parent=11 // pred_region
        _
      $region20: #{discriminator_forward.8} parent=11 // pred_fallthru
        _
    $region12: #{discriminator_forward.8} parent=5 // pred_fallthru
      _
    %p124 = scmp.lt.s32.totalorder %s9, 2
    // Predicated region
    $region21: #{discriminator_forward.8} parent=5 // pred_check
      %p125 = pneg %p124
    $region22: #{discriminator_forward.8} parent=5 // pred_check_branch
      %127 = sbr.rel (%p125) target = $region24
    $region23: #{discriminator_forward.8} parent=5 // pred_region
      // Predicated region
      $region25: #{discriminator_forward.8} parent=23 // pred_check
        %p128 = pneg %p29
      $region26: #{discriminator_forward.8} parent=23 // pred_check_branch
        %130 = sbr.rel (%p128) target = $region28
      $region27: #{discriminator_forward.8} parent=23 // pred_region
        %p131 = scmp.lt.s32.totalorder %s9, 1
        %s132 = scalar_select %p131, %s9, 1
        %s133 = smul.addr %s132, 6
        %s134 = smul.addr %s133, 4
        %s135 = scalar_lea.vmem %s0, %s134
      $region28: #{discriminator_forward.8} parent=23 // pred_fallthru
        _
    $region24: #{discriminator_forward.8} parent=5 // pred_fallthru
      _
    %p136 = scmp.le.s32.totalorder 1, %s9
    %p137 = scmp.lt.s32.totalorder %s9, 3
    %p138 = pnand %p136, %p137
    %p139 = pneg %p138
    // Predicated region
    $region29: #{discriminator_forward.8} parent=5 // pred_check
      _
    $region30: #{discriminator_forward.8} parent=5 // pred_check_branch
      %141 = sbr.rel (%p138) target = $region32
    $region31: #{discriminator_forward.8} parent=5 // pred_region
      %s142 = ssub.s32 %s9, 1
      %p143 = scmp.lt.s32.totalorder %s14, 1
      %s144 = scalar_select %p143, %s14, 1
      %s145 = smul.addr %s144, 6
      %s146 = smul.addr %s145, 4
      %s147 = scalar_lea.vmem %s0, %s146
      %p148 = pneg %p35
      %p149 = pneg %p32
      %p150 = pneg %p56
      %p151 = pneg %p53
      %p152 = pneg %p77
      %p153 = pneg %p74
      %p154 = pneg %p103
      %p155 = pneg %p100
      %p156 = scmp.lt.s32.totalorder %s14, 1
      %s157 = scalar_select %p156, %s14, 1
      %s158 = smul.addr %s157, 3
      %s159 = smul.addr %s158, 2
      %s160 = scalar_lea.vmem %s3, %s159
      %p161 = scmp.lt.s32.totalorder %s14, 1
      %s162 = scalar_select %p161, %s14, 1
      %s163 = smul.addr %s162, 6
      %s164 = smul.addr %s163, 4
      %s165 = scalar_lea.vmem %s0, %s164
      %p166 = scmp.lt.s32.totalorder %s14, 1
      %s167 = scalar_select %p166, %s14, 1
      %s168 = smul.addr %s167, 3
      %s169 = smul.addr %s168, 2
      %s170 = scalar_lea.vmem %s3, %s169
      loop: start=0, step=1, limit=3
      $region33: #{discriminator_forward.8} parent=31 // loop_pre_header
        _
      $region34: #{discriminator_forward.8} parent=31 // loop_header
        %s173 = sphi 0, %s177
        %p174 = scmp.ge.s32.totalorder %s173, 3
        %v178 = vphi 0.0, %v1064
      $region35: #{discriminator_forward.8} parent=31 // loop_header_branch
        %176 = sbr.rel (%p174) target = $region39
      $region36: #{discriminator_forward.8} parent=31 // loop_body
        %s179 = smul.addr %s173, 4
        %s180 = scalar_lea.vmem %s165, %s179
        %v181 = vld [vmem:[%s180] sm:$0x7]
        %v182 = vld [vmem:[%s1] sm:$0xf]
        %v183 = vld [vmem:[%s1 + $0x4] sm:$0xf]
        %v184 = vld [vmem:[%s1 + $0x8] sm:$0xf]
        %v185 = vld [vmem:[%s1 + $0xc] sm:$0xf]
        %v186 = vld [vmem:[%s1 + $0x10] sm:$0xf]
        %v187 = vld [vmem:[%s1 + $0x14] sm:$0xf]
        %v188 = vld [vmem:[%s1 + $0x18] sm:$0xf]
        %v189 = vld [vmem:[%s1 + $0x1c] sm:$0xf]
        %s190 = scalar_lea.vmem %s1, 32
        %v191 = vld [vmem:[%s190] sm:$0xf]
        %v192 = vld [vmem:[%s190 + $0x4] sm:$0xf]
        %v193 = vld [vmem:[%s190 + $0x8] sm:$0xf]
        %v194 = vld [vmem:[%s190 + $0xc] sm:$0xf]
        %v195 = vld [vmem:[%s190 + $0x10] sm:$0xf]
        %v196 = vld [vmem:[%s190 + $0x14] sm:$0xf]
        %v197 = vld [vmem:[%s190 + $0x18] sm:$0xf]
        %v198 = vld [vmem:[%s190 + $0x1c] sm:$0xf]
        %v200 = vunpack.c.l.b16 %v181
        %v201 = vpack.c.b16 %v200, %v200
        %v203 = vshrl.u32 %v201, 16
        %v205 = vshll.u32 %v201, 16
        %v207 = vrot.slane %v205, 1
        %v208 = vor.u32 %v203, %v207
        %v217 = vunpack.c.l.b16 %v191
        %v218 = vunpack.c.l.b16 %v192
        %v219 = vunpack.c.l.b16 %v193
        %v220 = vunpack.c.l.b16 %v194
        %v221 = vunpack.c.l.b16 %v195
        %v222 = vunpack.c.l.b16 %v196
        %v223 = vunpack.c.l.b16 %v197
        %v224 = vunpack.c.l.b16 %v198
        %v225 = vpack.c.b16 %v218, %v217
        %v226 = vpack.c.b16 %v220, %v219
        %v227 = vpack.c.b16 %v222, %v221
        %v228 = vpack.c.b16 %v224, %v223
        %vm233 = vcmask 523264
        %v235 = vsel %vm233, %v208, 0
        %237 = vmatpush.bf16.msra.mxu0 0
        %238 = vmatpush.bf16.msra.mxu0 0
        %239 = vmatpush.bf16.msra.mxu0 0
        %240 = vmatpush.bf16.msra.mxu0 0
        %241 = vmatpush.bf16.msra.mxu0 %v228
        %242 = vmatpush.bf16.msra.mxu0 %v227
        %243 = vmatpush.bf16.msra.mxu0 %v226
        %244 = vmatpush.bf16.msra.mxu0 %v225
        %245 = vmatmul.bf16.gmra.mxu0 %v235
        %v246 = vpop.f32.mrf.mxu0
        %v247 = vadd.f32 0.0, %v246
        %v248 = vpop.f32.mrf.mxu0
        %249 = vdwg.mxu0
        %v258 = vunpack.c.l.b16 %v182
        %v259 = vunpack.c.l.b16 %v183
        %v260 = vunpack.c.l.b16 %v184
        %v261 = vunpack.c.l.b16 %v185
        %v262 = vunpack.c.l.b16 %v186
        %v263 = vunpack.c.l.b16 %v187
        %v264 = vunpack.c.l.b16 %v188
        %v265 = vunpack.c.l.b16 %v189
        %v266 = vpack.c.b16 %v259, %v258
        %v267 = vpack.c.b16 %v261, %v260
        %v268 = vpack.c.b16 %v263, %v262
        %v269 = vpack.c.b16 %v265, %v264
        %v275 = vsel %vm233, %v181, 0
        %277 = vmatpush.bf16.msra.mxu0 0
        %278 = vmatpush.bf16.msra.mxu0 0
        %279 = vmatpush.bf16.msra.mxu0 0
        %280 = vmatpush.bf16.msra.mxu0 0
        %281 = vmatpush.bf16.msra.mxu0 %v269
        %282 = vmatpush.bf16.msra.mxu0 %v268
        %283 = vmatpush.bf16.msra.mxu0 %v267
        %284 = vmatpush.bf16.msra.mxu0 %v266
        %285 = vmatmul.bf16.gmra.mxu0 %v275
        %v286 = vpop.f32.mrf.mxu0
        %v287 = vadd.f32 %v247, %v286
        %v288 = vpop.f32.mrf.mxu0
        %289 = vdwg.mxu0
        %s290 = scalar_lea.vmem %s1, 64
        %v291 = vld [vmem:[%s290] sm:$0xf]
        %v292 = vld [vmem:[%s290 + $0x4] sm:$0xf]
        %v293 = vld [vmem:[%s290 + $0x8] sm:$0xf]
        %v294 = vld [vmem:[%s290 + $0xc] sm:$0xf]
        %v295 = vld [vmem:[%s290 + $0x10] sm:$0xf]
        %v296 = vld [vmem:[%s290 + $0x14] sm:$0xf]
        %v297 = vld [vmem:[%s290 + $0x18] sm:$0xf]
        %v298 = vld [vmem:[%s290 + $0x1c] sm:$0xf]
        %v299 = vrot.slane %v201, 1
        %v308 = vunpack.c.l.b16 %v291
        %v309 = vunpack.c.l.b16 %v292
        %v310 = vunpack.c.l.b16 %v293
        %v311 = vunpack.c.l.b16 %v294
        %v312 = vunpack.c.l.b16 %v295
        %v313 = vunpack.c.l.b16 %v296
        %v314 = vunpack.c.l.b16 %v297
        %v315 = vunpack.c.l.b16 %v298
        %v316 = vpack.c.b16 %v309, %v308
        %v317 = vpack.c.b16 %v311, %v310
        %v318 = vpack.c.b16 %v313, %v312
        %v319 = vpack.c.b16 %v315, %v314
        %v325 = vsel %vm233, %v299, 0
        %327 = vmatpush.bf16.msra.mxu0 0
        %328 = vmatpush.bf16.msra.mxu0 0
        %329 = vmatpush.bf16.msra.mxu0 0
        %330 = vmatpush.bf16.msra.mxu0 0
        %331 = vmatpush.bf16.msra.mxu0 %v319
        %332 = vmatpush.bf16.msra.mxu0 %v318
        %333 = vmatpush.bf16.msra.mxu0 %v317
        %334 = vmatpush.bf16.msra.mxu0 %v316
        %335 = vmatmul.bf16.gmra.mxu0 %v325
        %v336 = vpop.f32.mrf.mxu0
        %v337 = vadd.f32 0.0, %v336
        %v338 = vpop.f32.mrf.mxu0
        %339 = vdwg.mxu0
        %v340 = vadd.f32 %v287, %v337
        %s341 = scalar_lea.vmem %s1, 96
        %v342 = vld [vmem:[%s341] sm:$0xf]
        %v343 = vld [vmem:[%s341 + $0x4] sm:$0xf]
        %v344 = vld [vmem:[%s341 + $0x8] sm:$0xf]
        %v345 = vld [vmem:[%s341 + $0xc] sm:$0xf]
        %v346 = vld [vmem:[%s341 + $0x10] sm:$0xf]
        %v347 = vld [vmem:[%s341 + $0x14] sm:$0xf]
        %v348 = vld [vmem:[%s341 + $0x18] sm:$0xf]
        %v349 = vld [vmem:[%s341 + $0x1c] sm:$0xf]
        %v350 = vrot.slane %v203, 1
        %v351 = vrot.slane %v205, 2
        %v352 = vor.u32 %v350, %v351
        %v361 = vunpack.c.l.b16 %v342
        %v362 = vunpack.c.l.b16 %v343
        %v363 = vunpack.c.l.b16 %v344
        %v364 = vunpack.c.l.b16 %v345
        %v365 = vunpack.c.l.b16 %v346
        %v366 = vunpack.c.l.b16 %v347
        %v367 = vunpack.c.l.b16 %v348
        %v368 = vunpack.c.l.b16 %v349
        %v369 = vpack.c.b16 %v362, %v361
        %v370 = vpack.c.b16 %v364, %v363
        %v371 = vpack.c.b16 %v366, %v365
        %v372 = vpack.c.b16 %v368, %v367
        %v378 = vsel %vm233, %v352, 0
        %380 = vmatpush.bf16.msra.mxu0 0
        %381 = vmatpush.bf16.msra.mxu0 0
        %382 = vmatpush.bf16.msra.mxu0 0
        %383 = vmatpush.bf16.msra.mxu0 0
        %384 = vmatpush.bf16.msra.mxu0 %v372
        %385 = vmatpush.bf16.msra.mxu0 %v371
        %386 = vmatpush.bf16.msra.mxu0 %v370
        %387 = vmatpush.bf16.msra.mxu0 %v369
        %388 = vmatmul.bf16.gmra.mxu0 %v378
        %v389 = vpop.f32.mrf.mxu0
        %v390 = vadd.f32 0.0, %v389
        %v391 = vpop.f32.mrf.mxu0
        %392 = vdwg.mxu0
        %v393 = vadd.f32 %v340, %v390
        %s394 = sadd.s32 %s173, 1
        %s395 = smul.addr %s394, 4
        %s396 = scalar_lea.vmem %s165, %s395
        %v397 = vld [vmem:[%s396] sm:$0x7]
        %s398 = scalar_lea.vmem %s1, 128
        %v399 = vld [vmem:[%s398] sm:$0xf]
        %v400 = vld [vmem:[%s398 + $0x4] sm:$0xf]
        %v401 = vld [vmem:[%s398 + $0x8] sm:$0xf]
        %v402 = vld [vmem:[%s398 + $0xc] sm:$0xf]
        %v403 = vld [vmem:[%s398 + $0x10] sm:$0xf]
        %v404 = vld [vmem:[%s398 + $0x14] sm:$0xf]
        %v405 = vld [vmem:[%s398 + $0x18] sm:$0xf]
        %v406 = vld [vmem:[%s398 + $0x1c] sm:$0xf]
        %v415 = vunpack.c.l.b16 %v399
        %v416 = vunpack.c.l.b16 %v400
        %v417 = vunpack.c.l.b16 %v401
        %v418 = vunpack.c.l.b16 %v402
        %v419 = vunpack.c.l.b16 %v403
        %v420 = vunpack.c.l.b16 %v404
        %v421 = vunpack.c.l.b16 %v405
        %v422 = vunpack.c.l.b16 %v406
        %v423 = vpack.c.b16 %v416, %v415
        %v424 = vpack.c.b16 %v418, %v417
        %v425 = vpack.c.b16 %v420, %v419
        %v426 = vpack.c.b16 %v422, %v421
        %v432 = vsel %vm233, %v397, 0
        %434 = vmatpush.bf16.msra.mxu0 0
        %435 = vmatpush.bf16.msra.mxu0 0
        %436 = vmatpush.bf16.msra.mxu0 0
        %437 = vmatpush.bf16.msra.mxu0 0
        %438 = vmatpush.bf16.msra.mxu0 %v426
        %439 = vmatpush.bf16.msra.mxu0 %v425
        %440 = vmatpush.bf16.msra.mxu0 %v424
        %441 = vmatpush.bf16.msra.mxu0 %v423
        %442 = vmatmul.bf16.gmra.mxu0 %v432
        %v443 = vpop.f32.mrf.mxu0
        %v444 = vadd.f32 0.0, %v443
        %v445 = vpop.f32.mrf.mxu0
        %446 = vdwg.mxu0
        %v447 = vadd.f32 %v393, %v444
        %s448 = scalar_lea.vmem %s1, 160
        %v449 = vld [vmem:[%s448] sm:$0xf]
        %v450 = vld [vmem:[%s448 + $0x4] sm:$0xf]
        %v451 = vld [vmem:[%s448 + $0x8] sm:$0xf]
        %v452 = vld [vmem:[%s448 + $0xc] sm:$0xf]
        %v453 = vld [vmem:[%s448 + $0x10] sm:$0xf]
        %v454 = vld [vmem:[%s448 + $0x14] sm:$0xf]
        %v455 = vld [vmem:[%s448 + $0x18] sm:$0xf]
        %v456 = vld [vmem:[%s448 + $0x1c] sm:$0xf]
        %v458 = vunpack.c.l.b16 %v397
        %v459 = vpack.c.b16 %v458, %v458
        %v461 = vshrl.u32 %v459, 16
        %v463 = vshll.u32 %v459, 16
        %v465 = vrot.slane %v463, 1
        %v466 = vor.u32 %v461, %v465
        %v475 = vunpack.c.l.b16 %v449
        %v476 = vunpack.c.l.b16 %v450
        %v477 = vunpack.c.l.b16 %v451
        %v478 = vunpack.c.l.b16 %v452
        %v479 = vunpack.c.l.b16 %v453
        %v480 = vunpack.c.l.b16 %v454
        %v481 = vunpack.c.l.b16 %v455
        %v482 = vunpack.c.l.b16 %v456
        %v483 = vpack.c.b16 %v476, %v475
        %v484 = vpack.c.b16 %v478, %v477
        %v485 = vpack.c.b16 %v480, %v479
        %v486 = vpack.c.b16 %v482, %v481
        %v492 = vsel %vm233, %v466, 0
        %494 = vmatpush.bf16.msra.mxu0 0
        %495 = vmatpush.bf16.msra.mxu0 0
        %496 = vmatpush.bf16.msra.mxu0 0
        %497 = vmatpush.bf16.msra.mxu0 0
        %498 = vmatpush.bf16.msra.mxu0 %v486
        %499 = vmatpush.bf16.msra.mxu0 %v485
        %500 = vmatpush.bf16.msra.mxu0 %v484
        %501 = vmatpush.bf16.msra.mxu0 %v483
        %502 = vmatmul.bf16.gmra.mxu0 %v492
        %v503 = vpop.f32.mrf.mxu0
        %v504 = vadd.f32 0.0, %v503
        %v505 = vpop.f32.mrf.mxu0
        %506 = vdwg.mxu0
        %v507 = vadd.f32 %v447, %v504
        %s508 = scalar_lea.vmem %s1, 192
        %v509 = vld [vmem:[%s508] sm:$0xf]
        %v510 = vld [vmem:[%s508 + $0x4] sm:$0xf]
        %v511 = vld [vmem:[%s508 + $0x8] sm:$0xf]
        %v512 = vld [vmem:[%s508 + $0xc] sm:$0xf]
        %v513 = vld [vmem:[%s508 + $0x10] sm:$0xf]
        %v514 = vld [vmem:[%s508 + $0x14] sm:$0xf]
        %v515 = vld [vmem:[%s508 + $0x18] sm:$0xf]
        %v516 = vld [vmem:[%s508 + $0x1c] sm:$0xf]
        %v517 = vrot.slane %v459, 1
        %v526 = vunpack.c.l.b16 %v509
        %v527 = vunpack.c.l.b16 %v510
        %v528 = vunpack.c.l.b16 %v511
        %v529 = vunpack.c.l.b16 %v512
        %v530 = vunpack.c.l.b16 %v513
        %v531 = vunpack.c.l.b16 %v514
        %v532 = vunpack.c.l.b16 %v515
        %v533 = vunpack.c.l.b16 %v516
        %v534 = vpack.c.b16 %v527, %v526
        %v535 = vpack.c.b16 %v529, %v528
        %v536 = vpack.c.b16 %v531, %v530
        %v537 = vpack.c.b16 %v533, %v532
        %v543 = vsel %vm233, %v517, 0
        %545 = vmatpush.bf16.msra.mxu0 0
        %546 = vmatpush.bf16.msra.mxu0 0
        %547 = vmatpush.bf16.msra.mxu0 0
        %548 = vmatpush.bf16.msra.mxu0 0
        %549 = vmatpush.bf16.msra.mxu0 %v537
        %550 = vmatpush.bf16.msra.mxu0 %v536
        %551 = vmatpush.bf16.msra.mxu0 %v535
        %552 = vmatpush.bf16.msra.mxu0 %v534
        %553 = vmatmul.bf16.gmra.mxu0 %v543
        %v554 = vpop.f32.mrf.mxu0
        %v555 = vadd.f32 0.0, %v554
        %v556 = vpop.f32.mrf.mxu0
        %557 = vdwg.mxu0
        %v558 = vadd.f32 %v507, %v555
        %s559 = scalar_lea.vmem %s1, 224
        %v560 = vld [vmem:[%s559] sm:$0xf]
        %v561 = vld [vmem:[%s559 + $0x4] sm:$0xf]
        %v562 = vld [vmem:[%s559 + $0x8] sm:$0xf]
        %v563 = vld [vmem:[%s559 + $0xc] sm:$0xf]
        %v564 = vld [vmem:[%s559 + $0x10] sm:$0xf]
        %v565 = vld [vmem:[%s559 + $0x14] sm:$0xf]
        %v566 = vld [vmem:[%s559 + $0x18] sm:$0xf]
        %v567 = vld [vmem:[%s559 + $0x1c] sm:$0xf]
        %v568 = vrot.slane %v461, 1
        %v569 = vrot.slane %v463, 2
        %v570 = vor.u32 %v568, %v569
        %v579 = vunpack.c.l.b16 %v560
        %v580 = vunpack.c.l.b16 %v561
        %v581 = vunpack.c.l.b16 %v562
        %v582 = vunpack.c.l.b16 %v563
        %v583 = vunpack.c.l.b16 %v564
        %v584 = vunpack.c.l.b16 %v565
        %v585 = vunpack.c.l.b16 %v566
        %v586 = vunpack.c.l.b16 %v567
        %v587 = vpack.c.b16 %v580, %v579
        %v588 = vpack.c.b16 %v582, %v581
        %v589 = vpack.c.b16 %v584, %v583
        %v590 = vpack.c.b16 %v586, %v585
        %v596 = vsel %vm233, %v570, 0
        %598 = vmatpush.bf16.msra.mxu0 0
        %599 = vmatpush.bf16.msra.mxu0 0
        %600 = vmatpush.bf16.msra.mxu0 0
        %601 = vmatpush.bf16.msra.mxu0 0
        %602 = vmatpush.bf16.msra.mxu0 %v590
        %603 = vmatpush.bf16.msra.mxu0 %v589
        %604 = vmatpush.bf16.msra.mxu0 %v588
        %605 = vmatpush.bf16.msra.mxu0 %v587
        %606 = vmatmul.bf16.gmra.mxu0 %v596
        %v607 = vpop.f32.mrf.mxu0
        %v608 = vadd.f32 0.0, %v607
        %v609 = vpop.f32.mrf.mxu0
        %610 = vdwg.mxu0
        %v611 = vadd.f32 %v558, %v608
        %s612 = sadd.s32 %s173, 2
        %s613 = smul.addr %s612, 4
        %s614 = scalar_lea.vmem %s165, %s613
        %v615 = vld [vmem:[%s614] sm:$0x7]
        %s616 = scalar_lea.vmem %s1, 256
        %v617 = vld [vmem:[%s616] sm:$0xf]
        %v618 = vld [vmem:[%s616 + $0x4] sm:$0xf]
        %v619 = vld [vmem:[%s616 + $0x8] sm:$0xf]
        %v620 = vld [vmem:[%s616 + $0xc] sm:$0xf]
        %v621 = vld [vmem:[%s616 + $0x10] sm:$0xf]
        %v622 = vld [vmem:[%s616 + $0x14] sm:$0xf]
        %v623 = vld [vmem:[%s616 + $0x18] sm:$0xf]
        %v624 = vld [vmem:[%s616 + $0x1c] sm:$0xf]
        %v633 = vunpack.c.l.b16 %v617
        %v634 = vunpack.c.l.b16 %v618
        %v635 = vunpack.c.l.b16 %v619
        %v636 = vunpack.c.l.b16 %v620
        %v637 = vunpack.c.l.b16 %v621
        %v638 = vunpack.c.l.b16 %v622
        %v639 = vunpack.c.l.b16 %v623
        %v640 = vunpack.c.l.b16 %v624
        %v641 = vpack.c.b16 %v634, %v633
        %v642 = vpack.c.b16 %v636, %v635
        %v643 = vpack.c.b16 %v638, %v637
        %v644 = vpack.c.b16 %v640, %v639
        %v650 = vsel %vm233, %v615, 0
        %652 = vmatpush.bf16.msra.mxu0 0
        %653 = vmatpush.bf16.msra.mxu0 0
        %654 = vmatpush.bf16.msra.mxu0 0
        %655 = vmatpush.bf16.msra.mxu0 0
        %656 = vmatpush.bf16.msra.mxu0 %v644
        %657 = vmatpush.bf16.msra.mxu0 %v643
        %658 = vmatpush.bf16.msra.mxu0 %v642
        %659 = vmatpush.bf16.msra.mxu0 %v641
        %660 = vmatmul.bf16.gmra.mxu0 %v650
        %v661 = vpop.f32.mrf.mxu0
        %v662 = vadd.f32 0.0, %v661
        %v663 = vpop.f32.mrf.mxu0
        %664 = vdwg.mxu0
        %v665 = vadd.f32 %v611, %v662
        %s666 = scalar_lea.vmem %s1, 288
        %v667 = vld [vmem:[%s666] sm:$0xf]
        %v668 = vld [vmem:[%s666 + $0x4] sm:$0xf]
        %v669 = vld [vmem:[%s666 + $0x8] sm:$0xf]
        %v670 = vld [vmem:[%s666 + $0xc] sm:$0xf]
        %v671 = vld [vmem:[%s666 + $0x10] sm:$0xf]
        %v672 = vld [vmem:[%s666 + $0x14] sm:$0xf]
        %v673 = vld [vmem:[%s666 + $0x18] sm:$0xf]
        %v674 = vld [vmem:[%s666 + $0x1c] sm:$0xf]
        %v676 = vunpack.c.l.b16 %v615
        %v677 = vpack.c.b16 %v676, %v676
        %v679 = vshrl.u32 %v677, 16
        %v681 = vshll.u32 %v677, 16
        %v683 = vrot.slane %v681, 1
        %v684 = vor.u32 %v679, %v683
        %v693 = vunpack.c.l.b16 %v667
        %v694 = vunpack.c.l.b16 %v668
        %v695 = vunpack.c.l.b16 %v669
        %v696 = vunpack.c.l.b16 %v670
        %v697 = vunpack.c.l.b16 %v671
        %v698 = vunpack.c.l.b16 %v672
        %v699 = vunpack.c.l.b16 %v673
        %v700 = vunpack.c.l.b16 %v674
        %v701 = vpack.c.b16 %v694, %v693
        %v702 = vpack.c.b16 %v696, %v695
        %v703 = vpack.c.b16 %v698, %v697
        %v704 = vpack.c.b16 %v700, %v699
        %v710 = vsel %vm233, %v684, 0
        %712 = vmatpush.bf16.msra.mxu0 0
        %713 = vmatpush.bf16.msra.mxu0 0
        %714 = vmatpush.bf16.msra.mxu0 0
        %715 = vmatpush.bf16.msra.mxu0 0
        %716 = vmatpush.bf16.msra.mxu0 %v704
        %717 = vmatpush.bf16.msra.mxu0 %v703
        %718 = vmatpush.bf16.msra.mxu0 %v702
        %719 = vmatpush.bf16.msra.mxu0 %v701
        %720 = vmatmul.bf16.gmra.mxu0 %v710
        %v721 = vpop.f32.mrf.mxu0
        %v722 = vadd.f32 0.0, %v721
        %v723 = vpop.f32.mrf.mxu0
        %724 = vdwg.mxu0
        %v725 = vadd.f32 %v665, %v722
        %s726 = scalar_lea.vmem %s1, 320
        %v727 = vld [vmem:[%s726] sm:$0xf]
        %v728 = vld [vmem:[%s726 + $0x4] sm:$0xf]
        %v729 = vld [vmem:[%s726 + $0x8] sm:$0xf]
        %v730 = vld [vmem:[%s726 + $0xc] sm:$0xf]
        %v731 = vld [vmem:[%s726 + $0x10] sm:$0xf]
        %v732 = vld [vmem:[%s726 + $0x14] sm:$0xf]
        %v733 = vld [vmem:[%s726 + $0x18] sm:$0xf]
        %v734 = vld [vmem:[%s726 + $0x1c] sm:$0xf]
        %v735 = vrot.slane %v677, 1
        %v744 = vunpack.c.l.b16 %v727
        %v745 = vunpack.c.l.b16 %v728
        %v746 = vunpack.c.l.b16 %v729
        %v747 = vunpack.c.l.b16 %v730
        %v748 = vunpack.c.l.b16 %v731
        %v749 = vunpack.c.l.b16 %v732
        %v750 = vunpack.c.l.b16 %v733
        %v751 = vunpack.c.l.b16 %v734
        %v752 = vpack.c.b16 %v745, %v744
        %v753 = vpack.c.b16 %v747, %v746
        %v754 = vpack.c.b16 %v749, %v748
        %v755 = vpack.c.b16 %v751, %v750
        %v761 = vsel %vm233, %v735, 0
        %763 = vmatpush.bf16.msra.mxu0 0
        %764 = vmatpush.bf16.msra.mxu0 0
        %765 = vmatpush.bf16.msra.mxu0 0
        %766 = vmatpush.bf16.msra.mxu0 0
        %767 = vmatpush.bf16.msra.mxu0 %v755
        %768 = vmatpush.bf16.msra.mxu0 %v754
        %769 = vmatpush.bf16.msra.mxu0 %v753
        %770 = vmatpush.bf16.msra.mxu0 %v752
        %771 = vmatmul.bf16.gmra.mxu0 %v761
        %v772 = vpop.f32.mrf.mxu0
        %v773 = vadd.f32 0.0, %v772
        %v774 = vpop.f32.mrf.mxu0
        %775 = vdwg.mxu0
        %v776 = vadd.f32 %v725, %v773
        %s777 = scalar_lea.vmem %s1, 352
        %v778 = vld [vmem:[%s777] sm:$0xf]
        %v779 = vld [vmem:[%s777 + $0x4] sm:$0xf]
        %v780 = vld [vmem:[%s777 + $0x8] sm:$0xf]
        %v781 = vld [vmem:[%s777 + $0xc] sm:$0xf]
        %v782 = vld [vmem:[%s777 + $0x10] sm:$0xf]
        %v783 = vld [vmem:[%s777 + $0x14] sm:$0xf]
        %v784 = vld [vmem:[%s777 + $0x18] sm:$0xf]
        %v785 = vld [vmem:[%s777 + $0x1c] sm:$0xf]
        %v786 = vrot.slane %v679, 1
        %v787 = vrot.slane %v681, 2
        %v788 = vor.u32 %v786, %v787
        %v797 = vunpack.c.l.b16 %v778
        %v798 = vunpack.c.l.b16 %v779
        %v799 = vunpack.c.l.b16 %v780
        %v800 = vunpack.c.l.b16 %v781
        %v801 = vunpack.c.l.b16 %v782
        %v802 = vunpack.c.l.b16 %v783
        %v803 = vunpack.c.l.b16 %v784
        %v804 = vunpack.c.l.b16 %v785
        %v805 = vpack.c.b16 %v798, %v797
        %v806 = vpack.c.b16 %v800, %v799
        %v807 = vpack.c.b16 %v802, %v801
        %v808 = vpack.c.b16 %v804, %v803
        %v814 = vsel %vm233, %v788, 0
        %816 = vmatpush.bf16.msra.mxu0 0
        %817 = vmatpush.bf16.msra.mxu0 0
        %818 = vmatpush.bf16.msra.mxu0 0
        %819 = vmatpush.bf16.msra.mxu0 0
        %820 = vmatpush.bf16.msra.mxu0 %v808
        %821 = vmatpush.bf16.msra.mxu0 %v807
        %822 = vmatpush.bf16.msra.mxu0 %v806
        %823 = vmatpush.bf16.msra.mxu0 %v805
        %824 = vmatmul.bf16.gmra.mxu0 %v814
        %v825 = vpop.f32.mrf.mxu0
        %v826 = vadd.f32 0.0, %v825
        %v827 = vpop.f32.mrf.mxu0
        %828 = vdwg.mxu0
        %v829 = vadd.f32 %v776, %v826
        %s830 = sadd.s32 %s173, 3
        %s831 = smul.addr %s830, 4
        %s832 = scalar_lea.vmem %s165, %s831
        %v833 = vld [vmem:[%s832] sm:$0x7]
        %s834 = scalar_lea.vmem %s1, 384
        %v835 = vld [vmem:[%s834] sm:$0xf]
        %v836 = vld [vmem:[%s834 + $0x4] sm:$0xf]
        %v837 = vld [vmem:[%s834 + $0x8] sm:$0xf]
        %v838 = vld [vmem:[%s834 + $0xc] sm:$0xf]
        %v839 = vld [vmem:[%s834 + $0x10] sm:$0xf]
        %v840 = vld [vmem:[%s834 + $0x14] sm:$0xf]
        %v841 = vld [vmem:[%s834 + $0x18] sm:$0xf]
        %v842 = vld [vmem:[%s834 + $0x1c] sm:$0xf]
        %v851 = vunpack.c.l.b16 %v835
        %v852 = vunpack.c.l.b16 %v836
        %v853 = vunpack.c.l.b16 %v837
        %v854 = vunpack.c.l.b16 %v838
        %v855 = vunpack.c.l.b16 %v839
        %v856 = vunpack.c.l.b16 %v840
        %v857 = vunpack.c.l.b16 %v841
        %v858 = vunpack.c.l.b16 %v842
        %v859 = vpack.c.b16 %v852, %v851
        %v860 = vpack.c.b16 %v854, %v853
        %v861 = vpack.c.b16 %v856, %v855
        %v862 = vpack.c.b16 %v858, %v857
        %v868 = vsel %vm233, %v833, 0
        %870 = vmatpush.bf16.msra.mxu0 0
        %871 = vmatpush.bf16.msra.mxu0 0
        %872 = vmatpush.bf16.msra.mxu0 0
        %873 = vmatpush.bf16.msra.mxu0 0
        %874 = vmatpush.bf16.msra.mxu0 %v862
        %875 = vmatpush.bf16.msra.mxu0 %v861
        %876 = vmatpush.bf16.msra.mxu0 %v860
        %877 = vmatpush.bf16.msra.mxu0 %v859
        %878 = vmatmul.bf16.gmra.mxu0 %v868
        %v879 = vpop.f32.mrf.mxu0
        %v880 = vadd.f32 0.0, %v879
        %v881 = vpop.f32.mrf.mxu0
        %882 = vdwg.mxu0
        %v883 = vadd.f32 %v829, %v880
        %s884 = scalar_lea.vmem %s1, 416
        %v885 = vld [vmem:[%s884] sm:$0xf]
        %v886 = vld [vmem:[%s884 + $0x4] sm:$0xf]
        %v887 = vld [vmem:[%s884 + $0x8] sm:$0xf]
        %v888 = vld [vmem:[%s884 + $0xc] sm:$0xf]
        %v889 = vld [vmem:[%s884 + $0x10] sm:$0xf]
        %v890 = vld [vmem:[%s884 + $0x14] sm:$0xf]
        %v891 = vld [vmem:[%s884 + $0x18] sm:$0xf]
        %v892 = vld [vmem:[%s884 + $0x1c] sm:$0xf]
        %v894 = vunpack.c.l.b16 %v833
        %v895 = vpack.c.b16 %v894, %v894
        %v897 = vshrl.u32 %v895, 16
        %v899 = vshll.u32 %v895, 16
        %v901 = vrot.slane %v899, 1
        %v902 = vor.u32 %v897, %v901
        %v911 = vunpack.c.l.b16 %v885
        %v912 = vunpack.c.l.b16 %v886
        %v913 = vunpack.c.l.b16 %v887
        %v914 = vunpack.c.l.b16 %v888
        %v915 = vunpack.c.l.b16 %v889
        %v916 = vunpack.c.l.b16 %v890
        %v917 = vunpack.c.l.b16 %v891
        %v918 = vunpack.c.l.b16 %v892
        %v919 = vpack.c.b16 %v912, %v911
        %v920 = vpack.c.b16 %v914, %v913
        %v921 = vpack.c.b16 %v916, %v915
        %v922 = vpack.c.b16 %v918, %v917
        %v928 = vsel %vm233, %v902, 0
        %930 = vmatpush.bf16.msra.mxu0 0
        %931 = vmatpush.bf16.msra.mxu0 0
        %932 = vmatpush.bf16.msra.mxu0 0
        %933 = vmatpush.bf16.msra.mxu0 0
        %934 = vmatpush.bf16.msra.mxu0 %v922
        %935 = vmatpush.bf16.msra.mxu0 %v921
        %936 = vmatpush.bf16.msra.mxu0 %v920
        %937 = vmatpush.bf16.msra.mxu0 %v919
        %938 = vmatmul.bf16.gmra.mxu0 %v928
        %v939 = vpop.f32.mrf.mxu0
        %v940 = vadd.f32 0.0, %v939
        %v941 = vpop.f32.mrf.mxu0
        %942 = vdwg.mxu0
        %v943 = vadd.f32 %v883, %v940
        %s944 = scalar_lea.vmem %s1, 448
        %v945 = vld [vmem:[%s944] sm:$0xf]
        %v946 = vld [vmem:[%s944 + $0x4] sm:$0xf]
        %v947 = vld [vmem:[%s944 + $0x8] sm:$0xf]
        %v948 = vld [vmem:[%s944 + $0xc] sm:$0xf]
        %v949 = vld [vmem:[%s944 + $0x10] sm:$0xf]
        %v950 = vld [vmem:[%s944 + $0x14] sm:$0xf]
        %v951 = vld [vmem:[%s944 + $0x18] sm:$0xf]
        %v952 = vld [vmem:[%s944 + $0x1c] sm:$0xf]
        %v953 = vrot.slane %v895, 1
        %v962 = vunpack.c.l.b16 %v945
        %v963 = vunpack.c.l.b16 %v946
        %v964 = vunpack.c.l.b16 %v947
        %v965 = vunpack.c.l.b16 %v948
        %v966 = vunpack.c.l.b16 %v949
        %v967 = vunpack.c.l.b16 %v950
        %v968 = vunpack.c.l.b16 %v951
        %v969 = vunpack.c.l.b16 %v952
        %v970 = vpack.c.b16 %v963, %v962
        %v971 = vpack.c.b16 %v965, %v964
        %v972 = vpack.c.b16 %v967, %v966
        %v973 = vpack.c.b16 %v969, %v968
        %v979 = vsel %vm233, %v953, 0
        %981 = vmatpush.bf16.msra.mxu0 0
        %982 = vmatpush.bf16.msra.mxu0 0
        %983 = vmatpush.bf16.msra.mxu0 0
        %984 = vmatpush.bf16.msra.mxu0 0
        %985 = vmatpush.bf16.msra.mxu0 %v973
        %986 = vmatpush.bf16.msra.mxu0 %v972
        %987 = vmatpush.bf16.msra.mxu0 %v971
        %988 = vmatpush.bf16.msra.mxu0 %v970
        %989 = vmatmul.bf16.gmra.mxu0 %v979
        %v990 = vpop.f32.mrf.mxu0
        %v991 = vadd.f32 0.0, %v990
        %v992 = vpop.f32.mrf.mxu0
        %993 = vdwg.mxu0
        %v994 = vadd.f32 %v943, %v991
        %s995 = scalar_lea.vmem %s1, 480
        %v996 = vld [vmem:[%s995] sm:$0xf]
        %v997 = vld [vmem:[%s995 + $0x4] sm:$0xf]
        %v998 = vld [vmem:[%s995 + $0x8] sm:$0xf]
        %v999 = vld [vmem:[%s995 + $0xc] sm:$0xf]
        %v1000 = vld [vmem:[%s995 + $0x10] sm:$0xf]
        %v1001 = vld [vmem:[%s995 + $0x14] sm:$0xf]
        %v1002 = vld [vmem:[%s995 + $0x18] sm:$0xf]
        %v1003 = vld [vmem:[%s995 + $0x1c] sm:$0xf]
        %v1004 = vrot.slane %v897, 1
        %v1005 = vrot.slane %v899, 2
        %v1006 = vor.u32 %v1004, %v1005
        %v1015 = vunpack.c.l.b16 %v996
        %v1016 = vunpack.c.l.b16 %v997
        %v1017 = vunpack.c.l.b16 %v998
        %v1018 = vunpack.c.l.b16 %v999
        %v1019 = vunpack.c.l.b16 %v1000
        %v1020 = vunpack.c.l.b16 %v1001
        %v1021 = vunpack.c.l.b16 %v1002
        %v1022 = vunpack.c.l.b16 %v1003
        %v1023 = vpack.c.b16 %v1016, %v1015
        %v1024 = vpack.c.b16 %v1018, %v1017
        %v1025 = vpack.c.b16 %v1020, %v1019
        %v1026 = vpack.c.b16 %v1022, %v1021
        %v1032 = vsel %vm233, %v1006, 0
        %1034 = vmatpush.bf16.msra.mxu0 0
        %1035 = vmatpush.bf16.msra.mxu0 0
        %1036 = vmatpush.bf16.msra.mxu0 0
        %1037 = vmatpush.bf16.msra.mxu0 0
        %1038 = vmatpush.bf16.msra.mxu0 %v1026
        %1039 = vmatpush.bf16.msra.mxu0 %v1025
        %1040 = vmatpush.bf16.msra.mxu0 %v1024
        %1041 = vmatpush.bf16.msra.mxu0 %v1023
        %1042 = vmatmul.bf16.gmra.mxu0 %v1032
        %v1043 = vpop.f32.mrf.mxu0
        %v1044 = vadd.f32 0.0, %v1043
        %v1045 = vpop.f32.mrf.mxu0
        %1046 = vdwg.mxu0
        %v1047 = vadd.f32 %v994, %v1044
        %v1048 = vld [vmem:[%s2] sm:$0x1]
        %v1050 = vperm.slane %v1048, 0
        %v1052 = vadd.f32 %v1047, %v1050
        %s1053 = smul.u32 %s173, 4
        %s1054 = scalar_lea.vmem [#allocation2], %s1053
        %1055 = vst [vmem:[%s1054] sm:$0x7] %v1052
        %vm1056 = vcmask 1042432
        %v1057 = vsel %vm1056, %v1052, 0.0
        %v1058 = vrot.slane %v1057, 4
        %v1059 = vadd.f32 %v1057, %v1058
        %v1060 = vrot.slane %v1059, 2
        %v1061 = vadd.f32 %v1059, %v1060
        %v1062 = vrot.slane %v1061, 1
        %v1063 = vadd.f32 %v1061, %v1062
        %v1064 = vadd.f32 %v178, %v1063
      $region37: #{discriminator_forward.8} parent=31 // loop_footer
        %s177 = sadd.s32 1, %s173
      $region38: #{discriminator_forward.8} parent=31 // loop_footer_branch
        %172 = sbr.rel target = $region34
      $region39: #{discriminator_forward.8} parent=31 // loop_exit
        _
      %v1065 = vmul.f32 %v178, 0.11111111
      loop: start=0, step=1, limit=3
      $region40: #{discriminator_forward.8} parent=31 // loop_pre_header
        _
      $region41: #{discriminator_forward.8} parent=31 // loop_header
        %s1067 = sphi 0, %s1071
        %p1068 = scmp.ge.s32.totalorder %s1067, 3
        %v1072 = vphi 0.0, %v1086
      $region42: #{discriminator_forward.8} parent=31 // loop_header_branch
        %1070 = sbr.rel (%p1068) target = $region46
      $region43: #{discriminator_forward.8} parent=31 // loop_body
        %s1073 = smul.u32 %s1067, 4
        %s1074 = scalar_lea.vmem [#allocation2], %s1073
        %v1075 = vld [vmem:[%s1074] sm:$0x7]
        %v1076 = vsub.f32 %v1075, %v1065
        %v1077 = vmul.f32 %v1076, %v1076
        %vm1078 = vcmask 1042432
        %v1079 = vsel %vm1078, %v1077, 0.0
        %v1080 = vrot.slane %v1079, 4
        %v1081 = vadd.f32 %v1079, %v1080
        %v1082 = vrot.slane %v1081, 2
        %v1083 = vadd.f32 %v1081, %v1082
        %v1084 = vrot.slane %v1083, 1
        %v1085 = vadd.f32 %v1083, %v1084
        %v1086 = vadd.f32 %v1072, %v1085
      $region44: #{discriminator_forward.8} parent=31 // loop_footer
        %s1071 = sadd.s32 1, %s1067
      $region45: #{discriminator_forward.8} parent=31 // loop_footer_branch
        %1066 = sbr.rel target = $region41
      $region46: #{discriminator_forward.8} parent=31 // loop_exit
        _
      %v1087 = vmul.f32 %v1072, 0.11111111
      %v1088 = vadd.f32 %v1087, 1e-05
      %v1089 = vrsqrt.pop %v1088
      %v1090 = vmul.f32 %v1089, %v1088
      %v1091 = vmul.f32 %v1090, %v1089
      %v1092 = vmul.f32 0.5, %v1091
      %v1093 = vsub.f32 1.5, %v1092
      %v1094 = vmul.f32 %v1089, %v1093
      %vm1095 = vweird.f32 %v1088
      %vm1096 = vweird.f32 %v1089
      %vm1097 = vmor %vm1095, %vm1096
      %v1098 = vsel %vm1097, %v1089, %v1094
      loop: start=0, step=1, limit=3
      $region47: #{discriminator_forward.8} parent=31 // loop_pre_header
        _
      $region48: #{discriminator_forward.8} parent=31 // loop_header
        %s1100 = sphi 0, %s1104
        %p1101 = scmp.ge.s32.totalorder %s1100, 3
      $region49: #{discriminator_forward.8} parent=31 // loop_header_branch
        %1103 = sbr.rel (%p1101) target = $region53
      $region50: #{discriminator_forward.8} parent=31 // loop_body
        %s1105 = smul.u32 %s1100, 4
        %s1106 = scalar_lea.vmem [#allocation2], %s1105
        %v1107 = vld [vmem:[%s1106] sm:$0x7]
        %v1108 = vsub.f32 %v1107, %v1065
        %v1109 = vmul.f32 %v1108, %v1098
        %vm1110 = vcmp.ge.f32.partialorder %v1109, 0.0
        %v1111 = vmul.f32 %v1109, 0.2
        %v1112 = vsel %vm1110, %v1109, %v1111
        %v1113 = vpack.c.bf16 %v1112, %v1112
        %s1114 = smul.addr %s1100, 2
        %s1115 = scalar_lea.vmem %s170, %s1114
        %vm1116 = vcmask 1041408
        %vm1117 = vsmask.f32 1280
        %vm1118 = vmand %vm1116, %vm1117
        %v1119 = vld [vmem:[%s1115] sm:$0x3]
        %v1120 = vsel %vm1118, %v1113, %v1119
        %1121 = vst [vmem:[%s1115] sm:$0x3] %v1120
      $region51: #{discriminator_forward.8} parent=31 // loop_footer
        %s1104 = sadd.s32 1, %s1100
      $region52: #{discriminator_forward.8} parent=31 // loop_footer_branch
        %1099 = sbr.rel target = $region48
      $region53: #{discriminator_forward.8} parent=31 // loop_exit
        _
      %p1122 = scmp.lt.s32.totalorder %s14, 1
      %s1123 = scalar_select %p1122, %s14, 1
      %s1124 = smul.addr %s1123, 3
      %s1125 = smul.addr %s1124, 2
      %s1126 = scalar_lea.vmem %s3, %s1125
      // Predicated region
      $region54: #{discriminator_forward.8} parent=31 // pred_check
        %p1127 = pneg %p100
      $region55: #{discriminator_forward.8} parent=31 // pred_check_branch
        %1129 = sbr.rel (%p1127) target = $region57
      $region56: #{discriminator_forward.8} parent=31 // pred_region
        _
      $region57: #{discriminator_forward.8} parent=31 // pred_fallthru
        _
    $region32: #{discriminator_forward.8} parent=5 // pred_fallthru
      _
    %p1130 = scmp.le.s32.totalorder 2, %s9
    // Predicated region
    $region58: #{discriminator_forward.8} parent=5 // pred_check
      %p1131 = pneg %p1130
    $region59: #{discriminator_forward.8} parent=5 // pred_check_branch
      %1133 = sbr.rel (%p1131) target = $region61
    $region60: #{discriminator_forward.8} parent=5 // pred_region
      %s1134 = ssub.s32 %s9, 2
      // Predicated region
      $region62: #{discriminator_forward.8} parent=60 // pred_check
        %p1135 = pneg %p106
      $region63: #{discriminator_forward.8} parent=60 // pred_check_branch
        %1137 = sbr.rel (%p1135) target = $region65
      $region64: #{discriminator_forward.8} parent=60 // pred_region
        %p1138 = scmp.lt.s32.totalorder %s15, 1
        %s1139 = scalar_select %p1138, %s15, 1
        %s1140 = smul.addr %s1139, 3
        %s1141 = smul.addr %s1140, 2
        %s1142 = scalar_lea.vmem %s3, %s1141
      $region65: #{discriminator_forward.8} parent=60 // pred_fallthru
        _
    $region61: #{discriminator_forward.8} parent=5 // pred_fallthru
      _
  $region6: #{discriminator_forward.8} parent=0 // loop_footer
    %s13 = sadd.s32 1, %s9
  $region7: #{discriminator_forward.8} parent=0 // loop_footer_branch
    %8 = sbr.rel target = $region3
  $region8: #{discriminator_forward.8} parent=0 // loop_exit
    _

// kernel: discriminator_forward.9
$region0: #{discriminator_forward.9}
  #allocation0 [shape = 'u32[]', space=smem, size = 0x4, offset = 0x4, fixed_abs, tag = 'smem constant byte address 0x4 - core index']
  #allocation1 [shape = 'u32[72,128]{1,0:T(1,128)}', space=vmem, size = 0x9000, scoped, tag = 'internal scratch']
  %s0 = inlined_call_operand.vmem [shape: bf16[2,5,5,128], index: 0, kind: input, shape index: {}]
  %s1 = inlined_call_operand.vmem [shape: bf16[16,128,128], index: 1, kind: input, shape index: {}]
  %s2 = inlined_call_operand.vmem [shape: f32[1,128], index: 2, kind: input, shape index: {}]
  %s3 = inlined_call_operand.vmem [shape: f32[2,2,2,128], index: 3, kind: output, shape index: {}]
  %s4 = sld [smem:[#allocation0]]
  $region52: #{discriminator_forward.9} parent=0
    _
  %s6 = ssub.s32 1, %s4
  %s7 = scalar_select 0, %s6, %s4
  loop: start=0, step=1, limit=4
  $region2: #{discriminator_forward.9} parent=0 // loop_pre_header
    _
  $region3: #{discriminator_forward.9} parent=0 // loop_header
    %s9 = sphi 0, %s13
    %p10 = scmp.ge.s32.totalorder %s9, 4
    %s19 = sphi 0, %s21
    %s22 = sphi 0, %s19
    %s23 = sphi 0, %s22
    %s39 = sphi 0, %s23
    %s43 = sphi 0, %s43
    %s45 = sphi 0, %s43
    %s46 = sphi 0, %s45
    %s60 = sphi 0, %s46
    %s64 = sphi 0, %s64
    %s66 = sphi 0, %s64
    %s67 = sphi 0, %s66
    %s81 = sphi 0, %s67
    %s87 = sphi 0, %s89
    %s90 = sphi 0, %s87
    %s91 = sphi 0, %s90
    %s107 = sphi 0, %s91
  $region4: #{discriminator_forward.9} parent=0 // loop_header_branch
    %12 = sbr.rel (%p10) target = $region8
  $region5: #{discriminator_forward.9} parent=0 // loop_body
    %s14 = ssub.s32 %s9, 1
    %s15 = ssub.s32 %s9, 2
    %s16 = sadd.s32 %s9, 1
    %s17 = ssub.s32 %s9, %s16
    %p18 = scmp.eq.s32.totalorder %s17, 0
    %s20 = sadd.s32 %s19, 1
    %s21 = scalar_select %p18, %s19, %s20
    %p24 = pneg %p18
    %p25 = scmp.eq.s32.totalorder %s9, 1
    %p26 = por %p24, %p25
    %p27 = scmp.ne.s32.totalorder %s19, %s22
    %p28 = scmp.eq.s32.totalorder %s9, 0
    %p29 = por %p27, %p28
    %p30 = scmp.ne.s32.totalorder %s19, %s22
    %p31 = scmp.eq.s32.totalorder %s14, 1
    %p32 = por %p30, %p31
    %p33 = scmp.ne.s32.totalorder %s22, %s23
    %p34 = scmp.eq.s32.totalorder %s14, 0
    %p35 = por %p33, %p34
    %p36 = scmp.ne.s32.totalorder %s22, %s23
    %p37 = scmp.eq.s32.totalorder %s15, 1
    %p38 = por %p36, %p37
    %p40 = scmp.ne.s32.totalorder %s23, %s39
    %p41 = scmp.eq.s32.totalorder %s15, 0
    %p42 = por %p40, %p41
    %s44 = sadd.s32 %s43, 1
    %p47 = scmp.eq.s32.totalorder %s9, 1
    %p48 = scmp.ne.s32.totalorder %s43, %s45
    %p49 = scmp.eq.s32.totalorder %s9, 0
    %p50 = por %p48, %p49
    %p51 = scmp.ne.s32.totalorder %s43, %s45
    %p52 = scmp.eq.s32.totalorder %s14, 1
    %p53 = por %p51, %p52
    %p54 = scmp.ne.s32.totalorder %s45, %s46
    %p55 = scmp.eq.s32.totalorder %s14, 0
    %p56 = por %p54, %p55
    %p57 = scmp.ne.s32.totalorder %s45, %s46
    %p58 = scmp.eq.s32.totalorder %s15, 1
    %p59 = por %p57, %p58
    %p61 = scmp.ne.s32.totalorder %s46, %s60
    %p62 = scmp.eq.s32.totalorder %s15, 0
    %p63 = por %p61, %p62
    %s65 = sadd.s32 %s64, 1
    %p68 = scmp.eq.s32.totalorder %s9, 1
    %p69 = scmp.ne.s32.totalorder %s64, %s66
    %p70 = scmp.eq.s32.totalorder %s9, 0
    %p71 = por %p69, %p70
    %p72 = scmp.ne.s32.totalorder %s64, %s66
    %p73 = scmp.eq.s32.totalorder %s14, 1
    %p74 = por %p72, %p73
    %p75 = scmp.ne.s32.totalorder %s66, %s67
    %p76 = scmp.eq.s32.totalorder %s14, 0
    %p77 = por %p75, %p76
    %p78 = scmp.ne.s32.totalorder %s66, %s67
    %p79 = scmp.eq.s32.totalorder %s15, 1
    %p80 = por %p78, %p79
    %p82 = scmp.ne.s32.totalorder %s67, %s81
    %p83 = scmp.eq.s32.totalorder %s15, 0
    %p84 = por %p82, %p83
    %s85 = ssub.s32 %s9, %s16
    %p86 = scmp.eq.s32.totalorder %s85, 0
    %s88 = sadd.s32 %s87, 1
    %s89 = scalar_select %p86, %s87, %s88
    %p92 = pneg %p86
    %p93 = scmp.eq.s32.totalorder %s9, 1
    %p94 = por %p92, %p93
    %p95 = scmp.ne.s32.totalorder %s87, %s90
    %p96 = scmp.eq.s32.totalorder %s9, 0
    %p97 = por %p95, %p96
    %p98 = scmp.ne.s32.totalorder %s87, %s90
    %p99 = scmp.eq.s32.totalorder %s14, 1
    %p100 = por %p98, %p99
    %p101 = scmp.ne.s32.totalorder %s90, %s91
    %p102 = scmp.eq.s32.totalorder %s14, 0
    %p103 = por %p101, %p102
    %p104 = scmp.ne.s32.totalorder %s90, %s91
    %p105 = scmp.eq.s32.totalorder %s15, 1
    %p106 = por %p104, %p105
    %p108 = scmp.ne.s32.totalorder %s91, %s107
    %p109 = scmp.eq.s32.totalorder %s15, 0
    %p110 = por %p108, %p109
    %p111 = scmp.le.s32.totalorder 1, %s9
    %p112 = scmp.lt.s32.totalorder %s9, 3
    %p113 = pnand %p111, %p112
    %p114 = pneg %p113
    // Predicated region
    $region9: #{discriminator_forward.9} parent=5 // pred_check
      _
    $region10: #{discriminator_forward.9} parent=5 // pred_check_branch
      %116 = sbr.rel (%p113) target = $region12
    $region11: #{discriminator_forward.9} parent=5 // pred_region
      %s117 = ssub.s32 %s9, 1
      // Predicated region
      $region13: #{discriminator_forward.9} parent=11 // pred_check
        %p118 = pneg %p56
      $region14: #{discriminator_forward.9} parent=11 // pred_check_branch
        %120 = sbr.rel (%p118) target = $region16
      $region15: #{discriminator_forward.9} parent=11 // pred_region
        _
      $region16: #{discriminator_forward.9} parent=11 // pred_fallthru
        _
      // Predicated region
      $region17: #{discriminator_forward.9} parent=11 // pred_check
        %p121 = pneg %p77
      $region18: #{discriminator_forward.9} parent=11 // pred_check_branch
        %123 = sbr.rel (%p121) target = $region20
      $region19: #{discriminator_forward.9} parent=11 // pred_region
        _
      $region20: #{discriminator_forward.9} parent=11 // pred_fallthru
        _
    $region12: #{discriminator_forward.9} parent=5 // pred_fallthru
      _
    %p124 = scmp.lt.s32.totalorder %s9, 2
    // Predicated region
    $region21: #{discriminator_forward.9} parent=5 // pred_check
      %p125 = pneg %p124
    $region22: #{discriminator_forward.9} parent=5 // pred_check_branch
      %127 = sbr.rel (%p125) target = $region24
    $region23: #{discriminator_forward.9} parent=5 // pred_region
      // Predicated region
      $region25: #{discriminator_forward.9} parent=23 // pred_check
        %p128 = pneg %p29
      $region26: #{discriminator_forward.9} parent=23 // pred_check_branch
        %130 = sbr.rel (%p128) target = $region28
      $region27: #{discriminator_forward.9} parent=23 // pred_region
        %p131 = scmp.lt.s32.totalorder %s9, 1
        %s132 = scalar_select %p131, %s9, 1
        %s133 = smul.addr %s132, 5
        %s134 = smul.addr %s133, 4
        %s135 = scalar_lea.vmem %s0, %s134
      $region28: #{discriminator_forward.9} parent=23 // pred_fallthru
        _
    $region24: #{discriminator_forward.9} parent=5 // pred_fallthru
      _
    %p136 = scmp.le.s32.totalorder 1, %s9
    %p137 = scmp.lt.s32.totalorder %s9, 3
    %p138 = pnand %p136, %p137
    %p139 = pneg %p138
    // Predicated region
    $region29: #{discriminator_forward.9} parent=5 // pred_check
      _
    $region30: #{discriminator_forward.9} parent=5 // pred_check_branch
      %141 = sbr.rel (%p138) target = $region32
    $region31: #{discriminator_forward.9} parent=5 // pred_region
      %s142 = ssub.s32 %s9, 1
      %p143 = scmp.lt.s32.totalorder %s14, 1
      %s144 = scalar_select %p143, %s14, 1
      %s145 = smul.addr %s144, 5
      %s146 = smul.addr %s145, 4
      %s147 = scalar_lea.vmem %s0, %s146
      %p148 = pneg %p35
      %p149 = pneg %p32
      %p150 = pneg %p56
      %p151 = pneg %p53
      %p152 = pneg %p77
      %p153 = pneg %p74
      %p154 = pneg %p103
      %p155 = pneg %p100
      %p156 = scmp.lt.s32.totalorder %s14, 1
      %s157 = scalar_select %p156, %s14, 1
      %s158 = smul.addr %s157, 2
      %s159 = smul.addr %s158, 2
      %s160 = scalar_lea.vmem %s3, %s159
      %p161 = scmp.lt.s32.totalorder %s14, 1
      %s162 = scalar_select %p161, %s14, 1
      %s163 = smul.addr %s162, 5
      %s164 = smul.addr %s163, 4
      %s165 = scalar_lea.vmem %s0, %s164
      %p166 = scmp.lt.s32.totalorder %s14, 1
      %s167 = scalar_select %p166, %s14, 1
      %s168 = smul.addr %s167, 2
      %s169 = smul.addr %s168, 2
      %s170 = scalar_lea.vmem %s3, %s169
      loop: start=0, step=1, limit=2
      $region33: #{discriminator_forward.9} parent=31 // loop_pre_header
        _
      $region34: #{discriminator_forward.9} parent=31 // loop_header
        %s172 = sphi 0, %s176
        %p173 = scmp.ge.s32.totalorder %s172, 2
      $region35: #{discriminator_forward.9} parent=31 // loop_header_branch
        %175 = sbr.rel (%p173) target = $region39
      $region36: #{discriminator_forward.9} parent=31 // loop_body
        %s177 = smul.addr %s172, 4
        %s178 = scalar_lea.vmem %s165, %s177
        %v179 = vld [vmem:[%s178] sm:$0x7]
        %v180 = vld [vmem:[%s1] sm:$0xf]
        %v181 = vld [vmem:[%s1 + $0x4] sm:$0xf]
        %v182 = vld [vmem:[%s1 + $0x8] sm:$0xf]
        %v183 = vld [vmem:[%s1 + $0xc] sm:$0xf]
        %v184 = vld [vmem:[%s1 + $0x10] sm:$0xf]
        %v185 = vld [vmem:[%s1 + $0x14] sm:$0xf]
        %v186 = vld [vmem:[%s1 + $0x18] sm:$0xf]
        %v187 = vld [vmem:[%s1 + $0x1c] sm:$0xf]
        %v188 = vld [vmem:[%s1 + $0x20] sm:$0xf]
        %v189 = vld [vmem:[%s1 + $0x24] sm:$0xf]
        %v190 = vld [vmem:[%s1 + $0x28] sm:$0xf]
        %v191 = vld [vmem:[%s1 + $0x2c] sm:$0xf]
        %v192 = vld [vmem:[%s1 + $0x30] sm:$0xf]
        %v193 = vld [vmem:[%s1 + $0x34] sm:$0xf]
        %v194 = vld [vmem:[%s1 + $0x38] sm:$0xf]
        %v195 = vld [vmem:[%s1 + $0x3c] sm:$0xf]
        %s196 = scalar_lea.vmem %s1, 64
        %v197 = vld [vmem:[%s196] sm:$0xf]
        %v198 = vld [vmem:[%s196 + $0x4] sm:$0xf]
        %v199 = vld [vmem:[%s196 + $0x8] sm:$0xf]
        %v200 = vld [vmem:[%s196 + $0xc] sm:$0xf]
        %v201 = vld [vmem:[%s196 + $0x10] sm:$0xf]
        %v202 = vld [vmem:[%s196 + $0x14] sm:$0xf]
        %v203 = vld [vmem:[%s196 + $0x18] sm:$0xf]
        %v204 = vld [vmem:[%s196 + $0x1c] sm:$0xf]
        %v205 = vld [vmem:[%s196 + $0x20] sm:$0xf]
        %v206 = vld [vmem:[%s196 + $0x24] sm:$0xf]
        %v207 = vld [vmem:[%s196 + $0x28] sm:$0xf]
        %v208 = vld [vmem:[%s196 + $0x2c] sm:$0xf]
        %v209 = vld [vmem:[%s196 + $0x30] sm:$0xf]
        %v210 = vld [vmem:[%s196 + $0x34] sm:$0xf]
        %v211 = vld [vmem:[%s196 + $0x38] sm:$0xf]
        %v212 = vld [vmem:[%s196 + $0x3c] sm:$0xf]
        %v214 = vunpack.c.l.b16 %v179
        %v215 = vpack.c.b16 %v214, %v214
        %v217 = vshrl.u32 %v215, 16
        %v219 = vshll.u32 %v215, 16
        %v221 = vrot.slane %v219, 1
        %v222 = vor.u32 %v217, %v221
        %v240 = vunpack.c.l.b16 %v197
        %v241 = vunpack.c.l.b16 %v198
        %v242 = vunpack.c.l.b16 %v199
        %v243 = vunpack.c.l.b16 %v200
        %v244 = vunpack.c.l.b16 %v201
        %v245 = vunpack.c.l.b16 %v202
        %v246 = vunpack.c.l.b16 %v203
        %v247 = vunpack.c.l.b16 %v204
        %v248 = vunpack.c.l.b16 %v205
        %v249 = vunpack.c.l.b16 %v206
        %v250 = vunpack.c.l.b16 %v207
        %v251 = vunpack.c.l.b16 %v208
        %v252 = vunpack.c.l.b16 %v209
        %v253 = vunpack.c.l.b16 %v210
        %v254 = vunpack.c.l.b16 %v211
        %v255 = vunpack.c.l.b16 %v212
        %v256 = vpack.c.b16 %v241, %v240
        %v257 = vpack.c.b16 %v243, %v242
        %v258 = vpack.c.b16 %v245, %v244
        %v259 = vpack.c.b16 %v247, %v246
        %v260 = vpack.c.b16 %v249, %v248
        %v261 = vpack.c.b16 %v251, %v250
        %v262 = vpack.c.b16 %v253, %v252
        %v263 = vpack.c.b16 %v255, %v254
        %272 = vmatpush.bf16.msra.mxu0 %v263
        %273 = vmatpush.bf16.msra.mxu0 %v262
        %274 = vmatpush.bf16.msra.mxu0 %v261
        %275 = vmatpush.bf16.msra.mxu0 %v260
        %276 = vmatpush.bf16.msra.mxu0 %v259
        %277 = vmatpush.bf16.msra.mxu0 %v258
        %278 = vmatpush.bf16.msra.mxu0 %v257
        %279 = vmatpush.bf16.msra.mxu0 %v256
        %280 = vmatmul.bf16.gmra.mxu0 %v222
        %v281 = vpop.f32.mrf.mxu0
        %v282 = vadd.f32 0.0, %v281
        %v283 = vpop.f32.mrf.mxu0
        %284 = vdwg.mxu0
        %v301 = vunpack.c.l.b16 %v180
        %v302 = vunpack.c.l.b16 %v181
        %v303 = vunpack.c.l.b16 %v182
        %v304 = vunpack.c.l.b16 %v183
        %v305 = vunpack.c.l.b16 %v184
        %v306 = vunpack.c.l.b16 %v185
        %v307 = vunpack.c.l.b16 %v186
        %v308 = vunpack.c.l.b16 %v187
        %v309 = vunpack.c.l.b16 %v188
        %v310 = vunpack.c.l.b16 %v189
        %v311 = vunpack.c.l.b16 %v190
        %v312 = vunpack.c.l.b16 %v191
        %v313 = vunpack.c.l.b16 %v192
        %v314 = vunpack.c.l.b16 %v193
        %v315 = vunpack.c.l.b16 %v194
        %v316 = vunpack.c.l.b16 %v195
        %v317 = vpack.c.b16 %v302, %v301
        %v318 = vpack.c.b16 %v304, %v303
        %v319 = vpack.c.b16 %v306, %v305
        %v320 = vpack.c.b16 %v308, %v307
        %v321 = vpack.c.b16 %v310, %v309
        %v322 = vpack.c.b16 %v312, %v311
        %v323 = vpack.c.b16 %v314, %v313
        %v324 = vpack.c.b16 %v316, %v315
        %333 = vmatpush.bf16.msra.mxu0 %v324
        %334 = vmatpush.bf16.msra.mxu0 %v323
        %335 = vmatpush.bf16.msra.mxu0 %v322
        %336 = vmatpush.bf16.msra.mxu0 %v321
        %337 = vmatpush.bf16.msra.mxu0 %v320
        %338 = vmatpush.bf16.msra.mxu0 %v319
        %339 = vmatpush.bf16.msra.mxu0 %v318
        %340 = vmatpush.bf16.msra.mxu0 %v317
        %341 = vmatmul.bf16.gmra.mxu0 %v179
        %v342 = vpop.f32.mrf.mxu0
        %v343 = vadd.f32 %v282, %v342
        %v344 = vpop.f32.mrf.mxu0
        %345 = vdwg.mxu0
        %s346 = scalar_lea.vmem %s1, 128
        %v347 = vld [vmem:[%s346] sm:$0xf]
        %v348 = vld [vmem:[%s346 + $0x4] sm:$0xf]
        %v349 = vld [vmem:[%s346 + $0x8] sm:$0xf]
        %v350 = vld [vmem:[%s346 + $0xc] sm:$0xf]
        %v351 = vld [vmem:[%s346 + $0x10] sm:$0xf]
        %v352 = vld [vmem:[%s346 + $0x14] sm:$0xf]
        %v353 = vld [vmem:[%s346 + $0x18] sm:$0xf]
        %v354 = vld [vmem:[%s346 + $0x1c] sm:$0xf]
        %v355 = vld [vmem:[%s346 + $0x20] sm:$0xf]
        %v356 = vld [vmem:[%s346 + $0x24] sm:$0xf]
        %v357 = vld [vmem:[%s346 + $0x28] sm:$0xf]
        %v358 = vld [vmem:[%s346 + $0x2c] sm:$0xf]
        %v359 = vld [vmem:[%s346 + $0x30] sm:$0xf]
        %v360 = vld [vmem:[%s346 + $0x34] sm:$0xf]
        %v361 = vld [vmem:[%s346 + $0x38] sm:$0xf]
        %v362 = vld [vmem:[%s346 + $0x3c] sm:$0xf]
        %v363 = vrot.slane %v215, 1
        %v381 = vunpack.c.l.b16 %v347
        %v382 = vunpack.c.l.b16 %v348
        %v383 = vunpack.c.l.b16 %v349
        %v384 = vunpack.c.l.b16 %v350
        %v385 = vunpack.c.l.b16 %v351
        %v386 = vunpack.c.l.b16 %v352
        %v387 = vunpack.c.l.b16 %v353
        %v388 = vunpack.c.l.b16 %v354
        %v389 = vunpack.c.l.b16 %v355
        %v390 = vunpack.c.l.b16 %v356
        %v391 = vunpack.c.l.b16 %v357
        %v392 = vunpack.c.l.b16 %v358
        %v393 = vunpack.c.l.b16 %v359
        %v394 = vunpack.c.l.b16 %v360
        %v395 = vunpack.c.l.b16 %v361
        %v396 = vunpack.c.l.b16 %v362
        %v397 = vpack.c.b16 %v382, %v381
        %v398 = vpack.c.b16 %v384, %v383
        %v399 = vpack.c.b16 %v386, %v385
        %v400 = vpack.c.b16 %v388, %v387
        %v401 = vpack.c.b16 %v390, %v389
        %v402 = vpack.c.b16 %v392, %v391
        %v403 = vpack.c.b16 %v394, %v393
        %v404 = vpack.c.b16 %v396, %v395
        %413 = vmatpush.bf16.msra.mxu0 %v404
        %414 = vmatpush.bf16.msra.mxu0 %v403
        %415 = vmatpush.bf16.msra.mxu0 %v402
        %416 = vmatpush.bf16.msra.mxu0 %v401
        %417 = vmatpush.bf16.msra.mxu0 %v400
        %418 = vmatpush.bf16.msra.mxu0 %v399
        %419 = vmatpush.bf16.msra.mxu0 %v398
        %420 = vmatpush.bf16.msra.mxu0 %v397
        %421 = vmatmul.bf16.gmra.mxu0 %v363
        %v422 = vpop.f32.mrf.mxu0
        %v423 = vadd.f32 0.0, %v422
        %v424 = vpop.f32.mrf.mxu0
        %425 = vdwg.mxu0
        %v426 = vadd.f32 %v343, %v423
        %s427 = scalar_lea.vmem %s1, 192
        %v428 = vld [vmem:[%s427] sm:$0xf]
        %v429 = vld [vmem:[%s427 + $0x4] sm:$0xf]
        %v430 = vld [vmem:[%s427 + $0x8] sm:$0xf]
        %v431 = vld [vmem:[%s427 + $0xc] sm:$0xf]
        %v432 = vld [vmem:[%s427 + $0x10] sm:$0xf]
        %v433 = vld [vmem:[%s427 + $0x14] sm:$0xf]
        %v434 = vld [vmem:[%s427 + $0x18] sm:$0xf]
        %v435 = vld [vmem:[%s427 + $0x1c] sm:$0xf]
        %v436 = vld [vmem:[%s427 + $0x20] sm:$0xf]
        %v437 = vld [vmem:[%s427 + $0x24] sm:$0xf]
        %v438 = vld [vmem:[%s427 + $0x28] sm:$0xf]
        %v439 = vld [vmem:[%s427 + $0x2c] sm:$0xf]
        %v440 = vld [vmem:[%s427 + $0x30] sm:$0xf]
        %v441 = vld [vmem:[%s427 + $0x34] sm:$0xf]
        %v442 = vld [vmem:[%s427 + $0x38] sm:$0xf]
        %v443 = vld [vmem:[%s427 + $0x3c] sm:$0xf]
        %v444 = vrot.slane %v217, 1
        %v445 = vrot.slane %v219, 2
        %v446 = vor.u32 %v444, %v445
        %v464 = vunpack.c.l.b16 %v428
        %v465 = vunpack.c.l.b16 %v429
        %v466 = vunpack.c.l.b16 %v430
        %v467 = vunpack.c.l.b16 %v431
        %v468 = vunpack.c.l.b16 %v432
        %v469 = vunpack.c.l.b16 %v433
        %v470 = vunpack.c.l.b16 %v434
        %v471 = vunpack.c.l.b16 %v435
        %v472 = vunpack.c.l.b16 %v436
        %v473 = vunpack.c.l.b16 %v437
        %v474 = vunpack.c.l.b16 %v438
        %v475 = vunpack.c.l.b16 %v439
        %v476 = vunpack.c.l.b16 %v440
        %v477 = vunpack.c.l.b16 %v441
        %v478 = vunpack.c.l.b16 %v442
        %v479 = vunpack.c.l.b16 %v443
        %v480 = vpack.c.b16 %v465, %v464
        %v481 = vpack.c.b16 %v467, %v466
        %v482 = vpack.c.b16 %v469, %v468
        %v483 = vpack.c.b16 %v471, %v470
        %v484 = vpack.c.b16 %v473, %v472
        %v485 = vpack.c.b16 %v475, %v474
        %v486 = vpack.c.b16 %v477, %v476
        %v487 = vpack.c.b16 %v479, %v478
        %496 = vmatpush.bf16.msra.mxu0 %v487
        %497 = vmatpush.bf16.msra.mxu0 %v486
        %498 = vmatpush.bf16.msra.mxu0 %v485
        %499 = vmatpush.bf16.msra.mxu0 %v484
        %500 = vmatpush.bf16.msra.mxu0 %v483
        %501 = vmatpush.bf16.msra.mxu0 %v482
        %502 = vmatpush.bf16.msra.mxu0 %v481
        %503 = vmatpush.bf16.msra.mxu0 %v480
        %504 = vmatmul.bf16.gmra.mxu0 %v446
        %v505 = vpop.f32.mrf.mxu0
        %v506 = vadd.f32 0.0, %v505
        %v507 = vpop.f32.mrf.mxu0
        %508 = vdwg.mxu0
        %v509 = vadd.f32 %v426, %v506
        %s510 = sadd.s32 %s172, 1
        %s511 = smul.addr %s510, 4
        %s512 = scalar_lea.vmem %s165, %s511
        %v513 = vld [vmem:[%s512] sm:$0x7]
        %s514 = scalar_lea.vmem %s1, 256
        %v515 = vld [vmem:[%s514] sm:$0xf]
        %v516 = vld [vmem:[%s514 + $0x4] sm:$0xf]
        %v517 = vld [vmem:[%s514 + $0x8] sm:$0xf]
        %v518 = vld [vmem:[%s514 + $0xc] sm:$0xf]
        %v519 = vld [vmem:[%s514 + $0x10] sm:$0xf]
        %v520 = vld [vmem:[%s514 + $0x14] sm:$0xf]
        %v521 = vld [vmem:[%s514 + $0x18] sm:$0xf]
        %v522 = vld [vmem:[%s514 + $0x1c] sm:$0xf]
        %v523 = vld [vmem:[%s514 + $0x20] sm:$0xf]
        %v524 = vld [vmem:[%s514 + $0x24] sm:$0xf]
        %v525 = vld [vmem:[%s514 + $0x28] sm:$0xf]
        %v526 = vld [vmem:[%s514 + $0x2c] sm:$0xf]
        %v527 = vld [vmem:[%s514 + $0x30] sm:$0xf]
        %v528 = vld [vmem:[%s514 + $0x34] sm:$0xf]
        %v529 = vld [vmem:[%s514 + $0x38] sm:$0xf]
        %v530 = vld [vmem:[%s514 + $0x3c] sm:$0xf]
        %v547 = vunpack.c.l.b16 %v515
        %v548 = vunpack.c.l.b16 %v516
        %v549 = vunpack.c.l.b16 %v517
        %v550 = vunpack.c.l.b16 %v518
        %v551 = vunpack.c.l.b16 %v519
        %v552 = vunpack.c.l.b16 %v520
        %v553 = vunpack.c.l.b16 %v521
        %v554 = vunpack.c.l.b16 %v522
        %v555 = vunpack.c.l.b16 %v523
        %v556 = vunpack.c.l.b16 %v524
        %v557 = vunpack.c.l.b16 %v525
        %v558 = vunpack.c.l.b16 %v526
        %v559 = vunpack.c.l.b16 %v527
        %v560 = vunpack.c.l.b16 %v528
        %v561 = vunpack.c.l.b16 %v529
        %v562 = vunpack.c.l.b16 %v530
        %v563 = vpack.c.b16 %v548, %v547
        %v564 = vpack.c.b16 %v550, %v549
        %v565 = vpack.c.b16 %v552, %v551
        %v566 = vpack.c.b16 %v554, %v553
        %v567 = vpack.c.b16 %v556, %v555
        %v568 = vpack.c.b16 %v558, %v557
        %v569 = vpack.c.b16 %v560, %v559
        %v570 = vpack.c.b16 %v562, %v561
        %579 = vmatpush.bf16.msra.mxu0 %v570
        %580 = vmatpush.bf16.msra.mxu0 %v569
        %581 = vmatpush.bf16.msra.mxu0 %v568
        %582 = vmatpush.bf16.msra.mxu0 %v567
        %583 = vmatpush.bf16.msra.mxu0 %v566
        %584 = vmatpush.bf16.msra.mxu0 %v565
        %585 = vmatpush.bf16.msra.mxu0 %v564
        %586 = vmatpush.bf16.msra.mxu0 %v563
        %587 = vmatmul.bf16.gmra.mxu0 %v513
        %v588 = vpop.f32.mrf.mxu0
        %v589 = vadd.f32 0.0, %v588
        %v590 = vpop.f32.mrf.mxu0
        %591 = vdwg.mxu0
        %v592 = vadd.f32 %v509, %v589
        %s593 = scalar_lea.vmem %s1, 320
        %v594 = vld [vmem:[%s593] sm:$0xf]
        %v595 = vld [vmem:[%s593 + $0x4] sm:$0xf]
        %v596 = vld [vmem:[%s593 + $0x8] sm:$0xf]
        %v597 = vld [vmem:[%s593 + $0xc] sm:$0xf]
        %v598 = vld [vmem:[%s593 + $0x10] sm:$0xf]
        %v599 = vld [vmem:[%s593 + $0x14] sm:$0xf]
        %v600 = vld [vmem:[%s593 + $0x18] sm:$0xf]
        %v601 = vld [vmem:[%s593 + $0x1c] sm:$0xf]
        %v602 = vld [vmem:[%s593 + $0x20] sm:$0xf]
        %v603 = vld [vmem:[%s593 + $0x24] sm:$0xf]
        %v604 = vld [vmem:[%s593 + $0x28] sm:$0xf]
        %v605 = vld [vmem:[%s593 + $0x2c] sm:$0xf]
        %v606 = vld [vmem:[%s593 + $0x30] sm:$0xf]
        %v607 = vld [vmem:[%s593 + $0x34] sm:$0xf]
        %v608 = vld [vmem:[%s593 + $0x38] sm:$0xf]
        %v609 = vld [vmem:[%s593 + $0x3c] sm:$0xf]
        %v611 = vunpack.c.l.b16 %v513
        %v612 = vpack.c.b16 %v611, %v611
        %v614 = vshrl.u32 %v612, 16
        %v616 = vshll.u32 %v612, 16
        %v618 = vrot.slane %v616, 1
        %v619 = vor.u32 %v614, %v618
        %v637 = vunpack.c.l.b16 %v594
        %v638 = vunpack.c.l.b16 %v595
        %v639 = vunpack.c.l.b16 %v596
        %v640 = vunpack.c.l.b16 %v597
        %v641 = vunpack.c.l.b16 %v598
        %v642 = vunpack.c.l.b16 %v599
        %v643 = vunpack.c.l.b16 %v600
        %v644 = vunpack.c.l.b16 %v601
        %v645 = vunpack.c.l.b16 %v602
        %v646 = vunpack.c.l.b16 %v603
        %v647 = vunpack.c.l.b16 %v604
        %v648 = vunpack.c.l.b16 %v605
        %v649 = vunpack.c.l.b16 %v606
        %v650 = vunpack.c.l.b16 %v607
        %v651 = vunpack.c.l.b16 %v608
        %v652 = vunpack.c.l.b16 %v609
        %v653 = vpack.c.b16 %v638, %v637
        %v654 = vpack.c.b16 %v640, %v639
        %v655 = vpack.c.b16 %v642, %v641
        %v656 = vpack.c.b16 %v644, %v643
        %v657 = vpack.c.b16 %v646, %v645
        %v658 = vpack.c.b16 %v648, %v647
        %v659 = vpack.c.b16 %v650, %v649
        %v660 = vpack.c.b16 %v652, %v651
        %669 = vmatpush.bf16.msra.mxu0 %v660
        %670 = vmatpush.bf16.msra.mxu0 %v659
        %671 = vmatpush.bf16.msra.mxu0 %v658
        %672 = vmatpush.bf16.msra.mxu0 %v657
        %673 = vmatpush.bf16.msra.mxu0 %v656
        %674 = vmatpush.bf16.msra.mxu0 %v655
        %675 = vmatpush.bf16.msra.mxu0 %v654
        %676 = vmatpush.bf16.msra.mxu0 %v653
        %677 = vmatmul.bf16.gmra.mxu0 %v619
        %v678 = vpop.f32.mrf.mxu0
        %v679 = vadd.f32 0.0, %v678
        %v680 = vpop.f32.mrf.mxu0
        %681 = vdwg.mxu0
        %v682 = vadd.f32 %v592, %v679
        %s683 = scalar_lea.vmem %s1, 384
        %v684 = vld [vmem:[%s683] sm:$0xf]
        %v685 = vld [vmem:[%s683 + $0x4] sm:$0xf]
        %v686 = vld [vmem:[%s683 + $0x8] sm:$0xf]
        %v687 = vld [vmem:[%s683 + $0xc] sm:$0xf]
        %v688 = vld [vmem:[%s683 + $0x10] sm:$0xf]
        %v689 = vld [vmem:[%s683 + $0x14] sm:$0xf]
        %v690 = vld [vmem:[%s683 + $0x18] sm:$0xf]
        %v691 = vld [vmem:[%s683 + $0x1c] sm:$0xf]
        %v692 = vld [vmem:[%s683 + $0x20] sm:$0xf]
        %v693 = vld [vmem:[%s683 + $0x24] sm:$0xf]
        %v694 = vld [vmem:[%s683 + $0x28] sm:$0xf]
        %v695 = vld [vmem:[%s683 + $0x2c] sm:$0xf]
        %v696 = vld [vmem:[%s683 + $0x30] sm:$0xf]
        %v697 = vld [vmem:[%s683 + $0x34] sm:$0xf]
        %v698 = vld [vmem:[%s683 + $0x38] sm:$0xf]
        %v699 = vld [vmem:[%s683 + $0x3c] sm:$0xf]
        %v700 = vrot.slane %v612, 1
        %v718 = vunpack.c.l.b16 %v684
        %v719 = vunpack.c.l.b16 %v685
        %v720 = vunpack.c.l.b16 %v686
        %v721 = vunpack.c.l.b16 %v687
        %v722 = vunpack.c.l.b16 %v688
        %v723 = vunpack.c.l.b16 %v689
        %v724 = vunpack.c.l.b16 %v690
        %v725 = vunpack.c.l.b16 %v691
        %v726 = vunpack.c.l.b16 %v692
        %v727 = vunpack.c.l.b16 %v693
        %v728 = vunpack.c.l.b16 %v694
        %v729 = vunpack.c.l.b16 %v695
        %v730 = vunpack.c.l.b16 %v696
        %v731 = vunpack.c.l.b16 %v697
        %v732 = vunpack.c.l.b16 %v698
        %v733 = vunpack.c.l.b16 %v699
        %v734 = vpack.c.b16 %v719, %v718
        %v735 = vpack.c.b16 %v721, %v720
        %v736 = vpack.c.b16 %v723, %v722
        %v737 = vpack.c.b16 %v725, %v724
        %v738 = vpack.c.b16 %v727, %v726
        %v739 = vpack.c.b16 %v729, %v728
        %v740 = vpack.c.b16 %v731, %v730
        %v741 = vpack.c.b16 %v733, %v732
        %750 = vmatpush.bf16.msra.mxu0 %v741
        %751 = vmatpush.bf16.msra.mxu0 %v740
        %752 = vmatpush.bf16.msra.mxu0 %v739
        %753 = vmatpush.bf16.msra.mxu0 %v738
        %754 = vmatpush.bf16.msra.mxu0 %v737
        %755 = vmatpush.bf16.msra.mxu0 %v736
        %756 = vmatpush.bf16.msra.mxu0 %v735
        %757 = vmatpush.bf16.msra.mxu0 %v734
        %758 = vmatmul.bf16.gmra.mxu0 %v700
        %v759 = vpop.f32.mrf.mxu0
        %v760 = vadd.f32 0.0, %v759
        %v761 = vpop.f32.mrf.mxu0
        %762 = vdwg.mxu0
        %v763 = vadd.f32 %v682, %v760
        %s764 = scalar_lea.vmem %s1, 448
        %v765 = vld [vmem:[%s764] sm:$0xf]
        %v766 = vld [vmem:[%s764 + $0x4] sm:$0xf]
        %v767 = vld [vmem:[%s764 + $0x8] sm:$0xf]
        %v768 = vld [vmem:[%s764 + $0xc] sm:$0xf]
        %v769 = vld [vmem:[%s764 + $0x10] sm:$0xf]
        %v770 = vld [vmem:[%s764 + $0x14] sm:$0xf]
        %v771 = vld [vmem:[%s764 + $0x18] sm:$0xf]
        %v772 = vld [vmem:[%s764 + $0x1c] sm:$0xf]
        %v773 = vld [vmem:[%s764 + $0x20] sm:$0xf]
        %v774 = vld [vmem:[%s764 + $0x24] sm:$0xf]
        %v775 = vld [vmem:[%s764 + $0x28] sm:$0xf]
        %v776 = vld [vmem:[%s764 + $0x2c] sm:$0xf]
        %v777 = vld [vmem:[%s764 + $0x30] sm:$0xf]
        %v778 = vld [vmem:[%s764 + $0x34] sm:$0xf]
        %v779 = vld [vmem:[%s764 + $0x38] sm:$0xf]
        %v780 = vld [vmem:[%s764 + $0x3c] sm:$0xf]
        %v781 = vrot.slane %v614, 1
        %v782 = vrot.slane %v616, 2
        %v783 = vor.u32 %v781, %v782
        %v801 = vunpack.c.l.b16 %v765
        %v802 = vunpack.c.l.b16 %v766
        %v803 = vunpack.c.l.b16 %v767
        %v804 = vunpack.c.l.b16 %v768
        %v805 = vunpack.c.l.b16 %v769
        %v806 = vunpack.c.l.b16 %v770
        %v807 = vunpack.c.l.b16 %v771
        %v808 = vunpack.c.l.b16 %v772
        %v809 = vunpack.c.l.b16 %v773
        %v810 = vunpack.c.l.b16 %v774
        %v811 = vunpack.c.l.b16 %v775
        %v812 = vunpack.c.l.b16 %v776
        %v813 = vunpack.c.l.b16 %v777
        %v814 = vunpack.c.l.b16 %v778
        %v815 = vunpack.c.l.b16 %v779
        %v816 = vunpack.c.l.b16 %v780
        %v817 = vpack.c.b16 %v802, %v801
        %v818 = vpack.c.b16 %v804, %v803
        %v819 = vpack.c.b16 %v806, %v805
        %v820 = vpack.c.b16 %v808, %v807
        %v821 = vpack.c.b16 %v810, %v809
        %v822 = vpack.c.b16 %v812, %v811
        %v823 = vpack.c.b16 %v814, %v813
        %v824 = vpack.c.b16 %v816, %v815
        %833 = vmatpush.bf16.msra.mxu0 %v824
        %834 = vmatpush.bf16.msra.mxu0 %v823
        %835 = vmatpush.bf16.msra.mxu0 %v822
        %836 = vmatpush.bf16.msra.mxu0 %v821
        %837 = vmatpush.bf16.msra.mxu0 %v820
        %838 = vmatpush.bf16.msra.mxu0 %v819
        %839 = vmatpush.bf16.msra.mxu0 %v818
        %840 = vmatpush.bf16.msra.mxu0 %v817
        %841 = vmatmul.bf16.gmra.mxu0 %v783
        %v842 = vpop.f32.mrf.mxu0
        %v843 = vadd.f32 0.0, %v842
        %v844 = vpop.f32.mrf.mxu0
        %845 = vdwg.mxu0
        %v846 = vadd.f32 %v763, %v843
        %s847 = sadd.s32 %s172, 2
        %s848 = smul.addr %s847, 4
        %s849 = scalar_lea.vmem %s165, %s848
        %v850 = vld [vmem:[%s849] sm:$0x7]
        %s851 = scalar_lea.vmem %s1, 512
        %v852 = vld [vmem:[%s851] sm:$0xf]
        %v853 = vld [vmem:[%s851 + $0x4] sm:$0xf]
        %v854 = vld [vmem:[%s851 + $0x8] sm:$0xf]
        %v855 = vld [vmem:[%s851 + $0xc] sm:$0xf]
        %v856 = vld [vmem:[%s851 + $0x10] sm:$0xf]
        %v857 = vld [vmem:[%s851 + $0x14] sm:$0xf]
        %v858 = vld [vmem:[%s851 + $0x18] sm:$0xf]
        %v859 = vld [vmem:[%s851 + $0x1c] sm:$0xf]
        %v860 = vld [vmem:[%s851 + $0x20] sm:$0xf]
        %v861 = vld [vmem:[%s851 + $0x24] sm:$0xf]
        %v862 = vld [vmem:[%s851 + $0x28] sm:$0xf]
        %v863 = vld [vmem:[%s851 + $0x2c] sm:$0xf]
        %v864 = vld [vmem:[%s851 + $0x30] sm:$0xf]
        %v865 = vld [vmem:[%s851 + $0x34] sm:$0xf]
        %v866 = vld [vmem:[%s851 + $0x38] sm:$0xf]
        %v867 = vld [vmem:[%s851 + $0x3c] sm:$0xf]
        %v884 = vunpack.c.l.b16 %v852
        %v885 = vunpack.c.l.b16 %v853
        %v886 = vunpack.c.l.b16 %v854
        %v887 = vunpack.c.l.b16 %v855
        %v888 = vunpack.c.l.b16 %v856
        %v889 = vunpack.c.l.b16 %v857
        %v890 = vunpack.c.l.b16 %v858
        %v891 = vunpack.c.l.b16 %v859
        %v892 = vunpack.c.l.b16 %v860
        %v893 = vunpack.c.l.b16 %v861
        %v894 = vunpack.c.l.b16 %v862
        %v895 = vunpack.c.l.b16 %v863
        %v896 = vunpack.c.l.b16 %v864
        %v897 = vunpack.c.l.b16 %v865
        %v898 = vunpack.c.l.b16 %v866
        %v899 = vunpack.c.l.b16 %v867
        %v900 = vpack.c.b16 %v885, %v884
        %v901 = vpack.c.b16 %v887, %v886
        %v902 = vpack.c.b16 %v889, %v888
        %v903 = vpack.c.b16 %v891, %v890
        %v904 = vpack.c.b16 %v893, %v892
        %v905 = vpack.c.b16 %v895, %v894
        %v906 = vpack.c.b16 %v897, %v896
        %v907 = vpack.c.b16 %v899, %v898
        %916 = vmatpush.bf16.msra.mxu0 %v907
        %917 = vmatpush.bf16.msra.mxu0 %v906
        %918 = vmatpush.bf16.msra.mxu0 %v905
        %919 = vmatpush.bf16.msra.mxu0 %v904
        %920 = vmatpush.bf16.msra.mxu0 %v903
        %921 = vmatpush.bf16.msra.mxu0 %v902
        %922 = vmatpush.bf16.msra.mxu0 %v901
        %923 = vmatpush.bf16.msra.mxu0 %v900
        %924 = vmatmul.bf16.gmra.mxu0 %v850
        %v925 = vpop.f32.mrf.mxu0
        %v926 = vadd.f32 0.0, %v925
        %v927 = vpop.f32.mrf.mxu0
        %928 = vdwg.mxu0
        %v929 = vadd.f32 %v846, %v926
        %s930 = scalar_lea.vmem %s1, 576
        %v931 = vld [vmem:[%s930] sm:$0xf]
        %v932 = vld [vmem:[%s930 + $0x4] sm:$0xf]
        %v933 = vld [vmem:[%s930 + $0x8] sm:$0xf]
        %v934 = vld [vmem:[%s930 + $0xc] sm:$0xf]
        %v935 = vld [vmem:[%s930 + $0x10] sm:$0xf]
        %v936 = vld [vmem:[%s930 + $0x14] sm:$0xf]
        %v937 = vld [vmem:[%s930 + $0x18] sm:$0xf]
        %v938 = vld [vmem:[%s930 + $0x1c] sm:$0xf]
        %v939 = vld [vmem:[%s930 + $0x20] sm:$0xf]
        %v940 = vld [vmem:[%s930 + $0x24] sm:$0xf]
        %v941 = vld [vmem:[%s930 + $0x28] sm:$0xf]
        %v942 = vld [vmem:[%s930 + $0x2c] sm:$0xf]
        %v943 = vld [vmem:[%s930 + $0x30] sm:$0xf]
        %v944 = vld [vmem:[%s930 + $0x34] sm:$0xf]
        %v945 = vld [vmem:[%s930 + $0x38] sm:$0xf]
        %v946 = vld [vmem:[%s930 + $0x3c] sm:$0xf]
        %v948 = vunpack.c.l.b16 %v850
        %v949 = vpack.c.b16 %v948, %v948
        %v951 = vshrl.u32 %v949, 16
        %v953 = vshll.u32 %v949, 16
        %v955 = vrot.slane %v953, 1
        %v956 = vor.u32 %v951, %v955
        %v974 = vunpack.c.l.b16 %v931
        %v975 = vunpack.c.l.b16 %v932
        %v976 = vunpack.c.l.b16 %v933
        %v977 = vunpack.c.l.b16 %v934
        %v978 = vunpack.c.l.b16 %v935
        %v979 = vunpack.c.l.b16 %v936
        %v980 = vunpack.c.l.b16 %v937
        %v981 = vunpack.c.l.b16 %v938
        %v982 = vunpack.c.l.b16 %v939
        %v983 = vunpack.c.l.b16 %v940
        %v984 = vunpack.c.l.b16 %v941
        %v985 = vunpack.c.l.b16 %v942
        %v986 = vunpack.c.l.b16 %v943
        %v987 = vunpack.c.l.b16 %v944
        %v988 = vunpack.c.l.b16 %v945
        %v989 = vunpack.c.l.b16 %v946
        %v990 = vpack.c.b16 %v975, %v974
        %v991 = vpack.c.b16 %v977, %v976
        %v992 = vpack.c.b16 %v979, %v978
        %v993 = vpack.c.b16 %v981, %v980
        %v994 = vpack.c.b16 %v983, %v982
        %v995 = vpack.c.b16 %v985, %v984
        %v996 = vpack.c.b16 %v987, %v986
        %v997 = vpack.c.b16 %v989, %v988
        %1006 = vmatpush.bf16.msra.mxu0 %v997
        %1007 = vmatpush.bf16.msra.mxu0 %v996
        %1008 = vmatpush.bf16.msra.mxu0 %v995
        %1009 = vmatpush.bf16.msra.mxu0 %v994
        %1010 = vmatpush.bf16.msra.mxu0 %v993
        %1011 = vmatpush.bf16.msra.mxu0 %v992
        %1012 = vmatpush.bf16.msra.mxu0 %v991
        %1013 = vmatpush.bf16.msra.mxu0 %v990
        %1014 = vmatmul.bf16.gmra.mxu0 %v956
        %v1015 = vpop.f32.mrf.mxu0
        %v1016 = vadd.f32 0.0, %v1015
        %v1017 = vpop.f32.mrf.mxu0
        %1018 = vdwg.mxu0
        %v1019 = vadd.f32 %v929, %v1016
        %s1020 = scalar_lea.vmem %s1, 640
        %v1021 = vld [vmem:[%s1020] sm:$0xf]
        %v1022 = vld [vmem:[%s1020 + $0x4] sm:$0xf]
        %v1023 = vld [vmem:[%s1020 + $0x8] sm:$0xf]
        %v1024 = vld [vmem:[%s1020 + $0xc] sm:$0xf]
        %v1025 = vld [vmem:[%s1020 + $0x10] sm:$0xf]
        %v1026 = vld [vmem:[%s1020 + $0x14] sm:$0xf]
        %v1027 = vld [vmem:[%s1020 + $0x18] sm:$0xf]
        %v1028 = vld [vmem:[%s1020 + $0x1c] sm:$0xf]
        %v1029 = vld [vmem:[%s1020 + $0x20] sm:$0xf]
        %v1030 = vld [vmem:[%s1020 + $0x24] sm:$0xf]
        %v1031 = vld [vmem:[%s1020 + $0x28] sm:$0xf]
        %v1032 = vld [vmem:[%s1020 + $0x2c] sm:$0xf]
        %v1033 = vld [vmem:[%s1020 + $0x30] sm:$0xf]
        %v1034 = vld [vmem:[%s1020 + $0x34] sm:$0xf]
        %v1035 = vld [vmem:[%s1020 + $0x38] sm:$0xf]
        %v1036 = vld [vmem:[%s1020 + $0x3c] sm:$0xf]
        %v1037 = vrot.slane %v949, 1
        %v1055 = vunpack.c.l.b16 %v1021
        %v1056 = vunpack.c.l.b16 %v1022
        %v1057 = vunpack.c.l.b16 %v1023
        %v1058 = vunpack.c.l.b16 %v1024
        %v1059 = vunpack.c.l.b16 %v1025
        %v1060 = vunpack.c.l.b16 %v1026
        %v1061 = vunpack.c.l.b16 %v1027
        %v1062 = vunpack.c.l.b16 %v1028
        %v1063 = vunpack.c.l.b16 %v1029
        %v1064 = vunpack.c.l.b16 %v1030
        %v1065 = vunpack.c.l.b16 %v1031
        %v1066 = vunpack.c.l.b16 %v1032
        %v1067 = vunpack.c.l.b16 %v1033
        %v1068 = vunpack.c.l.b16 %v1034
        %v1069 = vunpack.c.l.b16 %v1035
        %v1070 = vunpack.c.l.b16 %v1036
        %v1071 = vpack.c.b16 %v1056, %v1055
        %v1072 = vpack.c.b16 %v1058, %v1057
        %v1073 = vpack.c.b16 %v1060, %v1059
        %v1074 = vpack.c.b16 %v1062, %v1061
        %v1075 = vpack.c.b16 %v1064, %v1063
        %v1076 = vpack.c.b16 %v1066, %v1065
        %v1077 = vpack.c.b16 %v1068, %v1067
        %v1078 = vpack.c.b16 %v1070, %v1069
        %1087 = vmatpush.bf16.msra.mxu0 %v1078
        %1088 = vmatpush.bf16.msra.mxu0 %v1077
        %1089 = vmatpush.bf16.msra.mxu0 %v1076
        %1090 = vmatpush.bf16.msra.mxu0 %v1075
        %1091 = vmatpush.bf16.msra.mxu0 %v1074
        %1092 = vmatpush.bf16.msra.mxu0 %v1073
        %1093 = vmatpush.bf16.msra.mxu0 %v1072
        %1094 = vmatpush.bf16.msra.mxu0 %v1071
        %1095 = vmatmul.bf16.gmra.mxu0 %v1037
        %v1096 = vpop.f32.mrf.mxu0
        %v1097 = vadd.f32 0.0, %v1096
        %v1098 = vpop.f32.mrf.mxu0
        %1099 = vdwg.mxu0
        %v1100 = vadd.f32 %v1019, %v1097
        %s1101 = scalar_lea.vmem %s1, 704
        %v1102 = vld [vmem:[%s1101] sm:$0xf]
        %v1103 = vld [vmem:[%s1101 + $0x4] sm:$0xf]
        %v1104 = vld [vmem:[%s1101 + $0x8] sm:$0xf]
        %v1105 = vld [vmem:[%s1101 + $0xc] sm:$0xf]
        %v1106 = vld [vmem:[%s1101 + $0x10] sm:$0xf]
        %v1107 = vld [vmem:[%s1101 + $0x14] sm:$0xf]
        %v1108 = vld [vmem:[%s1101 + $0x18] sm:$0xf]
        %v1109 = vld [vmem:[%s1101 + $0x1c] sm:$0xf]
        %v1110 = vld [vmem:[%s1101 + $0x20] sm:$0xf]
        %v1111 = vld [vmem:[%s1101 + $0x24] sm:$0xf]
        %v1112 = vld [vmem:[%s1101 + $0x28] sm:$0xf]
        %v1113 = vld [vmem:[%s1101 + $0x2c] sm:$0xf]
        %v1114 = vld [vmem:[%s1101 + $0x30] sm:$0xf]
        %v1115 = vld [vmem:[%s1101 + $0x34] sm:$0xf]
        %v1116 = vld [vmem:[%s1101 + $0x38] sm:$0xf]
        %v1117 = vld [vmem:[%s1101 + $0x3c] sm:$0xf]
        %v1118 = vrot.slane %v951, 1
        %v1119 = vrot.slane %v953, 2
        %v1120 = vor.u32 %v1118, %v1119
        %v1138 = vunpack.c.l.b16 %v1102
        %v1139 = vunpack.c.l.b16 %v1103
        %v1140 = vunpack.c.l.b16 %v1104
        %v1141 = vunpack.c.l.b16 %v1105
        %v1142 = vunpack.c.l.b16 %v1106
        %v1143 = vunpack.c.l.b16 %v1107
        %v1144 = vunpack.c.l.b16 %v1108
        %v1145 = vunpack.c.l.b16 %v1109
        %v1146 = vunpack.c.l.b16 %v1110
        %v1147 = vunpack.c.l.b16 %v1111
        %v1148 = vunpack.c.l.b16 %v1112
        %v1149 = vunpack.c.l.b16 %v1113
        %v1150 = vunpack.c.l.b16 %v1114
        %v1151 = vunpack.c.l.b16 %v1115
        %v1152 = vunpack.c.l.b16 %v1116
        %v1153 = vunpack.c.l.b16 %v1117
        %v1154 = vpack.c.b16 %v1139, %v1138
        %v1155 = vpack.c.b16 %v1141, %v1140
        %v1156 = vpack.c.b16 %v1143, %v1142
        %v1157 = vpack.c.b16 %v1145, %v1144
        %v1158 = vpack.c.b16 %v1147, %v1146
        %v1159 = vpack.c.b16 %v1149, %v1148
        %v1160 = vpack.c.b16 %v1151, %v1150
        %v1161 = vpack.c.b16 %v1153, %v1152
        %1170 = vmatpush.bf16.msra.mxu0 %v1161
        %1171 = vmatpush.bf16.msra.mxu0 %v1160
        %1172 = vmatpush.bf16.msra.mxu0 %v1159
        %1173 = vmatpush.bf16.msra.mxu0 %v1158
        %1174 = vmatpush.bf16.msra.mxu0 %v1157
        %1175 = vmatpush.bf16.msra.mxu0 %v1156
        %1176 = vmatpush.bf16.msra.mxu0 %v1155
        %1177 = vmatpush.bf16.msra.mxu0 %v1154
        %1178 = vmatmul.bf16.gmra.mxu0 %v1120
        %v1179 = vpop.f32.mrf.mxu0
        %v1180 = vadd.f32 0.0, %v1179
        %v1181 = vpop.f32.mrf.mxu0
        %1182 = vdwg.mxu0
        %v1183 = vadd.f32 %v1100, %v1180
        %s1184 = sadd.s32 %s172, 3
        %s1185 = smul.addr %s1184, 4
        %s1186 = scalar_lea.vmem %s165, %s1185
        %v1187 = vld [vmem:[%s1186] sm:$0x7]
        %s1188 = scalar_lea.vmem %s1, 768
        %v1189 = vld [vmem:[%s1188] sm:$0xf]
        %v1190 = vld [vmem:[%s1188 + $0x4] sm:$0xf]
        %v1191 = vld [vmem:[%s1188 + $0x8] sm:$0xf]
        %v1192 = vld [vmem:[%s1188 + $0xc] sm:$0xf]
        %v1193 = vld [vmem:[%s1188 + $0x10] sm:$0xf]
        %v1194 = vld [vmem:[%s1188 + $0x14] sm:$0xf]
        %v1195 = vld [vmem:[%s1188 + $0x18] sm:$0xf]
        %v1196 = vld [vmem:[%s1188 + $0x1c] sm:$0xf]
        %v1197 = vld [vmem:[%s1188 + $0x20] sm:$0xf]
        %v1198 = vld [vmem:[%s1188 + $0x24] sm:$0xf]
        %v1199 = vld [vmem:[%s1188 + $0x28] sm:$0xf]
        %v1200 = vld [vmem:[%s1188 + $0x2c] sm:$0xf]
        %v1201 = vld [vmem:[%s1188 + $0x30] sm:$0xf]
        %v1202 = vld [vmem:[%s1188 + $0x34] sm:$0xf]
        %v1203 = vld [vmem:[%s1188 + $0x38] sm:$0xf]
        %v1204 = vld [vmem:[%s1188 + $0x3c] sm:$0xf]
        %v1221 = vunpack.c.l.b16 %v1189
        %v1222 = vunpack.c.l.b16 %v1190
        %v1223 = vunpack.c.l.b16 %v1191
        %v1224 = vunpack.c.l.b16 %v1192
        %v1225 = vunpack.c.l.b16 %v1193
        %v1226 = vunpack.c.l.b16 %v1194
        %v1227 = vunpack.c.l.b16 %v1195
        %v1228 = vunpack.c.l.b16 %v1196
        %v1229 = vunpack.c.l.b16 %v1197
        %v1230 = vunpack.c.l.b16 %v1198
        %v1231 = vunpack.c.l.b16 %v1199
        %v1232 = vunpack.c.l.b16 %v1200
        %v1233 = vunpack.c.l.b16 %v1201
        %v1234 = vunpack.c.l.b16 %v1202
        %v1235 = vunpack.c.l.b16 %v1203
        %v1236 = vunpack.c.l.b16 %v1204
        %v1237 = vpack.c.b16 %v1222, %v1221
        %v1238 = vpack.c.b16 %v1224, %v1223
        %v1239 = vpack.c.b16 %v1226, %v1225
        %v1240 = vpack.c.b16 %v1228, %v1227
        %v1241 = vpack.c.b16 %v1230, %v1229
        %v1242 = vpack.c.b16 %v1232, %v1231
        %v1243 = vpack.c.b16 %v1234, %v1233
        %v1244 = vpack.c.b16 %v1236, %v1235
        %1253 = vmatpush.bf16.msra.mxu0 %v1244
        %1254 = vmatpush.bf16.msra.mxu0 %v1243
        %1255 = vmatpush.bf16.msra.mxu0 %v1242
        %1256 = vmatpush.bf16.msra.mxu0 %v1241
        %1257 = vmatpush.bf16.msra.mxu0 %v1240
        %1258 = vmatpush.bf16.msra.mxu0 %v1239
        %1259 = vmatpush.bf16.msra.mxu0 %v1238
        %1260 = vmatpush.bf16.msra.mxu0 %v1237
        %1261 = vmatmul.bf16.gmra.mxu0 %v1187
        %v1262 = vpop.f32.mrf.mxu0
        %v1263 = vadd.f32 0.0, %v1262
        %v1264 = vpop.f32.mrf.mxu0
        %1265 = vdwg.mxu0
        %v1266 = vadd.f32 %v1183, %v1263
        %s1267 = scalar_lea.vmem %s1, 832
        %v1268 = vld [vmem:[%s1267] sm:$0xf]
        %v1269 = vld [vmem:[%s1267 + $0x4] sm:$0xf]
        %v1270 = vld [vmem:[%s1267 + $0x8] sm:$0xf]
        %v1271 = vld [vmem:[%s1267 + $0xc] sm:$0xf]
        %v1272 = vld [vmem:[%s1267 + $0x10] sm:$0xf]
        %v1273 = vld [vmem:[%s1267 + $0x14] sm:$0xf]
        %v1274 = vld [vmem:[%s1267 + $0x18] sm:$0xf]
        %v1275 = vld [vmem:[%s1267 + $0x1c] sm:$0xf]
        %v1276 = vld [vmem:[%s1267 + $0x20] sm:$0xf]
        %v1277 = vld [vmem:[%s1267 + $0x24] sm:$0xf]
        %v1278 = vld [vmem:[%s1267 + $0x28] sm:$0xf]
        %v1279 = vld [vmem:[%s1267 + $0x2c] sm:$0xf]
        %v1280 = vld [vmem:[%s1267 + $0x30] sm:$0xf]
        %v1281 = vld [vmem:[%s1267 + $0x34] sm:$0xf]
        %v1282 = vld [vmem:[%s1267 + $0x38] sm:$0xf]
        %v1283 = vld [vmem:[%s1267 + $0x3c] sm:$0xf]
        %v1285 = vunpack.c.l.b16 %v1187
        %v1286 = vpack.c.b16 %v1285, %v1285
        %v1288 = vshrl.u32 %v1286, 16
        %v1290 = vshll.u32 %v1286, 16
        %v1292 = vrot.slane %v1290, 1
        %v1293 = vor.u32 %v1288, %v1292
        %v1311 = vunpack.c.l.b16 %v1268
        %v1312 = vunpack.c.l.b16 %v1269
        %v1313 = vunpack.c.l.b16 %v1270
        %v1314 = vunpack.c.l.b16 %v1271
        %v1315 = vunpack.c.l.b16 %v1272
        %v1316 = vunpack.c.l.b16 %v1273
        %v1317 = vunpack.c.l.b16 %v1274
        %v1318 = vunpack.c.l.b16 %v1275
        %v1319 = vunpack.c.l.b16 %v1276
        %v1320 = vunpack.c.l.b16 %v1277
        %v1321 = vunpack.c.l.b16 %v1278
        %v1322 = vunpack.c.l.b16 %v1279
        %v1323 = vunpack.c.l.b16 %v1280
        %v1324 = vunpack.c.l.b16 %v1281
        %v1325 = vunpack.c.l.b16 %v1282
        %v1326 = vunpack.c.l.b16 %v1283
        %v1327 = vpack.c.b16 %v1312, %v1311
        %v1328 = vpack.c.b16 %v1314, %v1313
        %v1329 = vpack.c.b16 %v1316, %v1315
        %v1330 = vpack.c.b16 %v1318, %v1317
        %v1331 = vpack.c.b16 %v1320, %v1319
        %v1332 = vpack.c.b16 %v1322, %v1321
        %v1333 = vpack.c.b16 %v1324, %v1323
        %v1334 = vpack.c.b16 %v1326, %v1325
        %1343 = vmatpush.bf16.msra.mxu0 %v1334
        %1344 = vmatpush.bf16.msra.mxu0 %v1333
        %1345 = vmatpush.bf16.msra.mxu0 %v1332
        %1346 = vmatpush.bf16.msra.mxu0 %v1331
        %1347 = vmatpush.bf16.msra.mxu0 %v1330
        %1348 = vmatpush.bf16.msra.mxu0 %v1329
        %1349 = vmatpush.bf16.msra.mxu0 %v1328
        %1350 = vmatpush.bf16.msra.mxu0 %v1327
        %1351 = vmatmul.bf16.gmra.mxu0 %v1293
        %v1352 = vpop.f32.mrf.mxu0
        %v1353 = vadd.f32 0.0, %v1352
        %v1354 = vpop.f32.mrf.mxu0
        %1355 = vdwg.mxu0
        %v1356 = vadd.f32 %v1266, %v1353
        %s1357 = scalar_lea.vmem %s1, 896
        %v1358 = vld [vmem:[%s1357] sm:$0xf]
        %v1359 = vld [vmem:[%s1357 + $0x4] sm:$0xf]
        %v1360 = vld [vmem:[%s1357 + $0x8] sm:$0xf]
        %v1361 = vld [vmem:[%s1357 + $0xc] sm:$0xf]
        %v1362 = vld [vmem:[%s1357 + $0x10] sm:$0xf]
        %v1363 = vld [vmem:[%s1357 + $0x14] sm:$0xf]
        %v1364 = vld [vmem:[%s1357 + $0x18] sm:$0xf]
        %v1365 = vld [vmem:[%s1357 + $0x1c] sm:$0xf]
        %v1366 = vld [vmem:[%s1357 + $0x20] sm:$0xf]
        %v1367 = vld [vmem:[%s1357 + $0x24] sm:$0xf]
        %v1368 = vld [vmem:[%s1357 + $0x28] sm:$0xf]
        %v1369 = vld [vmem:[%s1357 + $0x2c] sm:$0xf]
        %v1370 = vld [vmem:[%s1357 + $0x30] sm:$0xf]
        %v1371 = vld [vmem:[%s1357 + $0x34] sm:$0xf]
        %v1372 = vld [vmem:[%s1357 + $0x38] sm:$0xf]
        %v1373 = vld [vmem:[%s1357 + $0x3c] sm:$0xf]
        %v1374 = vrot.slane %v1286, 1
        %v1392 = vunpack.c.l.b16 %v1358
        %v1393 = vunpack.c.l.b16 %v1359
        %v1394 = vunpack.c.l.b16 %v1360
        %v1395 = vunpack.c.l.b16 %v1361
        %v1396 = vunpack.c.l.b16 %v1362
        %v1397 = vunpack.c.l.b16 %v1363
        %v1398 = vunpack.c.l.b16 %v1364
        %v1399 = vunpack.c.l.b16 %v1365
        %v1400 = vunpack.c.l.b16 %v1366
        %v1401 = vunpack.c.l.b16 %v1367
        %v1402 = vunpack.c.l.b16 %v1368
        %v1403 = vunpack.c.l.b16 %v1369
        %v1404 = vunpack.c.l.b16 %v1370
        %v1405 = vunpack.c.l.b16 %v1371
        %v1406 = vunpack.c.l.b16 %v1372
        %v1407 = vunpack.c.l.b16 %v1373
        %v1408 = vpack.c.b16 %v1393, %v1392
        %v1409 = vpack.c.b16 %v1395, %v1394
        %v1410 = vpack.c.b16 %v1397, %v1396
        %v1411 = vpack.c.b16 %v1399, %v1398
        %v1412 = vpack.c.b16 %v1401, %v1400
        %v1413 = vpack.c.b16 %v1403, %v1402
        %v1414 = vpack.c.b16 %v1405, %v1404
        %v1415 = vpack.c.b16 %v1407, %v1406
        %1424 = vmatpush.bf16.msra.mxu0 %v1415
        %1425 = vmatpush.bf16.msra.mxu0 %v1414
        %1426 = vmatpush.bf16.msra.mxu0 %v1413
        %1427 = vmatpush.bf16.msra.mxu0 %v1412
        %1428 = vmatpush.bf16.msra.mxu0 %v1411
        %1429 = vmatpush.bf16.msra.mxu0 %v1410
        %1430 = vmatpush.bf16.msra.mxu0 %v1409
        %1431 = vmatpush.bf16.msra.mxu0 %v1408
        %1432 = vmatmul.bf16.gmra.mxu0 %v1374
        %v1433 = vpop.f32.mrf.mxu0
        %v1434 = vadd.f32 0.0, %v1433
        %v1435 = vpop.f32.mrf.mxu0
        %1436 = vdwg.mxu0
        %v1437 = vadd.f32 %v1356, %v1434
        %s1438 = scalar_lea.vmem %s1, 960
        %v1439 = vld [vmem:[%s1438] sm:$0xf]
        %v1440 = vld [vmem:[%s1438 + $0x4] sm:$0xf]
        %v1441 = vld [vmem:[%s1438 + $0x8] sm:$0xf]
        %v1442 = vld [vmem:[%s1438 + $0xc] sm:$0xf]
        %v1443 = vld [vmem:[%s1438 + $0x10] sm:$0xf]
        %v1444 = vld [vmem:[%s1438 + $0x14] sm:$0xf]
        %v1445 = vld [vmem:[%s1438 + $0x18] sm:$0xf]
        %v1446 = vld [vmem:[%s1438 + $0x1c] sm:$0xf]
        %v1447 = vld [vmem:[%s1438 + $0x20] sm:$0xf]
        %v1448 = vld [vmem:[%s1438 + $0x24] sm:$0xf]
        %v1449 = vld [vmem:[%s1438 + $0x28] sm:$0xf]
        %v1450 = vld [vmem:[%s1438 + $0x2c] sm:$0xf]
        %v1451 = vld [vmem:[%s1438 + $0x30] sm:$0xf]
        %v1452 = vld [vmem:[%s1438 + $0x34] sm:$0xf]
        %v1453 = vld [vmem:[%s1438 + $0x38] sm:$0xf]
        %v1454 = vld [vmem:[%s1438 + $0x3c] sm:$0xf]
        %v1455 = vrot.slane %v1288, 1
        %v1456 = vrot.slane %v1290, 2
        %v1457 = vor.u32 %v1455, %v1456
        %v1475 = vunpack.c.l.b16 %v1439
        %v1476 = vunpack.c.l.b16 %v1440
        %v1477 = vunpack.c.l.b16 %v1441
        %v1478 = vunpack.c.l.b16 %v1442
        %v1479 = vunpack.c.l.b16 %v1443
        %v1480 = vunpack.c.l.b16 %v1444
        %v1481 = vunpack.c.l.b16 %v1445
        %v1482 = vunpack.c.l.b16 %v1446
        %v1483 = vunpack.c.l.b16 %v1447
        %v1484 = vunpack.c.l.b16 %v1448
        %v1485 = vunpack.c.l.b16 %v1449
        %v1486 = vunpack.c.l.b16 %v1450
        %v1487 = vunpack.c.l.b16 %v1451
        %v1488 = vunpack.c.l.b16 %v1452
        %v1489 = vunpack.c.l.b16 %v1453
        %v1490 = vunpack.c.l.b16 %v1454
        %v1491 = vpack.c.b16 %v1476, %v1475
        %v1492 = vpack.c.b16 %v1478, %v1477
        %v1493 = vpack.c.b16 %v1480, %v1479
        %v1494 = vpack.c.b16 %v1482, %v1481
        %v1495 = vpack.c.b16 %v1484, %v1483
        %v1496 = vpack.c.b16 %v1486, %v1485
        %v1497 = vpack.c.b16 %v1488, %v1487
        %v1498 = vpack.c.b16 %v1490, %v1489
        %1507 = vmatpush.bf16.msra.mxu0 %v1498
        %1508 = vmatpush.bf16.msra.mxu0 %v1497
        %1509 = vmatpush.bf16.msra.mxu0 %v1496
        %1510 = vmatpush.bf16.msra.mxu0 %v1495
        %1511 = vmatpush.bf16.msra.mxu0 %v1494
        %1512 = vmatpush.bf16.msra.mxu0 %v1493
        %1513 = vmatpush.bf16.msra.mxu0 %v1492
        %1514 = vmatpush.bf16.msra.mxu0 %v1491
        %1515 = vmatmul.bf16.gmra.mxu0 %v1457
        %v1516 = vpop.f32.mrf.mxu0
        %v1517 = vadd.f32 0.0, %v1516
        %v1518 = vpop.f32.mrf.mxu0
        %1519 = vdwg.mxu0
        %v1520 = vadd.f32 %v1437, %v1517
        %v1521 = vld [vmem:[%s2] sm:$0x1]
        %v1523 = vperm.slane %v1521, 0
        %v1525 = vadd.f32 %v1520, %v1523
        %v1526 = vxor.u32 %v1525, 2147483648
        %v1527 = vmul.f32 %v1526, 1.442695
        %v1528 = vpow.pop %v1527
        %v1529 = vadd.f32 %v1528, 1.0
        %v1530 = vrcp.pop %v1529
        %v1531 = vmul.f32 %v1529, %v1530
        %v1532 = vsub.f32 1.0, %v1531
        %v1533 = vmul.f32 %v1530, %v1532
        %v1534 = vadd.f32 %v1530, %v1533
        %vm1535 = vweird.f32 %v1529
        %vm1536 = vweird.f32 %v1530
        %vm1537 = vmor %vm1535, %vm1536
        %v1538 = vsel %vm1537, %v1530, %v1534
        %v1539 = vand.u32 2147483647, %v1529
        %vm1540 = vcmp.eq.f32.partialorder %v1539, 8.507059e+37
        %v1541 = vand.u32 %v1529, 2147483648
        %v1542 = vor.u32 1.1754944e-38, %v1541
        %v1543 = vsel %vm1540, %v1542, %v1538
        %v1544 = vmul.f32 1.0, %v1543
        %s1545 = smul.u32 %s172, 2
        %s1546 = scalar_lea.vmem %s170, %s1545
        %1547 = vst [vmem:[%s1546] sm:$0x3] %v1544
      $region37: #{discriminator_forward.9} parent=31 // loop_footer
        %s176 = sadd.s32 1, %s172
      $region38: #{discriminator_forward.9} parent=31 // loop_footer_branch
        %171 = sbr.rel target = $region34
      $region39: #{discriminator_forward.9} parent=31 // loop_exit
        _
      %p1548 = scmp.lt.s32.totalorder %s14, 1
      %s1549 = scalar_select %p1548, %s14, 1
      %s1550 = smul.addr %s1549, 2
      %s1551 = smul.addr %s1550, 2
      %s1552 = scalar_lea.vmem %s3, %s1551
      // Predicated region
      $region40: #{discriminator_forward.9} parent=31 // pred_check
        %p1553 = pneg %p100
      $region41: #{discriminator_forward.9} parent=31 // pred_check_branch
        %1555 = sbr.rel (%p1553) target = $region43
      $region42: #{discriminator_forward.9} parent=31 // pred_region
        _
      $region43: #{discriminator_forward.9} parent=31 // pred_fallthru
        _
    $region32: #{discriminator_forward.9} parent=5 // pred_fallthru
      _
    %p1556 = scmp.le.s32.totalorder 2, %s9
    // Predicated region
    $region44: #{discriminator_forward.9} parent=5 // pred_check
      %p1557 = pneg %p1556
    $region45: #{discriminator_forward.9} parent=5 // pred_check_branch
      %1559 = sbr.rel (%p1557) target = $region47
    $region46: #{discriminator_forward.9} parent=5 // pred_region
      %s1560 = ssub.s32 %s9, 2
      // Predicated region
      $region48: #{discriminator_forward.9} parent=46 // pred_check
        %p1561 = pneg %p106
      $region49: #{discriminator_forward.9} parent=46 // pred_check_branch
        %1563 = sbr.rel (%p1561) target = $region51
      $region50: #{discriminator_forward.9} parent=46 // pred_region
        %p1564 = scmp.lt.s32.totalorder %s15, 1
        %s1565 = scalar_select %p1564, %s15, 1
        %s1566 = smul.addr %s1565, 2
        %s1567 = smul.addr %s1566, 2
        %s1568 = scalar_lea.vmem %s3, %s1567
      $region51: #{discriminator_forward.9} parent=46 // pred_fallthru
        _
    $region47: #{discriminator_forward.9} parent=5 // pred_fallthru
      _
  $region6: #{discriminator_forward.9} parent=0 // loop_footer
    %s13 = sadd.s32 1, %s9
  $region7: #{discriminator_forward.9} parent=0 // loop_footer_branch
    %8 = sbr.rel target = $region3
  $region8: #{discriminator_forward.9} parent=0 // loop_exit
    _

</llo_original>
